<compile_context>
chip_gen: v7x
topology: tpu7x:2x2x1
jax: 0.10.0
libtpu: 0.0.40
codegen_flags: <defaults>
</compile_context>

<pallas_src>
import math

import jax
import jax.numpy as jnp
from jax.experimental import pallas as pl
from jax.experimental.pallas import tpu as pltpu

D_MODEL = 128          # transformer_encoder input_size / outfit_token dim
N_HEADS = 4
HEAD_DIM = D_MODEL // N_HEADS
FFN_DIM = 256
IMG_HID = 8            # conv channels in the synthetic ImageEncoder
IMG_EMB = 64           # image embedding size
TXT_EMB = 32           # token-embedding width in the synthetic TextEncoder
TXT_OUT = 64           # text embedding size  (64 + 64 = 128 = d_model)
MLP_HID = 64           # mlp: Linear(128,64) -> ReLU -> Linear(64,1) -> Sigmoid
VOCAB = 50


# ----------------------------------------------------------------------------------------
# Fused kernel: item encoder + token assembly + transformer layer + MLP head per outfit block
# ----------------------------------------------------------------------------------------
def fused_outfit_kernel(patch_ref, txt_ref, mask_ref,
                        w_conv_ref, w_imgpool_ref, w_txt_ref, t_item_ref, tok_ref,
                        wqkv_ref, bwide_ref, sq_ref, w_ffn1_ref, w_ffn2_ref, rows_ref,
                        out_ref):
    OB, NG, PGC = patch_ref.shape          # NG = N * (HW // PG), PGC = PG * padded patch dim
    OBN = txt_ref.shape[0]
    N = OBN // OB
    GPI = NG // N                          # spatial position-groups per item
    SP = mask_ref.shape[1]                 # padded sequence (token + items), multiple of 8
    M = OB * SP

    # ---- item image encoder: lane-packed conv-as-matmul (bias folded) + ReLU + sum pool ----
    patches = patch_ref[...].reshape(OB * NG, PGC)                              # bf16
    h = jnp.maximum(jnp.dot(patches, w_conv_ref[...],
                            preferred_element_type=jnp.float32), 0.0)           # (OB*NG, PG*8)
    pooled = jnp.sum(h.reshape(OBN, GPI, h.shape[-1]), axis=1)                  # (OB*N, PG*8)

    # ---- image FC (1/HW mean fold) + text FC into [img64|txt64]; biases folded into tok rows ----
    item_feats = (jnp.dot(pooled.astype(jnp.bfloat16), w_imgpool_ref[...],
                          preferred_element_type=jnp.float32)
                  + jnp.dot(txt_ref[...], w_txt_ref[...],
                            preferred_element_type=jnp.float32))                # (OB*N, 128)

    # ---- token assembly: items -> rows 1..N of each SP block, outfit token -> row 0 ----
    x = jnp.dot(t_item_ref[...], item_feats,
                preferred_element_type=jnp.float32) + tok_ref[...]              # (M, 128)

    # ---- fused QKV projection (attention scale folded into the Q columns / bias) ----
    qkv = jnp.dot(x.astype(jnp.bfloat16), wqkv_ref[...],
                  preferred_element_type=jnp.float32) + bwide_ref[0:1, :]       # (M, 384)

    # ---- multi-head self-attention, outfit as the batch dim, per-outfit (SP,SP) softmax ----
    mask = mask_ref[...]                                                        # (OB, SP) additive
    ctx_parts = []
    for hd in range(N_HEADS):
        lo = hd * HEAD_DIM
        qh = qkv[:, lo:lo + HEAD_DIM].reshape(OB, SP, HEAD_DIM)
        kh = qkv[:, D_MODEL + lo:D_MODEL + lo + HEAD_DIM].reshape(OB, SP, HEAD_DIM)
        vh = qkv[:, 2 * D_MODEL + lo:2 * D_MODEL + lo + HEAD_DIM].reshape(OB, SP, HEAD_DIM)
        s = jnp.einsum("bqd,bkd->bqk", qh, kh,
                       preferred_element_type=jnp.float32) + mask[:, None, :]   # (OB, SP, SP)
        s = s - jnp.max(s, axis=-1, keepdims=True)
        e = jnp.exp(s)
        p = e * pl.reciprocal(jnp.sum(e, axis=-1, keepdims=True), approx=True)
        ctx_parts.append(jnp.einsum("bqk,bkd->bqd", p, vh,
                                    preferred_element_type=jnp.float32).reshape(M, HEAD_DIM))
    ctx = jnp.concatenate(ctx_parts, axis=-1)                                   # (M, 128)
    attn = jnp.dot(ctx.astype(jnp.bfloat16), sq_ref[0:D_MODEL, :],
                   preferred_element_type=jnp.float32) + rows_ref[0:1, :]       # + out-proj bias

    def layer_norm(z, g, b):
        mu = jnp.mean(z, axis=-1, keepdims=True)
        var = jnp.mean((z - mu) ** 2, axis=-1, keepdims=True)
        return (z - mu) * jax.lax.rsqrt(var + 1e-5) * g + b

    # ---- post-norm transformer encoder layer ----
    h1 = layer_norm(x + attn, rows_ref[1:2, :], rows_ref[2:3, :])
    f = jnp.maximum(jnp.dot(h1.astype(jnp.bfloat16), w_ffn1_ref[...],
                            preferred_element_type=jnp.float32)
                    + bwide_ref[1:2, 0:FFN_DIM], 0.0)
    f = jnp.dot(f.astype(jnp.bfloat16), w_ffn2_ref[...],
                preferred_element_type=jnp.float32) + rows_ref[5:6, :]
    h2 = layer_norm(h1 + f, rows_ref[3:4, :], rows_ref[4:5, :])

    # ---- outfit-token rows (sublane slice) -> MLP head -> exact sigmoid ----
    glob = h2.reshape(OB, SP, D_MODEL)[:, 0, :]                                 # (OB, 128)
    z1 = jnp.maximum(jnp.dot(glob.astype(jnp.bfloat16), sq_ref[D_MODEL:2 * D_MODEL, :],
                             preferred_element_type=jnp.float32) + rows_ref[6:7, :], 0.0)
    z2 = jnp.dot(z1.astype(jnp.bfloat16), sq_ref[2 * D_MODEL:3 * D_MODEL, :],
                 preferred_element_type=jnp.float32) + rows_ref[7:8, :]         # logit in lane 0
    out_ref[...] = 1.0 / (1.0 + jnp.exp(-z2))                                   # (OB, 128)


# ----------------------------------------------------------------------------------------
# Plain-JAX glue: im2col, weight packing, mask generation, parameter init
# ----------------------------------------------------------------------------------------
def im2col_3x3(x):
    # x: (BN, C, H, W) -> (BN, H*W, C*9), 'same' padding, kernel 3x3
    BN, C, H, W = x.shape
    xp = jnp.pad(x, ((0, 0), (0, 0), (1, 1), (1, 1)))
    cols = []
    for dh in range(3):
        for dw in range(3):
            cols.append(xp[:, :, dh:dh + H, dw:dw + W])
    patches = jnp.stack(cols, axis=2)                          # (BN, C, 9, H, W)
    return patches.transpose(0, 3, 4, 1, 2).reshape(BN, H * W, C * 9)


def pack_weights(p, OB, N, SP, PG, PC1_PAD, HW):
    """Build packed / padded weight operands (compile-time work only)."""
    C9 = p["w_conv"].shape[0]

    # conv: block-diagonal lane-packed weight (PG positions -> PG*8 output lanes), bias folded
    w_conv_aug = jnp.concatenate(
        [p["w_conv"], p["b_conv"],
         jnp.zeros((PC1_PAD - C9 - 1, IMG_HID), jnp.float32)], axis=0)              # (PC1_PAD, 8)
    w_conv_pack = jnp.kron(jnp.eye(PG, dtype=jnp.float32),
                           w_conv_aug).astype(jnp.bfloat16)                          # (PG*PC1_PAD, PG*8)

    # image FC applied to the lane-packed pooled sums; 1/HW (mean pool) folded in
    w_imgpool = jnp.tile(p["w_img_fc"] / float(HW), (PG, 1))                         # (PG*8, 64)
    w_imgpool = jnp.concatenate(
        [w_imgpool, jnp.zeros((PG * IMG_HID, D_MODEL - IMG_EMB), jnp.float32)],
        axis=1).astype(jnp.bfloat16)                                                 # (PG*8, 128)

    # text FC into lanes 64..127
    w_txt_pad = jnp.concatenate(
        [jnp.zeros((TXT_EMB, IMG_EMB), jnp.float32), p["w_txt_fc"]],
        axis=1).astype(jnp.bfloat16)                                                 # (32, 128)
    b_cat = jnp.concatenate([p["b_img_fc"], p["b_txt_fc"]], axis=1)                  # (1, 128)

    # token-assembly scatter matrix + per-row constants (outfit token / item-FC bias / 0 for pad)
    r = jnp.arange(OB * SP)
    c = jnp.arange(OB * N)
    t_item = ((r[:, None] // SP == c[None, :] // N) &
              (r[:, None] % SP == c[None, :] % N + 1)).astype(jnp.float32)           # (OB*SP, OB*N)
    pos = r % SP
    tok_rows = jnp.where((pos == 0)[:, None], p["outfit_token"][None, :],
                         jnp.where((pos <= N)[:, None], b_cat, 0.0)
                         ).astype(jnp.float32)                                       # (OB*SP, 128)

    # fused QKV with the 1/sqrt(head_dim) attention scale folded into the Q part
    scale = 1.0 / math.sqrt(HEAD_DIM)
    wqkv = jnp.concatenate([p["wq"] * scale, p["wk"], p["wv"]],
                           axis=1).astype(jnp.bfloat16)                              # (128, 384)
    b_qkv = jnp.concatenate([p["bq"] * scale, p["bk"], p["bv"]], axis=1)             # (1, 384)
    b_ffn1_pad = jnp.pad(p["b_ffn1"], ((0, 0), (0, 3 * D_MODEL - FFN_DIM)))
    bias_wide = jnp.concatenate([b_qkv, b_ffn1_pad], axis=0)                         # (2, 384)

    # square 128x128 weights stacked into one operand: [wo ; mlp1(pad) ; mlp2(pad)]
    w_mlp1_pad = jnp.concatenate(
        [p["w_mlp1"], jnp.zeros((D_MODEL, D_MODEL - MLP_HID), jnp.float32)], axis=1)
    w_mlp2_pad = jnp.pad(p["w_mlp2"], ((0, D_MODEL - MLP_HID), (0, D_MODEL - 1)))
    sq_pack = jnp.concatenate([p["wo"], w_mlp1_pad, w_mlp2_pad],
                              axis=0).astype(jnp.bfloat16)                           # (384, 128)

    # pack all remaining (1,128) row params into a single (8,128) tile
    b_mlp1_pad = jnp.pad(p["b_mlp1"], ((0, 0), (0, D_MODEL - MLP_HID)))
    b_mlp2_pad = jnp.pad(p["b_mlp2"], ((0, 0), (0, D_MODEL - 1)))
    row_pack = jnp.concatenate([p["bo"], p["ln1_g"], p["ln1_b"], p["ln2_g"], p["ln2_b"],
                                p["b_ffn2"], b_mlp1_pad, b_mlp2_pad], axis=0)        # (8, 128)

    return [w_conv_pack, w_imgpool, w_txt_pad, t_item, tok_rows,
            wqkv, bias_wide, sq_pack,
            p["w_ffn1"].astype(jnp.bfloat16), p["w_ffn2"].astype(jnp.bfloat16),
            row_pack]


def init_params(key, img_channels):
    ks = jax.random.split(key, 24)

    def lin(k, fan_in, shape):
        return (jax.random.normal(k, shape, jnp.float32) / math.sqrt(fan_in)).astype(jnp.float32)

    patch_dim = img_channels * 9
    p = {
        "w_conv": lin(ks[0], patch_dim, (patch_dim, IMG_HID)),
        "b_conv": jnp.zeros((1, IMG_HID), jnp.float32),
        "w_img_fc": lin(ks[1], IMG_HID, (IMG_HID, IMG_EMB)),
        "b_img_fc": jnp.zeros((1, IMG_EMB), jnp.float32),
        "txt_table": jax.random.normal(ks[2], (VOCAB, TXT_EMB), jnp.float32) * 0.02,
        "w_txt_fc": lin(ks[3], TXT_EMB, (TXT_EMB, TXT_OUT)),
        "b_txt_fc": jnp.zeros((1, TXT_OUT), jnp.float32),
        "outfit_token": jax.random.normal(ks[4], (D_MODEL,), jnp.float32) * 0.02,
        "wq": lin(ks[5], D_MODEL, (D_MODEL, D_MODEL)), "bq": jnp.zeros((1, D_MODEL), jnp.float32),
        "wk": lin(ks[6], D_MODEL, (D_MODEL, D_MODEL)), "bk": jnp.zeros((1, D_MODEL), jnp.float32),
        "wv": lin(ks[7], D_MODEL, (D_MODEL, D_MODEL)), "bv": jnp.zeros((1, D_MODEL), jnp.float32),
        "wo": lin(ks[8], D_MODEL, (D_MODEL, D_MODEL)), "bo": jnp.zeros((1, D_MODEL), jnp.float32),
        "ln1_g": jnp.ones((1, D_MODEL), jnp.float32), "ln1_b": jnp.zeros((1, D_MODEL), jnp.float32),
        "w_ffn1": lin(ks[9], D_MODEL, (D_MODEL, FFN_DIM)), "b_ffn1": jnp.zeros((1, FFN_DIM), jnp.float32),
        "w_ffn2": lin(ks[10], FFN_DIM, (FFN_DIM, D_MODEL)), "b_ffn2": jnp.zeros((1, D_MODEL), jnp.float32),
        "ln2_g": jnp.ones((1, D_MODEL), jnp.float32), "ln2_b": jnp.zeros((1, D_MODEL), jnp.float32),
        "w_mlp1": lin(ks[11], D_MODEL, (D_MODEL, MLP_HID)), "b_mlp1": jnp.zeros((1, MLP_HID), jnp.float32),
        "w_mlp2": lin(ks[12], MLP_HID, (MLP_HID, 1)), "b_mlp2": jnp.zeros((1, 1), jnp.float32),
    }
    return p


def outfit_compatibility_forward(params, outfits_images, outfits_texts, outfits_items_nums):
    B, N, C, H, W = outfits_images.shape
    HW = H * W
    S = N + 1
    SP = ((S + 7) // 8) * 8                                    # token + items, padded to sublane mult.
    PG = next(g for g in (16, 8, 4, 2, 1) if HW % g == 0)      # spatial positions lane-packed per row
    PC1 = C * 9 + 1
    PC1_PAD = ((PC1 + 7) // 8) * 8
    PGC = PG * PC1_PAD
    NG = N * (HW // PG)

    # outfit blocking: big blocks on single-TC parts, >=2 grid steps on 2-TC parts (v7x megacore)
    try:
        kind = jax.devices()[0].device_kind.lower()
    except Exception:
        kind = ""
    single_tc = any(t in kind for t in ("v5 lite", "v5e", "v5litepod", "v6 lite", "v6e"))
    if B < 2:
        OB = max(B, 1)
    elif single_tc:
        OB = min(B, 16)
    else:
        OB = min(16, (B + 1) // 2)
    G = (B + OB - 1) // OB
    B_pad = G * OB

    # host-side im2col + ones column (bias fold) + pad to PC1_PAD, grouped PG positions per row
    imgs = outfits_images.reshape(B * N, C, H, W).astype(jnp.float32)
    patches = im2col_3x3(imgs)                                                       # (B*N, HW, C*9)
    patches = jnp.concatenate(
        [patches, jnp.ones((B * N, HW, 1), jnp.float32),
         jnp.zeros((B * N, HW, PC1_PAD - PC1), jnp.float32)], axis=-1)               # (B*N, HW, PC1_PAD)
    patches = patches.reshape(B, NG, PGC).astype(jnp.bfloat16)

    txt_tok = params["txt_table"][outfits_texts.reshape(B * N, -1)]                  # (B*N, L, 32)
    txt = jnp.mean(txt_tok, axis=1).reshape(B, N, TXT_EMB).astype(jnp.bfloat16)

    nums = outfits_items_nums.astype(jnp.int32)
    if B_pad > B:
        pad = B_pad - B
        patches = jnp.concatenate([patches, jnp.zeros((pad, NG, PGC), patches.dtype)], axis=0)
        txt = jnp.concatenate([txt, jnp.zeros((pad, N, TXT_EMB), txt.dtype)], axis=0)
        nums = jnp.concatenate([nums, jnp.zeros((pad,), jnp.int32)], axis=0)

    patches = patches.reshape(G, OB, NG, PGC)
    txt = txt.reshape(G, OB * N, TXT_EMB)

    # tiny additive key-padding mask: position p (0 = outfit token) valid iff p <= nums[outfit]
    pos = jnp.arange(SP)
    add_mask = jnp.where(pos[None, :] <= nums[:, None], 0.0, -1e9).astype(jnp.float32)
    add_mask = add_mask.reshape(G, OB, SP)                                           # (G, OB, SP)

    weights = pack_weights(params, OB, N, SP, PG, PC1_PAD, HW)

    in_specs = [
        pl.BlockSpec((None, OB, NG, PGC), lambda g: (g, 0, 0, 0)),
        pl.BlockSpec((None, OB * N, TXT_EMB), lambda g: (g, 0, 0)),
        pl.BlockSpec((None, OB, SP), lambda g: (g, 0, 0)),
    ] + [pl.BlockSpec(w.shape, lambda g, nd=w.ndim: (0,) * nd) for w in weights]

    out = pl.pallas_call(
        fused_outfit_kernel,
        out_shape=jax.ShapeDtypeStruct((G, OB, D_MODEL), jnp.float32),
        grid_spec=pltpu.PrefetchScalarGridSpec(
            num_scalar_prefetch=0,
            grid=(G,),
            in_specs=in_specs,
            out_specs=pl.BlockSpec((None, OB, D_MODEL), lambda g: (g, 0, 0)),
        ),
        compiler_params=pltpu.CompilerParams(
            dimension_semantics=("parallel",),
            vmem_limit_bytes=32 * 1024 * 1024),
    )(patches, txt, add_mask, *weights)

    return out.reshape(B_pad, D_MODEL)[:B, 0]          # (B,) outfit scores (== .squeeze(1))


if __name__ == "__main__":
    key = jax.random.PRNGKey(0)
    k_img, k_txt, k_par = jax.random.split(key, 3)

    B, N, C, H, W, L = 2, 6, 3, 16, 16, 5
    outfits_images = jax.random.normal(k_img, (B, N, C, H, W), jnp.float32)
    outfits_texts = jax.random.randint(k_txt, (B, N, L), 0, VOCAB, dtype=jnp.int32)
    outfits_items_nums = jnp.array([6, 4], jnp.int32)

    params = init_params(k_par, C)
    fwd = jax.jit(outfit_compatibility_forward)
    scores = fwd(params, outfits_images, outfits_texts, outfits_items_nums)
    scores = jax.block_until_ready(scores)
    assert scores.shape == (B,)
    assert bool(jnp.all(jnp.isfinite(scores)))
    print("KERNEL_OK")
</pallas_src>

<mosaic_0001>
module attributes {stable_mosaic.version = 11 : i64} {
  func.func @fused_outfit_kernel(%arg0: i32, %arg1: memref<1x1x96x512xbf16, #tpu.memory_space<vmem>>, %arg2: memref<1x6x32xbf16, #tpu.memory_space<vmem>>, %arg3: memref<1x1x8xf32, #tpu.memory_space<vmem>>, %arg4: memref<512x128xbf16, #tpu.memory_space<vmem>>, %arg5: memref<128x128xbf16, #tpu.memory_space<vmem>>, %arg6: memref<32x128xbf16, #tpu.memory_space<vmem>>, %arg7: memref<8x6xf32, #tpu.memory_space<vmem>>, %arg8: memref<8x128xf32, #tpu.memory_space<vmem>>, %arg9: memref<128x384xbf16, #tpu.memory_space<vmem>>, %arg10: memref<2x384xf32, #tpu.memory_space<vmem>>, %arg11: memref<384x128xbf16, #tpu.memory_space<vmem>>, %arg12: memref<128x256xbf16, #tpu.memory_space<vmem>>, %arg13: memref<256x128xbf16, #tpu.memory_space<vmem>>, %arg14: memref<8x128xf32, #tpu.memory_space<vmem>>, %arg15: memref<1x1x128xf32, #tpu.memory_space<vmem>>) attributes {dimension_semantics = [#tpu.dimension_semantics<parallel>], iteration_bounds = array<i64: 2>, scalar_prefetch = 0 : i64, scratch_operands = 0 : i64, tpu.core_type = #tpu.core_type<tc>, window_params = [{transform_indices = @transform_0, window_bounds = array<i64: 1, 1, 96, 512>}, {transform_indices = @transform_1, window_bounds = array<i64: 1, 6, 32>}, {transform_indices = @transform_2, window_bounds = array<i64: 1, 1, 8>}, {pipeline_mode = #tpu.pipeline_mode<synchronous>, transform_indices = @transform_3, window_bounds = array<i64: 512, 128>}, {pipeline_mode = #tpu.pipeline_mode<synchronous>, transform_indices = @transform_4, window_bounds = array<i64: 128, 128>}, {pipeline_mode = #tpu.pipeline_mode<synchronous>, transform_indices = @transform_5, window_bounds = array<i64: 32, 128>}, {pipeline_mode = #tpu.pipeline_mode<synchronous>, transform_indices = @transform_6, window_bounds = array<i64: 8, 6>}, {pipeline_mode = #tpu.pipeline_mode<synchronous>, transform_indices = @transform_7, window_bounds = array<i64: 8, 128>}, {pipeline_mode = #tpu.pipeline_mode<synchronous>, transform_indices = @transform_8, window_bounds = array<i64: 128, 384>}, {pipeline_mode = #tpu.pipeline_mode<synchronous>, transform_indices = @transform_9, window_bounds = array<i64: 2, 384>}, {pipeline_mode = #tpu.pipeline_mode<synchronous>, transform_indices = @transform_10, window_bounds = array<i64: 384, 128>}, {pipeline_mode = #tpu.pipeline_mode<synchronous>, transform_indices = @transform_11, window_bounds = array<i64: 128, 256>}, {pipeline_mode = #tpu.pipeline_mode<synchronous>, transform_indices = @transform_12, window_bounds = array<i64: 256, 128>}, {pipeline_mode = #tpu.pipeline_mode<synchronous>, transform_indices = @transform_13, window_bounds = array<i64: 8, 128>}, {transform_indices = @transform_14, window_bounds = array<i64: 1, 1, 128>}]} {
    %c0 = arith.constant 0 : index
    %c0_0 = arith.constant 0 : index
    %c0_1 = arith.constant 0 : index
    %c0_2 = arith.constant 0 : index
    %0 = vector.load %arg1[%c0, %c0_0, %c0_1, %c0_2] : memref<1x1x96x512xbf16, #tpu.memory_space<vmem>>, vector<1x1x96x512xbf16>
    %1 = vector.shape_cast %0 : vector<1x1x96x512xbf16> to vector<1x96x512xbf16>
    %2 = vector.shape_cast %1 : vector<1x96x512xbf16> to vector<96x512xbf16>
    %c0_3 = arith.constant 0 : index
    %c0_4 = arith.constant 0 : index
    %3 = vector.load %arg4[%c0_3, %c0_4] : memref<512x128xbf16, #tpu.memory_space<vmem>>, vector<512x128xbf16>
    %cst = arith.constant dense<0.000000e+00> : vector<96x128xf32>
    %4 = tpu.matmul %2, %3, %cst {dimension_numbers = #tpu.dot_dimension_numbers<[1], [0], [0], [1], [0, 0, 1, 1], [], []>} : vector<96x512xbf16>, vector<512x128xbf16>, vector<96x128xf32> -> vector<96x128xf32>
    %cst_5 = arith.constant 0.000000e+00 : f32
    %5 = vector.broadcast %cst_5 : f32 to vector<96x128xf32>
    %6 = arith.maximumf %4, %5 : vector<96x128xf32>
    %7 = vector.shape_cast %6 : vector<96x128xf32> to vector<6x16x128xf32>
    %cst_6 = arith.constant dense<0.000000e+00> : vector<6x128xf32>
    %8 = vector.multi_reduction <add>, %7, %cst_6 [1] : vector<6x16x128xf32> to vector<6x128xf32>
    %9 = arith.truncf %8 : vector<6x128xf32> to vector<6x128xbf16>
    %c0_7 = arith.constant 0 : index
    %c0_8 = arith.constant 0 : index
    %10 = vector.load %arg5[%c0_7, %c0_8] : memref<128x128xbf16, #tpu.memory_space<vmem>>, vector<128x128xbf16>
    %cst_9 = arith.constant dense<0.000000e+00> : vector<6x128xf32>
    %11 = tpu.matmul %9, %10, %cst_9 {dimension_numbers = #tpu.dot_dimension_numbers<[1], [0], [0], [1], [0, 0, 1, 1], [], []>} : vector<6x128xbf16>, vector<128x128xbf16>, vector<6x128xf32> -> vector<6x128xf32>
    %c0_10 = arith.constant 0 : index
    %c0_11 = arith.constant 0 : index
    %c0_12 = arith.constant 0 : index
    %12 = vector.load %arg2[%c0_10, %c0_11, %c0_12] : memref<1x6x32xbf16, #tpu.memory_space<vmem>>, vector<1x6x32xbf16>
    %13 = vector.shape_cast %12 : vector<1x6x32xbf16> to vector<6x32xbf16>
    %c0_13 = arith.constant 0 : index
    %c0_14 = arith.constant 0 : index
    %14 = vector.load %arg6[%c0_13, %c0_14] : memref<32x128xbf16, #tpu.memory_space<vmem>>, vector<32x128xbf16>
    %cst_15 = arith.constant dense<0.000000e+00> : vector<6x128xf32>
    %15 = tpu.matmul %13, %14, %cst_15 {dimension_numbers = #tpu.dot_dimension_numbers<[1], [0], [0], [1], [0, 0, 1, 1], [], []>} : vector<6x32xbf16>, vector<32x128xbf16>, vector<6x128xf32> -> vector<6x128xf32>
    %16 = arith.addf %11, %15 : vector<6x128xf32>
    %c0_16 = arith.constant 0 : index
    %c0_17 = arith.constant 0 : index
    %17 = vector.load %arg7[%c0_16, %c0_17] : memref<8x6xf32, #tpu.memory_space<vmem>>, vector<8x6xf32>
    %cst_18 = arith.constant dense<0.000000e+00> : vector<8x128xf32>
    %18 = tpu.matmul %17, %16, %cst_18 {dimension_numbers = #tpu.dot_dimension_numbers<[1], [0], [0], [1], [0, 0, 1, 1], [], []>} : vector<8x6xf32>, vector<6x128xf32>, vector<8x128xf32> -> vector<8x128xf32>
    %c0_19 = arith.constant 0 : index
    %c0_20 = arith.constant 0 : index
    %19 = vector.load %arg8[%c0_19, %c0_20] : memref<8x128xf32, #tpu.memory_space<vmem>>, vector<8x128xf32>
    %20 = arith.addf %18, %19 : vector<8x128xf32>
    %21 = arith.truncf %20 : vector<8x128xf32> to vector<8x128xbf16>
    %c0_21 = arith.constant 0 : index
    %c0_22 = arith.constant 0 : index
    %22 = vector.load %arg9[%c0_21, %c0_22] : memref<128x384xbf16, #tpu.memory_space<vmem>>, vector<128x384xbf16>
    %cst_23 = arith.constant dense<0.000000e+00> : vector<8x384xf32>
    %23 = tpu.matmul %21, %22, %cst_23 {dimension_numbers = #tpu.dot_dimension_numbers<[1], [0], [0], [1], [0, 0, 1, 1], [], []>} : vector<8x128xbf16>, vector<128x384xbf16>, vector<8x384xf32> -> vector<8x384xf32>
    %c0_24 = arith.constant 0 : index
    %c0_25 = arith.constant 0 : index
    %24 = vector.load %arg10[%c0_24, %c0_25] : memref<2x384xf32, #tpu.memory_space<vmem>>, vector<1x384xf32>
    %25 = vector.broadcast %24 : vector<1x384xf32> to vector<8x384xf32>
    %26 = arith.addf %23, %25 : vector<8x384xf32>
    %c0_26 = arith.constant 0 : index
    %c0_27 = arith.constant 0 : index
    %c0_28 = arith.constant 0 : index
    %27 = vector.load %arg3[%c0_26, %c0_27, %c0_28] : memref<1x1x8xf32, #tpu.memory_space<vmem>>, vector<1x1x8xf32>
    %28 = vector.shape_cast %27 : vector<1x1x8xf32> to vector<1x8xf32>
    %29 = vector.extract_strided_slice %26 {offsets = [0, 0], sizes = [8, 32], strides = [1, 1]} : vector<8x384xf32> to vector<8x32xf32>
    %30 = vector.shape_cast %29 : vector<8x32xf32> to vector<1x8x32xf32>
    %31 = vector.extract_strided_slice %26 {offsets = [0, 128], sizes = [8, 32], strides = [1, 1]} : vector<8x384xf32> to vector<8x32xf32>
    %32 = vector.shape_cast %31 : vector<8x32xf32> to vector<1x8x32xf32>
    %33 = vector.extract_strided_slice %26 {offsets = [0, 256], sizes = [8, 32], strides = [1, 1]} : vector<8x384xf32> to vector<8x32xf32>
    %34 = vector.shape_cast %33 : vector<8x32xf32> to vector<1x8x32xf32>
    "tpu.trace_start"() <{level = 10 : i32, message = "bqd,bkd->bqk"}> : () -> ()
    %cst_29 = arith.constant dense<0.000000e+00> : vector<1x8x8xf32>
    %35 = tpu.matmul %30, %32, %cst_29 {dimension_numbers = #tpu.dot_dimension_numbers<[2], [2], [1], [1], [0, 0, 0, 1, 1, 1], [0], [0]>} : vector<1x8x32xf32>, vector<1x8x32xf32>, vector<1x8x8xf32> -> vector<1x8x8xf32>
    "tpu.trace_stop"() : () -> ()
    %36 = vector.shape_cast %28 : vector<1x8xf32> to vector<1x1x8xf32>
    %37 = vector.broadcast %36 : vector<1x1x8xf32> to vector<1x8x8xf32>
    %38 = arith.addf %35, %37 : vector<1x8x8xf32>
    %cst_30 = arith.constant dense<0xFF800000> : vector<1x8xf32>
    %39 = vector.multi_reduction <maximumf>, %38, %cst_30 [2] : vector<1x8x8xf32> to vector<1x8xf32>
    %40 = vector.shape_cast %39 : vector<1x8xf32> to vector<1x8x1xf32>
    %41 = vector.broadcast %40 : vector<1x8x1xf32> to vector<1x8x8xf32>
    %42 = arith.subf %38, %41 : vector<1x8x8xf32>
    %43 = math.exp %42 : vector<1x8x8xf32>
    %cst_31 = arith.constant dense<0.000000e+00> : vector<1x8xf32>
    %44 = vector.multi_reduction <add>, %43, %cst_31 [2] : vector<1x8x8xf32> to vector<1x8xf32>
    %45 = vector.shape_cast %44 : vector<1x8xf32> to vector<1x8x1xf32>
    %46 = tpu.reciprocal %45 {approx = true} : vector<1x8x1xf32> -> vector<1x8x1xf32>
    %47 = vector.broadcast %46 : vector<1x8x1xf32> to vector<1x8x8xf32>
    %48 = arith.mulf %43, %47 : vector<1x8x8xf32>
    "tpu.trace_start"() <{level = 10 : i32, message = "bqk,bkd->bqd"}> : () -> ()
    %cst_32 = arith.constant dense<0.000000e+00> : vector<1x8x32xf32>
    %49 = tpu.matmul %48, %34, %cst_32 {dimension_numbers = #tpu.dot_dimension_numbers<[2], [1], [1], [2], [0, 0, 0, 1, 1, 2], [0], [0]>} : vector<1x8x8xf32>, vector<1x8x32xf32>, vector<1x8x32xf32> -> vector<1x8x32xf32>
    "tpu.trace_stop"() : () -> ()
    %50 = vector.shape_cast %49 : vector<1x8x32xf32> to vector<8x32xf32>
    %51 = vector.extract_strided_slice %26 {offsets = [0, 32], sizes = [8, 32], strides = [1, 1]} : vector<8x384xf32> to vector<8x32xf32>
    %52 = vector.shape_cast %51 : vector<8x32xf32> to vector<1x8x32xf32>
    %53 = vector.extract_strided_slice %26 {offsets = [0, 160], sizes = [8, 32], strides = [1, 1]} : vector<8x384xf32> to vector<8x32xf32>
    %54 = vector.shape_cast %53 : vector<8x32xf32> to vector<1x8x32xf32>
    %55 = vector.extract_strided_slice %26 {offsets = [0, 288], sizes = [8, 32], strides = [1, 1]} : vector<8x384xf32> to vector<8x32xf32>
    %56 = vector.shape_cast %55 : vector<8x32xf32> to vector<1x8x32xf32>
    "tpu.trace_start"() <{level = 10 : i32, message = "bqd,bkd->bqk"}> : () -> ()
    %cst_33 = arith.constant dense<0.000000e+00> : vector<1x8x8xf32>
    %57 = tpu.matmul %52, %54, %cst_33 {dimension_numbers = #tpu.dot_dimension_numbers<[2], [2], [1], [1], [0, 0, 0, 1, 1, 1], [0], [0]>} : vector<1x8x32xf32>, vector<1x8x32xf32>, vector<1x8x8xf32> -> vector<1x8x8xf32>
    "tpu.trace_stop"() : () -> ()
    %58 = vector.shape_cast %28 : vector<1x8xf32> to vector<1x1x8xf32>
    %59 = vector.broadcast %58 : vector<1x1x8xf32> to vector<1x8x8xf32>
    %60 = arith.addf %57, %59 : vector<1x8x8xf32>
    %cst_34 = arith.constant dense<0xFF800000> : vector<1x8xf32>
    %61 = vector.multi_reduction <maximumf>, %60, %cst_34 [2] : vector<1x8x8xf32> to vector<1x8xf32>
    %62 = vector.shape_cast %61 : vector<1x8xf32> to vector<1x8x1xf32>
    %63 = vector.broadcast %62 : vector<1x8x1xf32> to vector<1x8x8xf32>
    %64 = arith.subf %60, %63 : vector<1x8x8xf32>
    %65 = math.exp %64 : vector<1x8x8xf32>
    %cst_35 = arith.constant dense<0.000000e+00> : vector<1x8xf32>
    %66 = vector.multi_reduction <add>, %65, %cst_35 [2] : vector<1x8x8xf32> to vector<1x8xf32>
    %67 = vector.shape_cast %66 : vector<1x8xf32> to vector<1x8x1xf32>
    %68 = tpu.reciprocal %67 {approx = true} : vector<1x8x1xf32> -> vector<1x8x1xf32>
    %69 = vector.broadcast %68 : vector<1x8x1xf32> to vector<1x8x8xf32>
    %70 = arith.mulf %65, %69 : vector<1x8x8xf32>
    "tpu.trace_start"() <{level = 10 : i32, message = "bqk,bkd->bqd"}> : () -> ()
    %cst_36 = arith.constant dense<0.000000e+00> : vector<1x8x32xf32>
    %71 = tpu.matmul %70, %56, %cst_36 {dimension_numbers = #tpu.dot_dimension_numbers<[2], [1], [1], [2], [0, 0, 0, 1, 1, 2], [0], [0]>} : vector<1x8x8xf32>, vector<1x8x32xf32>, vector<1x8x32xf32> -> vector<1x8x32xf32>
    "tpu.trace_stop"() : () -> ()
    %72 = vector.shape_cast %71 : vector<1x8x32xf32> to vector<8x32xf32>
    %73 = vector.extract_strided_slice %26 {offsets = [0, 64], sizes = [8, 32], strides = [1, 1]} : vector<8x384xf32> to vector<8x32xf32>
    %74 = vector.shape_cast %73 : vector<8x32xf32> to vector<1x8x32xf32>
    %75 = vector.extract_strided_slice %26 {offsets = [0, 192], sizes = [8, 32], strides = [1, 1]} : vector<8x384xf32> to vector<8x32xf32>
    %76 = vector.shape_cast %75 : vector<8x32xf32> to vector<1x8x32xf32>
    %77 = vector.extract_strided_slice %26 {offsets = [0, 320], sizes = [8, 32], strides = [1, 1]} : vector<8x384xf32> to vector<8x32xf32>
    %78 = vector.shape_cast %77 : vector<8x32xf32> to vector<1x8x32xf32>
    "tpu.trace_start"() <{level = 10 : i32, message = "bqd,bkd->bqk"}> : () -> ()
    %cst_37 = arith.constant dense<0.000000e+00> : vector<1x8x8xf32>
    %79 = tpu.matmul %74, %76, %cst_37 {dimension_numbers = #tpu.dot_dimension_numbers<[2], [2], [1], [1], [0, 0, 0, 1, 1, 1], [0], [0]>} : vector<1x8x32xf32>, vector<1x8x32xf32>, vector<1x8x8xf32> -> vector<1x8x8xf32>
    "tpu.trace_stop"() : () -> ()
    %80 = vector.shape_cast %28 : vector<1x8xf32> to vector<1x1x8xf32>
    %81 = vector.broadcast %80 : vector<1x1x8xf32> to vector<1x8x8xf32>
    %82 = arith.addf %79, %81 : vector<1x8x8xf32>
    %cst_38 = arith.constant dense<0xFF800000> : vector<1x8xf32>
    %83 = vector.multi_reduction <maximumf>, %82, %cst_38 [2] : vector<1x8x8xf32> to vector<1x8xf32>
    %84 = vector.shape_cast %83 : vector<1x8xf32> to vector<1x8x1xf32>
    %85 = vector.broadcast %84 : vector<1x8x1xf32> to vector<1x8x8xf32>
    %86 = arith.subf %82, %85 : vector<1x8x8xf32>
    %87 = math.exp %86 : vector<1x8x8xf32>
    %cst_39 = arith.constant dense<0.000000e+00> : vector<1x8xf32>
    %88 = vector.multi_reduction <add>, %87, %cst_39 [2] : vector<1x8x8xf32> to vector<1x8xf32>
    %89 = vector.shape_cast %88 : vector<1x8xf32> to vector<1x8x1xf32>
    %90 = tpu.reciprocal %89 {approx = true} : vector<1x8x1xf32> -> vector<1x8x1xf32>
    %91 = vector.broadcast %90 : vector<1x8x1xf32> to vector<1x8x8xf32>
    %92 = arith.mulf %87, %91 : vector<1x8x8xf32>
    "tpu.trace_start"() <{level = 10 : i32, message = "bqk,bkd->bqd"}> : () -> ()
    %cst_40 = arith.constant dense<0.000000e+00> : vector<1x8x32xf32>
    %93 = tpu.matmul %92, %78, %cst_40 {dimension_numbers = #tpu.dot_dimension_numbers<[2], [1], [1], [2], [0, 0, 0, 1, 1, 2], [0], [0]>} : vector<1x8x8xf32>, vector<1x8x32xf32>, vector<1x8x32xf32> -> vector<1x8x32xf32>
    "tpu.trace_stop"() : () -> ()
    %94 = vector.shape_cast %93 : vector<1x8x32xf32> to vector<8x32xf32>
    %95 = vector.extract_strided_slice %26 {offsets = [0, 96], sizes = [8, 32], strides = [1, 1]} : vector<8x384xf32> to vector<8x32xf32>
    %96 = vector.shape_cast %95 : vector<8x32xf32> to vector<1x8x32xf32>
    %97 = vector.extract_strided_slice %26 {offsets = [0, 224], sizes = [8, 32], strides = [1, 1]} : vector<8x384xf32> to vector<8x32xf32>
    %98 = vector.shape_cast %97 : vector<8x32xf32> to vector<1x8x32xf32>
    %99 = vector.extract_strided_slice %26 {offsets = [0, 352], sizes = [8, 32], strides = [1, 1]} : vector<8x384xf32> to vector<8x32xf32>
    %100 = vector.shape_cast %99 : vector<8x32xf32> to vector<1x8x32xf32>
    "tpu.trace_start"() <{level = 10 : i32, message = "bqd,bkd->bqk"}> : () -> ()
    %cst_41 = arith.constant dense<0.000000e+00> : vector<1x8x8xf32>
    %101 = tpu.matmul %96, %98, %cst_41 {dimension_numbers = #tpu.dot_dimension_numbers<[2], [2], [1], [1], [0, 0, 0, 1, 1, 1], [0], [0]>} : vector<1x8x32xf32>, vector<1x8x32xf32>, vector<1x8x8xf32> -> vector<1x8x8xf32>
    "tpu.trace_stop"() : () -> ()
    %102 = vector.shape_cast %28 : vector<1x8xf32> to vector<1x1x8xf32>
    %103 = vector.broadcast %102 : vector<1x1x8xf32> to vector<1x8x8xf32>
    %104 = arith.addf %101, %103 : vector<1x8x8xf32>
    %cst_42 = arith.constant dense<0xFF800000> : vector<1x8xf32>
    %105 = vector.multi_reduction <maximumf>, %104, %cst_42 [2] : vector<1x8x8xf32> to vector<1x8xf32>
    %106 = vector.shape_cast %105 : vector<1x8xf32> to vector<1x8x1xf32>
    %107 = vector.broadcast %106 : vector<1x8x1xf32> to vector<1x8x8xf32>
    %108 = arith.subf %104, %107 : vector<1x8x8xf32>
    %109 = math.exp %108 : vector<1x8x8xf32>
    %cst_43 = arith.constant dense<0.000000e+00> : vector<1x8xf32>
    %110 = vector.multi_reduction <add>, %109, %cst_43 [2] : vector<1x8x8xf32> to vector<1x8xf32>
    %111 = vector.shape_cast %110 : vector<1x8xf32> to vector<1x8x1xf32>
    %112 = tpu.reciprocal %111 {approx = true} : vector<1x8x1xf32> -> vector<1x8x1xf32>
    %113 = vector.broadcast %112 : vector<1x8x1xf32> to vector<1x8x8xf32>
    %114 = arith.mulf %109, %113 : vector<1x8x8xf32>
    "tpu.trace_start"() <{level = 10 : i32, message = "bqk,bkd->bqd"}> : () -> ()
    %cst_44 = arith.constant dense<0.000000e+00> : vector<1x8x32xf32>
    %115 = tpu.matmul %114, %100, %cst_44 {dimension_numbers = #tpu.dot_dimension_numbers<[2], [1], [1], [2], [0, 0, 0, 1, 1, 2], [0], [0]>} : vector<1x8x8xf32>, vector<1x8x32xf32>, vector<1x8x32xf32> -> vector<1x8x32xf32>
    "tpu.trace_stop"() : () -> ()
    %116 = vector.shape_cast %115 : vector<1x8x32xf32> to vector<8x32xf32>
    %117 = tpu.concatenate %50, %72, %94, %116 in 1 : vector<8x32xf32>, vector<8x32xf32>, vector<8x32xf32>, vector<8x32xf32> -> vector<8x128xf32>
    %118 = arith.truncf %117 : vector<8x128xf32> to vector<8x128xbf16>
    %c0_45 = arith.constant 0 : index
    %c0_46 = arith.constant 0 : index
    %119 = vector.load %arg11[%c0_45, %c0_46] : memref<384x128xbf16, #tpu.memory_space<vmem>>, vector<128x128xbf16>
    %cst_47 = arith.constant dense<0.000000e+00> : vector<8x128xf32>
    %120 = tpu.matmul %118, %119, %cst_47 {dimension_numbers = #tpu.dot_dimension_numbers<[1], [0], [0], [1], [0, 0, 1, 1], [], []>} : vector<8x128xbf16>, vector<128x128xbf16>, vector<8x128xf32> -> vector<8x128xf32>
    %c0_48 = arith.constant 0 : index
    %c0_49 = arith.constant 0 : index
    %121 = vector.load %arg14[%c0_48, %c0_49] : memref<8x128xf32, #tpu.memory_space<vmem>>, vector<1x128xf32>
    %122 = vector.broadcast %121 : vector<1x128xf32> to vector<8x128xf32>
    %123 = arith.addf %120, %122 : vector<8x128xf32>
    %124 = arith.addf %20, %123 : vector<8x128xf32>
    %c1 = arith.constant 1 : index
    %c0_50 = arith.constant 0 : index
    %125 = vector.load %arg14[%c1, %c0_50] : memref<8x128xf32, #tpu.memory_space<vmem>>, vector<1x128xf32>
    %c2 = arith.constant 2 : index
    %c0_51 = arith.constant 0 : index
    %126 = vector.load %arg14[%c2, %c0_51] : memref<8x128xf32, #tpu.memory_space<vmem>>, vector<1x128xf32>
    %cst_52 = arith.constant dense<0.000000e+00> : vector<8xf32>
    %127 = vector.multi_reduction <add>, %124, %cst_52 [1] : vector<8x128xf32> to vector<8xf32>
    %128 = vector.shape_cast %127 : vector<8xf32> to vector<8x1xf32>
    %cst_53 = arith.constant 1.280000e+02 : f32
    %129 = vector.broadcast %cst_53 : f32 to vector<8x1xf32>
    %130 = arith.divf %128, %129 : vector<8x1xf32>
    %131 = vector.broadcast %130 : vector<8x1xf32> to vector<8x128xf32>
    %132 = arith.subf %124, %131 : vector<8x128xf32>
    %133 = arith.mulf %132, %132 : vector<8x128xf32>
    %cst_54 = arith.constant dense<0.000000e+00> : vector<8xf32>
    %134 = vector.multi_reduction <add>, %133, %cst_54 [1] : vector<8x128xf32> to vector<8xf32>
    %135 = vector.shape_cast %134 : vector<8xf32> to vector<8x1xf32>
    %cst_55 = arith.constant 1.280000e+02 : f32
    %136 = vector.broadcast %cst_55 : f32 to vector<8x1xf32>
    %137 = arith.divf %135, %136 : vector<8x1xf32>
    %138 = vector.broadcast %130 : vector<8x1xf32> to vector<8x128xf32>
    %139 = arith.subf %124, %138 : vector<8x128xf32>
    %cst_56 = arith.constant 9.99999974E-6 : f32
    %140 = vector.broadcast %cst_56 : f32 to vector<8x1xf32>
    %141 = arith.addf %137, %140 : vector<8x1xf32>
    %142 = math.rsqrt %141 : vector<8x1xf32>
    %143 = vector.broadcast %142 : vector<8x1xf32> to vector<8x128xf32>
    %144 = arith.mulf %139, %143 : vector<8x128xf32>
    %145 = vector.broadcast %125 : vector<1x128xf32> to vector<8x128xf32>
    %146 = arith.mulf %144, %145 : vector<8x128xf32>
    %147 = vector.broadcast %126 : vector<1x128xf32> to vector<8x128xf32>
    %148 = arith.addf %146, %147 : vector<8x128xf32>
    %149 = arith.truncf %148 : vector<8x128xf32> to vector<8x128xbf16>
    %c0_57 = arith.constant 0 : index
    %c0_58 = arith.constant 0 : index
    %150 = vector.load %arg12[%c0_57, %c0_58] : memref<128x256xbf16, #tpu.memory_space<vmem>>, vector<128x256xbf16>
    %cst_59 = arith.constant dense<0.000000e+00> : vector<8x256xf32>
    %151 = tpu.matmul %149, %150, %cst_59 {dimension_numbers = #tpu.dot_dimension_numbers<[1], [0], [0], [1], [0, 0, 1, 1], [], []>} : vector<8x128xbf16>, vector<128x256xbf16>, vector<8x256xf32> -> vector<8x256xf32>
    %c1_60 = arith.constant 1 : index
    %c0_61 = arith.constant 0 : index
    %152 = vector.load %arg10[%c1_60, %c0_61] : memref<2x384xf32, #tpu.memory_space<vmem>>, vector<1x256xf32>
    %153 = vector.broadcast %152 : vector<1x256xf32> to vector<8x256xf32>
    %154 = arith.addf %151, %153 : vector<8x256xf32>
    %cst_62 = arith.constant 0.000000e+00 : f32
    %155 = vector.broadcast %cst_62 : f32 to vector<8x256xf32>
    %156 = arith.maximumf %154, %155 : vector<8x256xf32>
    %157 = arith.truncf %156 : vector<8x256xf32> to vector<8x256xbf16>
    %c0_63 = arith.constant 0 : index
    %c0_64 = arith.constant 0 : index
    %158 = vector.load %arg13[%c0_63, %c0_64] : memref<256x128xbf16, #tpu.memory_space<vmem>>, vector<256x128xbf16>
    %cst_65 = arith.constant dense<0.000000e+00> : vector<8x128xf32>
    %159 = tpu.matmul %157, %158, %cst_65 {dimension_numbers = #tpu.dot_dimension_numbers<[1], [0], [0], [1], [0, 0, 1, 1], [], []>} : vector<8x256xbf16>, vector<256x128xbf16>, vector<8x128xf32> -> vector<8x128xf32>
    %c5 = arith.constant 5 : index
    %c0_66 = arith.constant 0 : index
    %160 = vector.load %arg14[%c5, %c0_66] : memref<8x128xf32, #tpu.memory_space<vmem>>, vector<1x128xf32>
    %161 = vector.broadcast %160 : vector<1x128xf32> to vector<8x128xf32>
    %162 = arith.addf %159, %161 : vector<8x128xf32>
    %163 = arith.addf %148, %162 : vector<8x128xf32>
    %c3 = arith.constant 3 : index
    %c0_67 = arith.constant 0 : index
    %164 = vector.load %arg14[%c3, %c0_67] : memref<8x128xf32, #tpu.memory_space<vmem>>, vector<1x128xf32>
    %c4 = arith.constant 4 : index
    %c0_68 = arith.constant 0 : index
    %165 = vector.load %arg14[%c4, %c0_68] : memref<8x128xf32, #tpu.memory_space<vmem>>, vector<1x128xf32>
    %cst_69 = arith.constant dense<0.000000e+00> : vector<8xf32>
    %166 = vector.multi_reduction <add>, %163, %cst_69 [1] : vector<8x128xf32> to vector<8xf32>
    %167 = vector.shape_cast %166 : vector<8xf32> to vector<8x1xf32>
    %cst_70 = arith.constant 1.280000e+02 : f32
    %168 = vector.broadcast %cst_70 : f32 to vector<8x1xf32>
    %169 = arith.divf %167, %168 : vector<8x1xf32>
    %170 = vector.broadcast %169 : vector<8x1xf32> to vector<8x128xf32>
    %171 = arith.subf %163, %170 : vector<8x128xf32>
    %172 = arith.mulf %171, %171 : vector<8x128xf32>
    %cst_71 = arith.constant dense<0.000000e+00> : vector<8xf32>
    %173 = vector.multi_reduction <add>, %172, %cst_71 [1] : vector<8x128xf32> to vector<8xf32>
    %174 = vector.shape_cast %173 : vector<8xf32> to vector<8x1xf32>
    %cst_72 = arith.constant 1.280000e+02 : f32
    %175 = vector.broadcast %cst_72 : f32 to vector<8x1xf32>
    %176 = arith.divf %174, %175 : vector<8x1xf32>
    %177 = vector.broadcast %169 : vector<8x1xf32> to vector<8x128xf32>
    %178 = arith.subf %163, %177 : vector<8x128xf32>
    %cst_73 = arith.constant 9.99999974E-6 : f32
    %179 = vector.broadcast %cst_73 : f32 to vector<8x1xf32>
    %180 = arith.addf %176, %179 : vector<8x1xf32>
    %181 = math.rsqrt %180 : vector<8x1xf32>
    %182 = vector.broadcast %181 : vector<8x1xf32> to vector<8x128xf32>
    %183 = arith.mulf %178, %182 : vector<8x128xf32>
    %184 = vector.broadcast %164 : vector<1x128xf32> to vector<8x128xf32>
    %185 = arith.mulf %183, %184 : vector<8x128xf32>
    %186 = vector.broadcast %165 : vector<1x128xf32> to vector<8x128xf32>
    %187 = arith.addf %185, %186 : vector<8x128xf32>
    %188 = vector.shape_cast %187 : vector<8x128xf32> to vector<1x8x128xf32>
    %189 = vector.extract_strided_slice %188 {offsets = [0, 0, 0], sizes = [1, 1, 128], strides = [1, 1, 1]} : vector<1x8x128xf32> to vector<1x1x128xf32>
    %190 = vector.shape_cast %189 : vector<1x1x128xf32> to vector<1x128xf32>
    %191 = arith.truncf %190 : vector<1x128xf32> to vector<1x128xbf16>
    %c128 = arith.constant 128 : index
    %c0_74 = arith.constant 0 : index
    %192 = vector.load %arg11[%c128, %c0_74] : memref<384x128xbf16, #tpu.memory_space<vmem>>, vector<128x128xbf16>
    %cst_75 = arith.constant dense<0.000000e+00> : vector<1x128xf32>
    %193 = tpu.matmul %191, %192, %cst_75 {dimension_numbers = #tpu.dot_dimension_numbers<[1], [0], [0], [1], [0, 0, 1, 1], [], []>} : vector<1x128xbf16>, vector<128x128xbf16>, vector<1x128xf32> -> vector<1x128xf32>
    %c6 = arith.constant 6 : index
    %c0_76 = arith.constant 0 : index
    %194 = vector.load %arg14[%c6, %c0_76] : memref<8x128xf32, #tpu.memory_space<vmem>>, vector<1x128xf32>
    %195 = arith.addf %193, %194 : vector<1x128xf32>
    %cst_77 = arith.constant 0.000000e+00 : f32
    %196 = vector.broadcast %cst_77 : f32 to vector<1x128xf32>
    %197 = arith.maximumf %195, %196 : vector<1x128xf32>
    %198 = arith.truncf %197 : vector<1x128xf32> to vector<1x128xbf16>
    %c256 = arith.constant 256 : index
    %c0_78 = arith.constant 0 : index
    %199 = vector.load %arg11[%c256, %c0_78] : memref<384x128xbf16, #tpu.memory_space<vmem>>, vector<128x128xbf16>
    %cst_79 = arith.constant dense<0.000000e+00> : vector<1x128xf32>
    %200 = tpu.matmul %198, %199, %cst_79 {dimension_numbers = #tpu.dot_dimension_numbers<[1], [0], [0], [1], [0, 0, 1, 1], [], []>} : vector<1x128xbf16>, vector<128x128xbf16>, vector<1x128xf32> -> vector<1x128xf32>
    %c7 = arith.constant 7 : index
    %c0_80 = arith.constant 0 : index
    %201 = vector.load %arg14[%c7, %c0_80] : memref<8x128xf32, #tpu.memory_space<vmem>>, vector<1x128xf32>
    %202 = arith.addf %200, %201 : vector<1x128xf32>
    %cst_81 = arith.constant 0.000000e+00 : f32
    %203 = vector.broadcast %cst_81 : f32 to vector<1x128xf32>
    %204 = arith.subf %203, %202 : vector<1x128xf32>
    %205 = math.exp %204 : vector<1x128xf32>
    %cst_82 = arith.constant 1.000000e+00 : f32
    %206 = vector.broadcast %cst_82 : f32 to vector<1x128xf32>
    %207 = arith.addf %206, %205 : vector<1x128xf32>
    %cst_83 = arith.constant 1.000000e+00 : f32
    %208 = vector.broadcast %cst_83 : f32 to vector<1x128xf32>
    %209 = arith.divf %208, %207 : vector<1x128xf32>
    %c0_84 = arith.constant 0 : index
    %c0_85 = arith.constant 0 : index
    %c0_86 = arith.constant 0 : index
    %210 = vector.load %arg15[%c0_84, %c0_85, %c0_86] : memref<1x1x128xf32, #tpu.memory_space<vmem>>, vector<1x1x128xf32>
    %211 = vector.shape_cast %210 : vector<1x1x128xf32> to vector<1x128xf32>
    %212 = vector.shape_cast %209 : vector<1x128xf32> to vector<1x1x128xf32>
    tpu.vector_store %arg15[%c0_84, %c0_85, %c0_86], %212 {strides = array<i32>} : memref<1x1x128xf32, #tpu.memory_space<vmem>>, vector<1x1x128xf32>,
    return
  }
  func.func @transform_0(%arg0: i32) -> (i32, i32, i32, i32) {
    %c0_i32 = arith.constant 0 : i32
    %c0_i32_0 = arith.constant 0 : i32
    %c0_i32_1 = arith.constant 0 : i32
    %c0_i32_2 = arith.constant 0 : i32
    return %arg0, %c0_i32, %c0_i32_0, %c0_i32_1 : i32, i32, i32, i32
  }
  func.func @transform_1(%arg0: i32) -> (i32, i32, i32) {
    %c0_i32 = arith.constant 0 : i32
    %c0_i32_0 = arith.constant 0 : i32
    %c0_i32_1 = arith.constant 0 : i32
    return %arg0, %c0_i32, %c0_i32_0 : i32, i32, i32
  }
  func.func @transform_2(%arg0: i32) -> (i32, i32, i32) {
    %c0_i32 = arith.constant 0 : i32
    %c0_i32_0 = arith.constant 0 : i32
    %c0_i32_1 = arith.constant 0 : i32
    return %arg0, %c0_i32, %c0_i32_0 : i32, i32, i32
  }
  func.func @transform_3(%arg0: i32) -> (i32, i32) {
    %c0_i32 = arith.constant 0 : i32
    %c0_i32_0 = arith.constant 0 : i32
    %c0_i32_1 = arith.constant 0 : i32
    return %c0_i32, %c0_i32_0 : i32, i32
  }
  func.func @transform_4(%arg0: i32) -> (i32, i32) {
    %c0_i32 = arith.constant 0 : i32
    %c0_i32_0 = arith.constant 0 : i32
    %c0_i32_1 = arith.constant 0 : i32
    return %c0_i32, %c0_i32_0 : i32, i32
  }
  func.func @transform_5(%arg0: i32) -> (i32, i32) {
    %c0_i32 = arith.constant 0 : i32
    %c0_i32_0 = arith.constant 0 : i32
    %c0_i32_1 = arith.constant 0 : i32
    return %c0_i32, %c0_i32_0 : i32, i32
  }
  func.func @transform_6(%arg0: i32) -> (i32, i32) {
    %c0_i32 = arith.constant 0 : i32
    %c0_i32_0 = arith.constant 0 : i32
    %c0_i32_1 = arith.constant 0 : i32
    return %c0_i32, %c0_i32_0 : i32, i32
  }
  func.func @transform_7(%arg0: i32) -> (i32, i32) {
    %c0_i32 = arith.constant 0 : i32
    %c0_i32_0 = arith.constant 0 : i32
    %c0_i32_1 = arith.constant 0 : i32
    return %c0_i32, %c0_i32_0 : i32, i32
  }
  func.func @transform_8(%arg0: i32) -> (i32, i32) {
    %c0_i32 = arith.constant 0 : i32
    %c0_i32_0 = arith.constant 0 : i32
    %c0_i32_1 = arith.constant 0 : i32
    return %c0_i32, %c0_i32_0 : i32, i32
  }
  func.func @transform_9(%arg0: i32) -> (i32, i32) {
    %c0_i32 = arith.constant 0 : i32
    %c0_i32_0 = arith.constant 0 : i32
    %c0_i32_1 = arith.constant 0 : i32
    return %c0_i32, %c0_i32_0 : i32, i32
  }
  func.func @transform_10(%arg0: i32) -> (i32, i32) {
    %c0_i32 = arith.constant 0 : i32
    %c0_i32_0 = arith.constant 0 : i32
    %c0_i32_1 = arith.constant 0 : i32
    return %c0_i32, %c0_i32_0 : i32, i32
  }
  func.func @transform_11(%arg0: i32) -> (i32, i32) {
    %c0_i32 = arith.constant 0 : i32
    %c0_i32_0 = arith.constant 0 : i32
    %c0_i32_1 = arith.constant 0 : i32
    return %c0_i32, %c0_i32_0 : i32, i32
  }
  func.func @transform_12(%arg0: i32) -> (i32, i32) {
    %c0_i32 = arith.constant 0 : i32
    %c0_i32_0 = arith.constant 0 : i32
    %c0_i32_1 = arith.constant 0 : i32
    return %c0_i32, %c0_i32_0 : i32, i32
  }
  func.func @transform_13(%arg0: i32) -> (i32, i32) {
    %c0_i32 = arith.constant 0 : i32
    %c0_i32_0 = arith.constant 0 : i32
    %c0_i32_1 = arith.constant 0 : i32
    return %c0_i32, %c0_i32_0 : i32, i32
  }
  func.func @transform_14(%arg0: i32) -> (i32, i32, i32) {
    %c0_i32 = arith.constant 0 : i32
    %c0_i32_0 = arith.constant 0 : i32
    %c0_i32_1 = arith.constant 0 : i32
    return %arg0, %c0_i32, %c0_i32_0 : i32, i32, i32
  }
}

</mosaic_0001>

<llo_original>
// kernel: outfit_compatibility_forward.1
$region0: #{outfit_compatibility_forward.1}
  #allocation0 [shape = 'u32[]', space=smem, size = 0x4, offset = 0x4, fixed_abs, tag = 'smem constant byte address 0x4 - core index']
  #allocation1 [shape = 'u32[144,128]{1,0:T(1,128)}', space=vmem, size = 0x12000, scoped, tag = 'internal scratch']
  %s0 = inlined_call_operand.vmem [shape: bf16[2,1,96,512], index: 0, kind: input, shape index: {}]
  %s1 = inlined_call_operand.vmem [shape: bf16[2,6,32], index: 1, kind: input, shape index: {}]
  %s2 = inlined_call_operand.vmem [shape: f32[2,1,8], index: 2, kind: input, shape index: {}]
  %s3 = inlined_call_operand.vmem [shape: bf16[512,128], index: 3, kind: input, shape index: {}]
  %s4 = inlined_call_operand.vmem [shape: bf16[128,128], index: 4, kind: input, shape index: {}]
  %s5 = inlined_call_operand.vmem [shape: bf16[32,128], index: 5, kind: input, shape index: {}]
  %s6 = inlined_call_operand.vmem [shape: f32[8,6], index: 6, kind: input, shape index: {}]
  %s7 = inlined_call_operand.vmem [shape: f32[8,128], index: 7, kind: input, shape index: {}]
  %s8 = inlined_call_operand.vmem [shape: bf16[128,384], index: 8, kind: input, shape index: {}]
  %s9 = inlined_call_operand.vmem [shape: f32[2,384], index: 9, kind: input, shape index: {}]
  %s10 = inlined_call_operand.vmem [shape: bf16[384,128], index: 10, kind: input, shape index: {}]
  %s11 = inlined_call_operand.vmem [shape: bf16[128,256], index: 11, kind: input, shape index: {}]
  %s12 = inlined_call_operand.vmem [shape: bf16[256,128], index: 12, kind: input, shape index: {}]
  %s13 = inlined_call_operand.vmem [shape: f32[8,128], index: 13, kind: input, shape index: {}]
  %s14 = inlined_call_operand.vmem [shape: f32[2,1,128], index: 14, kind: output, shape index: {}]
  %s15 = sld [smem:[#allocation0]]
  $region89: #{outfit_compatibility_forward.1} parent=0
    _
  %s17 = ssub.s32 1, %s15
  %s18 = scalar_select 0, %s17, %s15
  loop: start=0, step=1, limit=4
  $region2: #{outfit_compatibility_forward.1} parent=0 // loop_pre_header
    _
  $region3: #{outfit_compatibility_forward.1} parent=0 // loop_header
    %s20 = sphi 0, %s24
    %p21 = scmp.ge.s32.totalorder %s20, 4
    %s30 = sphi 0, %s32
    %s33 = sphi 0, %s30
    %s34 = sphi 0, %s33
    %s50 = sphi 0, %s34
    %s56 = sphi 0, %s58
    %s59 = sphi 0, %s56
    %s60 = sphi 0, %s59
    %s76 = sphi 0, %s60
    %s82 = sphi 0, %s84
    %s85 = sphi 0, %s82
    %s86 = sphi 0, %s85
    %s102 = sphi 0, %s86
    %s106 = sphi 0, %s106
    %s108 = sphi 0, %s106
    %s109 = sphi 0, %s108
    %s123 = sphi 0, %s109
    %s127 = sphi 0, %s127
    %s129 = sphi 0, %s127
    %s130 = sphi 0, %s129
    %s144 = sphi 0, %s130
    %s148 = sphi 0, %s148
    %s150 = sphi 0, %s148
    %s151 = sphi 0, %s150
    %s165 = sphi 0, %s151
    %s169 = sphi 0, %s169
    %s171 = sphi 0, %s169
    %s172 = sphi 0, %s171
    %s186 = sphi 0, %s172
    %s190 = sphi 0, %s190
    %s192 = sphi 0, %s190
    %s193 = sphi 0, %s192
    %s207 = sphi 0, %s193
    %s211 = sphi 0, %s211
    %s213 = sphi 0, %s211
    %s214 = sphi 0, %s213
    %s228 = sphi 0, %s214
    %s232 = sphi 0, %s232
    %s234 = sphi 0, %s232
    %s235 = sphi 0, %s234
    %s249 = sphi 0, %s235
    %s253 = sphi 0, %s253
    %s255 = sphi 0, %s253
    %s256 = sphi 0, %s255
    %s270 = sphi 0, %s256
    %s274 = sphi 0, %s274
    %s276 = sphi 0, %s274
    %s277 = sphi 0, %s276
    %s291 = sphi 0, %s277
    %s295 = sphi 0, %s295
    %s297 = sphi 0, %s295
    %s298 = sphi 0, %s297
    %s312 = sphi 0, %s298
    %s316 = sphi 0, %s316
    %s318 = sphi 0, %s316
    %s319 = sphi 0, %s318
    %s333 = sphi 0, %s319
    %s339 = sphi 0, %s341
    %s342 = sphi 0, %s339
    %s343 = sphi 0, %s342
    %s359 = sphi 0, %s343
  $region4: #{outfit_compatibility_forward.1} parent=0 // loop_header_branch
    %23 = sbr.rel (%p21) target = $region8
  $region5: #{outfit_compatibility_forward.1} parent=0 // loop_body
    %s25 = ssub.s32 %s20, 1
    %s26 = ssub.s32 %s20, 2
    %s27 = sadd.s32 %s20, 1
    %s28 = ssub.s32 %s20, %s27
    %p29 = scmp.eq.s32.totalorder %s28, 0
    %s31 = sadd.s32 %s30, 1
    %s32 = scalar_select %p29, %s30, %s31
    %p35 = pneg %p29
    %p36 = scmp.eq.s32.totalorder %s20, 1
    %p37 = por %p35, %p36
    %p38 = scmp.ne.s32.totalorder %s30, %s33
    %p39 = scmp.eq.s32.totalorder %s20, 0
    %p40 = por %p38, %p39
    %p41 = scmp.ne.s32.totalorder %s30, %s33
    %p42 = scmp.eq.s32.totalorder %s25, 1
    %p43 = por %p41, %p42
    %p44 = scmp.ne.s32.totalorder %s33, %s34
    %p45 = scmp.eq.s32.totalorder %s25, 0
    %p46 = por %p44, %p45
    %p47 = scmp.ne.s32.totalorder %s33, %s34
    %p48 = scmp.eq.s32.totalorder %s26, 1
    %p49 = por %p47, %p48
    %p51 = scmp.ne.s32.totalorder %s34, %s50
    %p52 = scmp.eq.s32.totalorder %s26, 0
    %p53 = por %p51, %p52
    %s54 = ssub.s32 %s20, %s27
    %p55 = scmp.eq.s32.totalorder %s54, 0
    %s57 = sadd.s32 %s56, 1
    %s58 = scalar_select %p55, %s56, %s57
    %p61 = pneg %p55
    %p62 = scmp.eq.s32.totalorder %s20, 1
    %p63 = por %p61, %p62
    %p64 = scmp.ne.s32.totalorder %s56, %s59
    %p65 = scmp.eq.s32.totalorder %s20, 0
    %p66 = por %p64, %p65
    %p67 = scmp.ne.s32.totalorder %s56, %s59
    %p68 = scmp.eq.s32.totalorder %s25, 1
    %p69 = por %p67, %p68
    %p70 = scmp.ne.s32.totalorder %s59, %s60
    %p71 = scmp.eq.s32.totalorder %s25, 0
    %p72 = por %p70, %p71
    %p73 = scmp.ne.s32.totalorder %s59, %s60
    %p74 = scmp.eq.s32.totalorder %s26, 1
    %p75 = por %p73, %p74
    %p77 = scmp.ne.s32.totalorder %s60, %s76
    %p78 = scmp.eq.s32.totalorder %s26, 0
    %p79 = por %p77, %p78
    %s80 = ssub.s32 %s20, %s27
    %p81 = scmp.eq.s32.totalorder %s80, 0
    %s83 = sadd.s32 %s82, 1
    %s84 = scalar_select %p81, %s82, %s83
    %p87 = pneg %p81
    %p88 = scmp.eq.s32.totalorder %s20, 1
    %p89 = por %p87, %p88
    %p90 = scmp.ne.s32.totalorder %s82, %s85
    %p91 = scmp.eq.s32.totalorder %s20, 0
    %p92 = por %p90, %p91
    %p93 = scmp.ne.s32.totalorder %s82, %s85
    %p94 = scmp.eq.s32.totalorder %s25, 1
    %p95 = por %p93, %p94
    %p96 = scmp.ne.s32.totalorder %s85, %s86
    %p97 = scmp.eq.s32.totalorder %s25, 0
    %p98 = por %p96, %p97
    %p99 = scmp.ne.s32.totalorder %s85, %s86
    %p100 = scmp.eq.s32.totalorder %s26, 1
    %p101 = por %p99, %p100
    %p103 = scmp.ne.s32.totalorder %s86, %s102
    %p104 = scmp.eq.s32.totalorder %s26, 0
    %p105 = por %p103, %p104
    %s107 = sadd.s32 %s106, 1
    %p110 = scmp.eq.s32.totalorder %s20, 1
    %p111 = scmp.ne.s32.totalorder %s106, %s108
    %p112 = scmp.eq.s32.totalorder %s20, 0
    %p113 = por %p111, %p112
    %p114 = scmp.ne.s32.totalorder %s106, %s108
    %p115 = scmp.eq.s32.totalorder %s25, 1
    %p116 = por %p114, %p115
    %p117 = scmp.ne.s32.totalorder %s108, %s109
    %p118 = scmp.eq.s32.totalorder %s25, 0
    %p119 = por %p117, %p118
    %p120 = scmp.ne.s32.totalorder %s108, %s109
    %p121 = scmp.eq.s32.totalorder %s26, 1
    %p122 = por %p120, %p121
    %p124 = scmp.ne.s32.totalorder %s109, %s123
    %p125 = scmp.eq.s32.totalorder %s26, 0
    %p126 = por %p124, %p125
    %s128 = sadd.s32 %s127, 1
    %p131 = scmp.eq.s32.totalorder %s20, 1
    %p132 = scmp.ne.s32.totalorder %s127, %s129
    %p133 = scmp.eq.s32.totalorder %s20, 0
    %p134 = por %p132, %p133
    %p135 = scmp.ne.s32.totalorder %s127, %s129
    %p136 = scmp.eq.s32.totalorder %s25, 1
    %p137 = por %p135, %p136
    %p138 = scmp.ne.s32.totalorder %s129, %s130
    %p139 = scmp.eq.s32.totalorder %s25, 0
    %p140 = por %p138, %p139
    %p141 = scmp.ne.s32.totalorder %s129, %s130
    %p142 = scmp.eq.s32.totalorder %s26, 1
    %p143 = por %p141, %p142
    %p145 = scmp.ne.s32.totalorder %s130, %s144
    %p146 = scmp.eq.s32.totalorder %s26, 0
    %p147 = por %p145, %p146
    %s149 = sadd.s32 %s148, 1
    %p152 = scmp.eq.s32.totalorder %s20, 1
    %p153 = scmp.ne.s32.totalorder %s148, %s150
    %p154 = scmp.eq.s32.totalorder %s20, 0
    %p155 = por %p153, %p154
    %p156 = scmp.ne.s32.totalorder %s148, %s150
    %p157 = scmp.eq.s32.totalorder %s25, 1
    %p158 = por %p156, %p157
    %p159 = scmp.ne.s32.totalorder %s150, %s151
    %p160 = scmp.eq.s32.totalorder %s25, 0
    %p161 = por %p159, %p160
    %p162 = scmp.ne.s32.totalorder %s150, %s151
    %p163 = scmp.eq.s32.totalorder %s26, 1
    %p164 = por %p162, %p163
    %p166 = scmp.ne.s32.totalorder %s151, %s165
    %p167 = scmp.eq.s32.totalorder %s26, 0
    %p168 = por %p166, %p167
    %s170 = sadd.s32 %s169, 1
    %p173 = scmp.eq.s32.totalorder %s20, 1
    %p174 = scmp.ne.s32.totalorder %s169, %s171
    %p175 = scmp.eq.s32.totalorder %s20, 0
    %p176 = por %p174, %p175
    %p177 = scmp.ne.s32.totalorder %s169, %s171
    %p178 = scmp.eq.s32.totalorder %s25, 1
    %p179 = por %p177, %p178
    %p180 = scmp.ne.s32.totalorder %s171, %s172
    %p181 = scmp.eq.s32.totalorder %s25, 0
    %p182 = por %p180, %p181
    %p183 = scmp.ne.s32.totalorder %s171, %s172
    %p184 = scmp.eq.s32.totalorder %s26, 1
    %p185 = por %p183, %p184
    %p187 = scmp.ne.s32.totalorder %s172, %s186
    %p188 = scmp.eq.s32.totalorder %s26, 0
    %p189 = por %p187, %p188
    %s191 = sadd.s32 %s190, 1
    %p194 = scmp.eq.s32.totalorder %s20, 1
    %p195 = scmp.ne.s32.totalorder %s190, %s192
    %p196 = scmp.eq.s32.totalorder %s20, 0
    %p197 = por %p195, %p196
    %p198 = scmp.ne.s32.totalorder %s190, %s192
    %p199 = scmp.eq.s32.totalorder %s25, 1
    %p200 = por %p198, %p199
    %p201 = scmp.ne.s32.totalorder %s192, %s193
    %p202 = scmp.eq.s32.totalorder %s25, 0
    %p203 = por %p201, %p202
    %p204 = scmp.ne.s32.totalorder %s192, %s193
    %p205 = scmp.eq.s32.totalorder %s26, 1
    %p206 = por %p204, %p205
    %p208 = scmp.ne.s32.totalorder %s193, %s207
    %p209 = scmp.eq.s32.totalorder %s26, 0
    %p210 = por %p208, %p209
    %s212 = sadd.s32 %s211, 1
    %p215 = scmp.eq.s32.totalorder %s20, 1
    %p216 = scmp.ne.s32.totalorder %s211, %s213
    %p217 = scmp.eq.s32.totalorder %s20, 0
    %p218 = por %p216, %p217
    %p219 = scmp.ne.s32.totalorder %s211, %s213
    %p220 = scmp.eq.s32.totalorder %s25, 1
    %p221 = por %p219, %p220
    %p222 = scmp.ne.s32.totalorder %s213, %s214
    %p223 = scmp.eq.s32.totalorder %s25, 0
    %p224 = por %p222, %p223
    %p225 = scmp.ne.s32.totalorder %s213, %s214
    %p226 = scmp.eq.s32.totalorder %s26, 1
    %p227 = por %p225, %p226
    %p229 = scmp.ne.s32.totalorder %s214, %s228
    %p230 = scmp.eq.s32.totalorder %s26, 0
    %p231 = por %p229, %p230
    %s233 = sadd.s32 %s232, 1
    %p236 = scmp.eq.s32.totalorder %s20, 1
    %p237 = scmp.ne.s32.totalorder %s232, %s234
    %p238 = scmp.eq.s32.totalorder %s20, 0
    %p239 = por %p237, %p238
    %p240 = scmp.ne.s32.totalorder %s232, %s234
    %p241 = scmp.eq.s32.totalorder %s25, 1
    %p242 = por %p240, %p241
    %p243 = scmp.ne.s32.totalorder %s234, %s235
    %p244 = scmp.eq.s32.totalorder %s25, 0
    %p245 = por %p243, %p244
    %p246 = scmp.ne.s32.totalorder %s234, %s235
    %p247 = scmp.eq.s32.totalorder %s26, 1
    %p248 = por %p246, %p247
    %p250 = scmp.ne.s32.totalorder %s235, %s249
    %p251 = scmp.eq.s32.totalorder %s26, 0
    %p252 = por %p250, %p251
    %s254 = sadd.s32 %s253, 1
    %p257 = scmp.eq.s32.totalorder %s20, 1
    %p258 = scmp.ne.s32.totalorder %s253, %s255
    %p259 = scmp.eq.s32.totalorder %s20, 0
    %p260 = por %p258, %p259
    %p261 = scmp.ne.s32.totalorder %s253, %s255
    %p262 = scmp.eq.s32.totalorder %s25, 1
    %p263 = por %p261, %p262
    %p264 = scmp.ne.s32.totalorder %s255, %s256
    %p265 = scmp.eq.s32.totalorder %s25, 0
    %p266 = por %p264, %p265
    %p267 = scmp.ne.s32.totalorder %s255, %s256
    %p268 = scmp.eq.s32.totalorder %s26, 1
    %p269 = por %p267, %p268
    %p271 = scmp.ne.s32.totalorder %s256, %s270
    %p272 = scmp.eq.s32.totalorder %s26, 0
    %p273 = por %p271, %p272
    %s275 = sadd.s32 %s274, 1
    %p278 = scmp.eq.s32.totalorder %s20, 1
    %p279 = scmp.ne.s32.totalorder %s274, %s276
    %p280 = scmp.eq.s32.totalorder %s20, 0
    %p281 = por %p279, %p280
    %p282 = scmp.ne.s32.totalorder %s274, %s276
    %p283 = scmp.eq.s32.totalorder %s25, 1
    %p284 = por %p282, %p283
    %p285 = scmp.ne.s32.totalorder %s276, %s277
    %p286 = scmp.eq.s32.totalorder %s25, 0
    %p287 = por %p285, %p286
    %p288 = scmp.ne.s32.totalorder %s276, %s277
    %p289 = scmp.eq.s32.totalorder %s26, 1
    %p290 = por %p288, %p289
    %p292 = scmp.ne.s32.totalorder %s277, %s291
    %p293 = scmp.eq.s32.totalorder %s26, 0
    %p294 = por %p292, %p293
    %s296 = sadd.s32 %s295, 1
    %p299 = scmp.eq.s32.totalorder %s20, 1
    %p300 = scmp.ne.s32.totalorder %s295, %s297
    %p301 = scmp.eq.s32.totalorder %s20, 0
    %p302 = por %p300, %p301
    %p303 = scmp.ne.s32.totalorder %s295, %s297
    %p304 = scmp.eq.s32.totalorder %s25, 1
    %p305 = por %p303, %p304
    %p306 = scmp.ne.s32.totalorder %s297, %s298
    %p307 = scmp.eq.s32.totalorder %s25, 0
    %p308 = por %p306, %p307
    %p309 = scmp.ne.s32.totalorder %s297, %s298
    %p310 = scmp.eq.s32.totalorder %s26, 1
    %p311 = por %p309, %p310
    %p313 = scmp.ne.s32.totalorder %s298, %s312
    %p314 = scmp.eq.s32.totalorder %s26, 0
    %p315 = por %p313, %p314
    %s317 = sadd.s32 %s316, 1
    %p320 = scmp.eq.s32.totalorder %s20, 1
    %p321 = scmp.ne.s32.totalorder %s316, %s318
    %p322 = scmp.eq.s32.totalorder %s20, 0
    %p323 = por %p321, %p322
    %p324 = scmp.ne.s32.totalorder %s316, %s318
    %p325 = scmp.eq.s32.totalorder %s25, 1
    %p326 = por %p324, %p325
    %p327 = scmp.ne.s32.totalorder %s318, %s319
    %p328 = scmp.eq.s32.totalorder %s25, 0
    %p329 = por %p327, %p328
    %p330 = scmp.ne.s32.totalorder %s318, %s319
    %p331 = scmp.eq.s32.totalorder %s26, 1
    %p332 = por %p330, %p331
    %p334 = scmp.ne.s32.totalorder %s319, %s333
    %p335 = scmp.eq.s32.totalorder %s26, 0
    %p336 = por %p334, %p335
    %s337 = ssub.s32 %s20, %s27
    %p338 = scmp.eq.s32.totalorder %s337, 0
    %s340 = sadd.s32 %s339, 1
    %s341 = scalar_select %p338, %s339, %s340
    %p344 = pneg %p338
    %p345 = scmp.eq.s32.totalorder %s20, 1
    %p346 = por %p344, %p345
    %p347 = scmp.ne.s32.totalorder %s339, %s342
    %p348 = scmp.eq.s32.totalorder %s20, 0
    %p349 = por %p347, %p348
    %p350 = scmp.ne.s32.totalorder %s339, %s342
    %p351 = scmp.eq.s32.totalorder %s25, 1
    %p352 = por %p350, %p351
    %p353 = scmp.ne.s32.totalorder %s342, %s343
    %p354 = scmp.eq.s32.totalorder %s25, 0
    %p355 = por %p353, %p354
    %p356 = scmp.ne.s32.totalorder %s342, %s343
    %p357 = scmp.eq.s32.totalorder %s26, 1
    %p358 = por %p356, %p357
    %p360 = scmp.ne.s32.totalorder %s343, %s359
    %p361 = scmp.eq.s32.totalorder %s26, 0
    %p362 = por %p360, %p361
    %p363 = scmp.le.s32.totalorder 1, %s20
    %p364 = scmp.lt.s32.totalorder %s20, 3
    %p365 = pnand %p363, %p364
    %p366 = pneg %p365
    // Predicated region
    $region9: #{outfit_compatibility_forward.1} parent=5 // pred_check
      _
    $region10: #{outfit_compatibility_forward.1} parent=5 // pred_check_branch
      %368 = sbr.rel (%p365) target = $region12
    $region11: #{outfit_compatibility_forward.1} parent=5 // pred_region
      %s369 = ssub.s32 %s20, 1
      // Predicated region
      $region13: #{outfit_compatibility_forward.1} parent=11 // pred_check
        %p370 = pneg %p119
      $region14: #{outfit_compatibility_forward.1} parent=11 // pred_check_branch
        %372 = sbr.rel (%p370) target = $region16
      $region15: #{outfit_compatibility_forward.1} parent=11 // pred_region
        _
      $region16: #{outfit_compatibility_forward.1} parent=11 // pred_fallthru
        _
      // Predicated region
      $region17: #{outfit_compatibility_forward.1} parent=11 // pred_check
        %p373 = pneg %p140
      $region18: #{outfit_compatibility_forward.1} parent=11 // pred_check_branch
        %375 = sbr.rel (%p373) target = $region20
      $region19: #{outfit_compatibility_forward.1} parent=11 // pred_region
        _
      $region20: #{outfit_compatibility_forward.1} parent=11 // pred_fallthru
        _
      // Predicated region
      $region21: #{outfit_compatibility_forward.1} parent=11 // pred_check
        %p376 = pneg %p161
      $region22: #{outfit_compatibility_forward.1} parent=11 // pred_check_branch
        %378 = sbr.rel (%p376) target = $region24
      $region23: #{outfit_compatibility_forward.1} parent=11 // pred_region
        _
      $region24: #{outfit_compatibility_forward.1} parent=11 // pred_fallthru
        _
      // Predicated region
      $region25: #{outfit_compatibility_forward.1} parent=11 // pred_check
        %p379 = pneg %p182
      $region26: #{outfit_compatibility_forward.1} parent=11 // pred_check_branch
        %381 = sbr.rel (%p379) target = $region28
      $region27: #{outfit_compatibility_forward.1} parent=11 // pred_region
        _
      $region28: #{outfit_compatibility_forward.1} parent=11 // pred_fallthru
        _
      // Predicated region
      $region29: #{outfit_compatibility_forward.1} parent=11 // pred_check
        %p382 = pneg %p203
      $region30: #{outfit_compatibility_forward.1} parent=11 // pred_check_branch
        %384 = sbr.rel (%p382) target = $region32
      $region31: #{outfit_compatibility_forward.1} parent=11 // pred_region
        _
      $region32: #{outfit_compatibility_forward.1} parent=11 // pred_fallthru
        _
      // Predicated region
      $region33: #{outfit_compatibility_forward.1} parent=11 // pred_check
        %p385 = pneg %p224
      $region34: #{outfit_compatibility_forward.1} parent=11 // pred_check_branch
        %387 = sbr.rel (%p385) target = $region36
      $region35: #{outfit_compatibility_forward.1} parent=11 // pred_region
        _
      $region36: #{outfit_compatibility_forward.1} parent=11 // pred_fallthru
        _
      // Predicated region
      $region37: #{outfit_compatibility_forward.1} parent=11 // pred_check
        %p388 = pneg %p245
      $region38: #{outfit_compatibility_forward.1} parent=11 // pred_check_branch
        %390 = sbr.rel (%p388) target = $region40
      $region39: #{outfit_compatibility_forward.1} parent=11 // pred_region
        _
      $region40: #{outfit_compatibility_forward.1} parent=11 // pred_fallthru
        _
      // Predicated region
      $region41: #{outfit_compatibility_forward.1} parent=11 // pred_check
        %p391 = pneg %p266
      $region42: #{outfit_compatibility_forward.1} parent=11 // pred_check_branch
        %393 = sbr.rel (%p391) target = $region44
      $region43: #{outfit_compatibility_forward.1} parent=11 // pred_region
        _
      $region44: #{outfit_compatibility_forward.1} parent=11 // pred_fallthru
        _
      // Predicated region
      $region45: #{outfit_compatibility_forward.1} parent=11 // pred_check
        %p394 = pneg %p287
      $region46: #{outfit_compatibility_forward.1} parent=11 // pred_check_branch
        %396 = sbr.rel (%p394) target = $region48
      $region47: #{outfit_compatibility_forward.1} parent=11 // pred_region
        _
      $region48: #{outfit_compatibility_forward.1} parent=11 // pred_fallthru
        _
      // Predicated region
      $region49: #{outfit_compatibility_forward.1} parent=11 // pred_check
        %p397 = pneg %p308
      $region50: #{outfit_compatibility_forward.1} parent=11 // pred_check_branch
        %399 = sbr.rel (%p397) target = $region52
      $region51: #{outfit_compatibility_forward.1} parent=11 // pred_region
        _
      $region52: #{outfit_compatibility_forward.1} parent=11 // pred_fallthru
        _
      // Predicated region
      $region53: #{outfit_compatibility_forward.1} parent=11 // pred_check
        %p400 = pneg %p329
      $region54: #{outfit_compatibility_forward.1} parent=11 // pred_check_branch
        %402 = sbr.rel (%p400) target = $region56
      $region55: #{outfit_compatibility_forward.1} parent=11 // pred_region
        _
      $region56: #{outfit_compatibility_forward.1} parent=11 // pred_fallthru
        _
    $region12: #{outfit_compatibility_forward.1} parent=5 // pred_fallthru
      _
    %p403 = scmp.lt.s32.totalorder %s20, 2
    // Predicated region
    $region57: #{outfit_compatibility_forward.1} parent=5 // pred_check
      %p404 = pneg %p403
    $region58: #{outfit_compatibility_forward.1} parent=5 // pred_check_branch
      %406 = sbr.rel (%p404) target = $region60
    $region59: #{outfit_compatibility_forward.1} parent=5 // pred_region
      // Predicated region
      $region61: #{outfit_compatibility_forward.1} parent=59 // pred_check
        %p407 = pneg %p40
      $region62: #{outfit_compatibility_forward.1} parent=59 // pred_check_branch
        %409 = sbr.rel (%p407) target = $region64
      $region63: #{outfit_compatibility_forward.1} parent=59 // pred_region
        %p410 = scmp.lt.s32.totalorder %s20, 1
        %s411 = scalar_select %p410, %s20, 1
        %s412 = smul.addr %s411, 48
        %s413 = smul.addr %s412, 4
        %s414 = scalar_lea.vmem %s0, %s413
      $region64: #{outfit_compatibility_forward.1} parent=59 // pred_fallthru
        _
      // Predicated region
      $region65: #{outfit_compatibility_forward.1} parent=59 // pred_check
        %p415 = pneg %p66
      $region66: #{outfit_compatibility_forward.1} parent=59 // pred_check_branch
        %417 = sbr.rel (%p415) target = $region68
      $region67: #{outfit_compatibility_forward.1} parent=59 // pred_region
        %p418 = scmp.lt.s32.totalorder %s20, 1
        %s419 = scalar_select %p418, %s20, 1
        %s420 = smul.addr %s419, 4
        %s421 = scalar_lea.vmem %s1, %s420
      $region68: #{outfit_compatibility_forward.1} parent=59 // pred_fallthru
        _
      // Predicated region
      $region69: #{outfit_compatibility_forward.1} parent=59 // pred_check
        %p422 = pneg %p92
      $region70: #{outfit_compatibility_forward.1} parent=59 // pred_check_branch
        %424 = sbr.rel (%p422) target = $region72
      $region71: #{outfit_compatibility_forward.1} parent=59 // pred_region
        %p425 = scmp.lt.s32.totalorder %s20, 1
        %s426 = scalar_select %p425, %s20, 1
        %s427 = scalar_lea.vmem %s2, %s426
      $region72: #{outfit_compatibility_forward.1} parent=59 // pred_fallthru
        _
    $region60: #{outfit_compatibility_forward.1} parent=5 // pred_fallthru
      _
    %p428 = scmp.le.s32.totalorder 1, %s20
    %p429 = scmp.lt.s32.totalorder %s20, 3
    %p430 = pnand %p428, %p429
    %p431 = pneg %p430
    // Predicated region
    $region73: #{outfit_compatibility_forward.1} parent=5 // pred_check
      _
    $region74: #{outfit_compatibility_forward.1} parent=5 // pred_check_branch
      %433 = sbr.rel (%p430) target = $region76
    $region75: #{outfit_compatibility_forward.1} parent=5 // pred_region
      %s434 = ssub.s32 %s20, 1
      %p435 = scmp.lt.s32.totalorder %s25, 1
      %s436 = scalar_select %p435, %s25, 1
      %s437 = smul.addr %s436, 48
      %s438 = smul.addr %s437, 4
      %s439 = scalar_lea.vmem %s0, %s438
      %p440 = pneg %p46
      %p441 = pneg %p43
      %p442 = scmp.lt.s32.totalorder %s25, 1
      %s443 = scalar_select %p442, %s25, 1
      %s444 = smul.addr %s443, 4
      %s445 = scalar_lea.vmem %s1, %s444
      %p446 = pneg %p72
      %p447 = pneg %p69
      %p448 = scmp.lt.s32.totalorder %s25, 1
      %s449 = scalar_select %p448, %s25, 1
      %s450 = scalar_lea.vmem %s2, %s449
      %p451 = pneg %p98
      %p452 = pneg %p95
      %p453 = pneg %p119
      %p454 = pneg %p116
      %p455 = pneg %p140
      %p456 = pneg %p137
      %p457 = pneg %p161
      %p458 = pneg %p158
      %p459 = pneg %p182
      %p460 = pneg %p179
      %p461 = pneg %p203
      %p462 = pneg %p200
      %p463 = pneg %p224
      %p464 = pneg %p221
      %p465 = pneg %p245
      %p466 = pneg %p242
      %p467 = pneg %p266
      %p468 = pneg %p263
      %p469 = pneg %p287
      %p470 = pneg %p284
      %p471 = pneg %p308
      %p472 = pneg %p305
      %p473 = pneg %p329
      %p474 = pneg %p326
      %p475 = pneg %p355
      %p476 = pneg %p352
      %p477 = scmp.lt.s32.totalorder %s25, 1
      %s478 = scalar_select %p477, %s25, 1
      %s479 = scalar_lea.vmem %s14, %s478
      %p480 = scmp.lt.s32.totalorder %s25, 1
      %s481 = scalar_select %p480, %s25, 1
      %s482 = smul.addr %s481, 48
      %s483 = smul.addr %s482, 4
      %s484 = scalar_lea.vmem %s0, %s483
      %p485 = scmp.lt.s32.totalorder %s25, 1
      %s486 = scalar_select %p485, %s25, 1
      %s487 = smul.addr %s486, 4
      %s488 = scalar_lea.vmem %s1, %s487
      %p489 = scmp.lt.s32.totalorder %s25, 1
      %s490 = scalar_select %p489, %s25, 1
      %s491 = scalar_lea.vmem %s2, %s490
      %p492 = scmp.lt.s32.totalorder %s25, 1
      %s493 = scalar_select %p492, %s25, 1
      %s494 = scalar_lea.vmem %s14, %s493
      %v496 = vld [vmem:[%s484] sm:$0xff]
      %v497 = vld [vmem:[%s484 + $0x8] sm:$0xff]
      %v498 = vld [vmem:[%s484 + $0x10] sm:$0xff]
      %v499 = vld [vmem:[%s484 + $0x18] sm:$0xff]
      %v500 = vld [vmem:[%s484 + $0x20] sm:$0xff]
      %v501 = vld [vmem:[%s484 + $0x28] sm:$0xff]
      %v502 = vld [vmem:[%s484 + $0x30] sm:$0xff]
      %v503 = vld [vmem:[%s484 + $0x38] sm:$0xff]
      %v504 = vld [vmem:[%s484 + $0x40] sm:$0xff]
      %v505 = vld [vmem:[%s484 + $0x48] sm:$0xff]
      %v506 = vld [vmem:[%s484 + $0x50] sm:$0xff]
      %v507 = vld [vmem:[%s484 + $0x58] sm:$0xff]
      %v508 = vld [vmem:[%s484 + $0x60] sm:$0xff]
      %v509 = vld [vmem:[%s484 + $0x68] sm:$0xff]
      %v510 = vld [vmem:[%s484 + $0x70] sm:$0xff]
      %v511 = vld [vmem:[%s484 + $0x78] sm:$0xff]
      %v512 = vld [vmem:[%s484 + $0x80] sm:$0xff]
      %v513 = vld [vmem:[%s484 + $0x88] sm:$0xff]
      %v514 = vld [vmem:[%s484 + $0x90] sm:$0xff]
      %v515 = vld [vmem:[%s484 + $0x98] sm:$0xff]
      %v516 = vld [vmem:[%s484 + $0xa0] sm:$0xff]
      %v517 = vld [vmem:[%s484 + $0xa8] sm:$0xff]
      %v518 = vld [vmem:[%s484 + $0xb0] sm:$0xff]
      %v519 = vld [vmem:[%s484 + $0xb8] sm:$0xff]
      %v520 = vld [vmem:[%s3] sm:$0xf]
      %v521 = vld [vmem:[%s3 + $0x4] sm:$0xf]
      %v522 = vld [vmem:[%s3 + $0x8] sm:$0xf]
      %v523 = vld [vmem:[%s3 + $0xc] sm:$0xf]
      %v524 = vld [vmem:[%s3 + $0x10] sm:$0xf]
      %v525 = vld [vmem:[%s3 + $0x14] sm:$0xf]
      %v526 = vld [vmem:[%s3 + $0x18] sm:$0xf]
      %v527 = vld [vmem:[%s3 + $0x1c] sm:$0xf]
      %v528 = vld [vmem:[%s3 + $0x20] sm:$0xf]
      %v529 = vld [vmem:[%s3 + $0x24] sm:$0xf]
      %v530 = vld [vmem:[%s3 + $0x28] sm:$0xf]
      %v531 = vld [vmem:[%s3 + $0x2c] sm:$0xf]
      %v532 = vld [vmem:[%s3 + $0x30] sm:$0xf]
      %v533 = vld [vmem:[%s3 + $0x34] sm:$0xf]
      %v534 = vld [vmem:[%s3 + $0x38] sm:$0xf]
      %v535 = vld [vmem:[%s3 + $0x3c] sm:$0xf]
      %v536 = vld [vmem:[%s3 + $0x40] sm:$0xf]
      %v537 = vld [vmem:[%s3 + $0x44] sm:$0xf]
      %v538 = vld [vmem:[%s3 + $0x48] sm:$0xf]
      %v539 = vld [vmem:[%s3 + $0x4c] sm:$0xf]
      %v540 = vld [vmem:[%s3 + $0x50] sm:$0xf]
      %v541 = vld [vmem:[%s3 + $0x54] sm:$0xf]
      %v542 = vld [vmem:[%s3 + $0x58] sm:$0xf]
      %v543 = vld [vmem:[%s3 + $0x5c] sm:$0xf]
      %v544 = vld [vmem:[%s3 + $0x60] sm:$0xf]
      %v545 = vld [vmem:[%s3 + $0x64] sm:$0xf]
      %v546 = vld [vmem:[%s3 + $0x68] sm:$0xf]
      %v547 = vld [vmem:[%s3 + $0x6c] sm:$0xf]
      %v548 = vld [vmem:[%s3 + $0x70] sm:$0xf]
      %v549 = vld [vmem:[%s3 + $0x74] sm:$0xf]
      %v550 = vld [vmem:[%s3 + $0x78] sm:$0xf]
      %v551 = vld [vmem:[%s3 + $0x7c] sm:$0xf]
      %v552 = vld [vmem:[%s3 + $0x80] sm:$0xf]
      %v553 = vld [vmem:[%s3 + $0x84] sm:$0xf]
      %v554 = vld [vmem:[%s3 + $0x88] sm:$0xf]
      %v555 = vld [vmem:[%s3 + $0x8c] sm:$0xf]
      %v556 = vld [vmem:[%s3 + $0x90] sm:$0xf]
      %v557 = vld [vmem:[%s3 + $0x94] sm:$0xf]
      %v558 = vld [vmem:[%s3 + $0x98] sm:$0xf]
      %v559 = vld [vmem:[%s3 + $0x9c] sm:$0xf]
      %v560 = vld [vmem:[%s3 + $0xa0] sm:$0xf]
      %v561 = vld [vmem:[%s3 + $0xa4] sm:$0xf]
      %v562 = vld [vmem:[%s3 + $0xa8] sm:$0xf]
      %v563 = vld [vmem:[%s3 + $0xac] sm:$0xf]
      %v564 = vld [vmem:[%s3 + $0xb0] sm:$0xf]
      %v565 = vld [vmem:[%s3 + $0xb4] sm:$0xf]
      %v566 = vld [vmem:[%s3 + $0xb8] sm:$0xf]
      %v567 = vld [vmem:[%s3 + $0xbc] sm:$0xf]
      %v568 = vld [vmem:[%s3 + $0xc0] sm:$0xf]
      %v569 = vld [vmem:[%s3 + $0xc4] sm:$0xf]
      %v570 = vld [vmem:[%s3 + $0xc8] sm:$0xf]
      %v571 = vld [vmem:[%s3 + $0xcc] sm:$0xf]
      %v572 = vld [vmem:[%s3 + $0xd0] sm:$0xf]
      %v573 = vld [vmem:[%s3 + $0xd4] sm:$0xf]
      %v574 = vld [vmem:[%s3 + $0xd8] sm:$0xf]
      %v575 = vld [vmem:[%s3 + $0xdc] sm:$0xf]
      %v576 = vld [vmem:[%s3 + $0xe0] sm:$0xf]
      %v577 = vld [vmem:[%s3 + $0xe4] sm:$0xf]
      %v578 = vld [vmem:[%s3 + $0xe8] sm:$0xf]
      %v579 = vld [vmem:[%s3 + $0xec] sm:$0xf]
      %v580 = vld [vmem:[%s3 + $0xf0] sm:$0xf]
      %v581 = vld [vmem:[%s3 + $0xf4] sm:$0xf]
      %v582 = vld [vmem:[%s3 + $0xf8] sm:$0xf]
      %v583 = vld [vmem:[%s3 + $0xfc] sm:$0xf]
      %v608 = vunpack.c.l.b16 %v496
      %v609 = vunpack.c.h.b16 %v496
      %v610 = vunpack.c.l.b16 %v497
      %v611 = vunpack.c.h.b16 %v497
      %v612 = vunpack.c.l.b16 %v498
      %v613 = vunpack.c.h.b16 %v498
      %v614 = vunpack.c.l.b16 %v499
      %v615 = vunpack.c.h.b16 %v499
      %v616 = vunpack.c.l.b16 %v500
      %v617 = vunpack.c.h.b16 %v500
      %v618 = vunpack.c.l.b16 %v501
      %v619 = vunpack.c.h.b16 %v501
      %v620 = vunpack.c.l.b16 %v502
      %v621 = vunpack.c.h.b16 %v502
      %v622 = vunpack.c.l.b16 %v503
      %v623 = vunpack.c.h.b16 %v503
      %v624 = vunpack.c.l.b16 %v504
      %v625 = vunpack.c.h.b16 %v504
      %v626 = vunpack.c.l.b16 %v505
      %v627 = vunpack.c.h.b16 %v505
      %v628 = vunpack.c.l.b16 %v506
      %v629 = vunpack.c.h.b16 %v506
      %v630 = vunpack.c.l.b16 %v507
      %v631 = vunpack.c.h.b16 %v507
      %v632 = vunpack.c.l.b16 %v508
      %v633 = vunpack.c.h.b16 %v508
      %v634 = vunpack.c.l.b16 %v509
      %v635 = vunpack.c.h.b16 %v509
      %v636 = vunpack.c.l.b16 %v510
      %v637 = vunpack.c.h.b16 %v510
      %v638 = vunpack.c.l.b16 %v511
      %v639 = vunpack.c.h.b16 %v511
      %v640 = vunpack.c.l.b16 %v512
      %v641 = vunpack.c.h.b16 %v512
      %v642 = vunpack.c.l.b16 %v513
      %v643 = vunpack.c.h.b16 %v513
      %v644 = vunpack.c.l.b16 %v514
      %v645 = vunpack.c.h.b16 %v514
      %v646 = vunpack.c.l.b16 %v515
      %v647 = vunpack.c.h.b16 %v515
      %v648 = vunpack.c.l.b16 %v516
      %v649 = vunpack.c.h.b16 %v516
      %v650 = vunpack.c.l.b16 %v517
      %v651 = vunpack.c.h.b16 %v517
      %v652 = vunpack.c.l.b16 %v518
      %v653 = vunpack.c.h.b16 %v518
      %v654 = vunpack.c.l.b16 %v519
      %v655 = vunpack.c.h.b16 %v519
      %v656 = vpack.c.b16 %v612, %v608
      %v657 = vpack.c.b16 %v613, %v609
      %v658 = vpack.c.b16 %v614, %v610
      %v659 = vpack.c.b16 %v615, %v611
      %v660 = vpack.c.b16 %v620, %v616
      %v661 = vpack.c.b16 %v621, %v617
      %v662 = vpack.c.b16 %v622, %v618
      %v663 = vpack.c.b16 %v623, %v619
      %v664 = vpack.c.b16 %v628, %v624
      %v665 = vpack.c.b16 %v629, %v625
      %v666 = vpack.c.b16 %v630, %v626
      %v667 = vpack.c.b16 %v631, %v627
      %v668 = vpack.c.b16 %v636, %v632
      %v669 = vpack.c.b16 %v637, %v633
      %v670 = vpack.c.b16 %v638, %v634
      %v671 = vpack.c.b16 %v639, %v635
      %v672 = vpack.c.b16 %v644, %v640
      %v673 = vpack.c.b16 %v645, %v641
      %v674 = vpack.c.b16 %v646, %v642
      %v675 = vpack.c.b16 %v647, %v643
      %v676 = vpack.c.b16 %v652, %v648
      %v677 = vpack.c.b16 %v653, %v649
      %v678 = vpack.c.b16 %v654, %v650
      %v679 = vpack.c.b16 %v655, %v651
      %v768 = vunpack.c.l.b16 %v520
      %v769 = vunpack.c.l.b16 %v521
      %v770 = vunpack.c.l.b16 %v522
      %v771 = vunpack.c.l.b16 %v523
      %v772 = vunpack.c.l.b16 %v524
      %v773 = vunpack.c.l.b16 %v525
      %v774 = vunpack.c.l.b16 %v526
      %v775 = vunpack.c.l.b16 %v527
      %v776 = vunpack.c.l.b16 %v528
      %v777 = vunpack.c.l.b16 %v529
      %v778 = vunpack.c.l.b16 %v530
      %v779 = vunpack.c.l.b16 %v531
      %v780 = vunpack.c.l.b16 %v532
      %v781 = vunpack.c.l.b16 %v533
      %v782 = vunpack.c.l.b16 %v534
      %v783 = vunpack.c.l.b16 %v535
      %v784 = vunpack.c.l.b16 %v536
      %v785 = vunpack.c.l.b16 %v537
      %v786 = vunpack.c.l.b16 %v538
      %v787 = vunpack.c.l.b16 %v539
      %v788 = vunpack.c.l.b16 %v540
      %v789 = vunpack.c.l.b16 %v541
      %v790 = vunpack.c.l.b16 %v542
      %v791 = vunpack.c.l.b16 %v543
      %v792 = vunpack.c.l.b16 %v544
      %v793 = vunpack.c.l.b16 %v545
      %v794 = vunpack.c.l.b16 %v546
      %v795 = vunpack.c.l.b16 %v547
      %v796 = vunpack.c.l.b16 %v548
      %v797 = vunpack.c.l.b16 %v549
      %v798 = vunpack.c.l.b16 %v550
      %v799 = vunpack.c.l.b16 %v551
      %v800 = vunpack.c.l.b16 %v552
      %v801 = vunpack.c.l.b16 %v553
      %v802 = vunpack.c.l.b16 %v554
      %v803 = vunpack.c.l.b16 %v555
      %v804 = vunpack.c.l.b16 %v556
      %v805 = vunpack.c.l.b16 %v557
      %v806 = vunpack.c.l.b16 %v558
      %v807 = vunpack.c.l.b16 %v559
      %v808 = vunpack.c.l.b16 %v560
      %v809 = vunpack.c.l.b16 %v561
      %v810 = vunpack.c.l.b16 %v562
      %v811 = vunpack.c.l.b16 %v563
      %v812 = vunpack.c.l.b16 %v564
      %v813 = vunpack.c.l.b16 %v565
      %v814 = vunpack.c.l.b16 %v566
      %v815 = vunpack.c.l.b16 %v567
      %v816 = vunpack.c.l.b16 %v568
      %v817 = vunpack.c.l.b16 %v569
      %v818 = vunpack.c.l.b16 %v570
      %v819 = vunpack.c.l.b16 %v571
      %v820 = vunpack.c.l.b16 %v572
      %v821 = vunpack.c.l.b16 %v573
      %v822 = vunpack.c.l.b16 %v574
      %v823 = vunpack.c.l.b16 %v575
      %v824 = vunpack.c.l.b16 %v576
      %v825 = vunpack.c.l.b16 %v577
      %v826 = vunpack.c.l.b16 %v578
      %v827 = vunpack.c.l.b16 %v579
      %v828 = vunpack.c.l.b16 %v580
      %v829 = vunpack.c.l.b16 %v581
      %v830 = vunpack.c.l.b16 %v582
      %v831 = vunpack.c.l.b16 %v583
      %v832 = vpack.c.b16 %v769, %v768
      %v833 = vpack.c.b16 %v771, %v770
      %v834 = vpack.c.b16 %v773, %v772
      %v835 = vpack.c.b16 %v775, %v774
      %v836 = vpack.c.b16 %v777, %v776
      %v837 = vpack.c.b16 %v779, %v778
      %v838 = vpack.c.b16 %v781, %v780
      %v839 = vpack.c.b16 %v783, %v782
      %v840 = vpack.c.b16 %v785, %v784
      %v841 = vpack.c.b16 %v787, %v786
      %v842 = vpack.c.b16 %v789, %v788
      %v843 = vpack.c.b16 %v791, %v790
      %v844 = vpack.c.b16 %v793, %v792
      %v845 = vpack.c.b16 %v795, %v794
      %v846 = vpack.c.b16 %v797, %v796
      %v847 = vpack.c.b16 %v799, %v798
      %v848 = vpack.c.b16 %v801, %v800
      %v849 = vpack.c.b16 %v803, %v802
      %v850 = vpack.c.b16 %v805, %v804
      %v851 = vpack.c.b16 %v807, %v806
      %v852 = vpack.c.b16 %v809, %v808
      %v853 = vpack.c.b16 %v811, %v810
      %v854 = vpack.c.b16 %v813, %v812
      %v855 = vpack.c.b16 %v815, %v814
      %v856 = vpack.c.b16 %v817, %v816
      %v857 = vpack.c.b16 %v819, %v818
      %v858 = vpack.c.b16 %v821, %v820
      %v859 = vpack.c.b16 %v823, %v822
      %v860 = vpack.c.b16 %v825, %v824
      %v861 = vpack.c.b16 %v827, %v826
      %v862 = vpack.c.b16 %v829, %v828
      %v863 = vpack.c.b16 %v831, %v830
      %896 = vmatprep.subr.bf16.mxu0 0
      %897 = vmatpush1.bf16.msra.mxu0 %v832
      %898 = vmatprep.subr.bf16.mxu0 0
      %899 = vmatpush1.bf16.msra.mxu0 %v833
      %900 = vmatprep.subr.bf16.mxu0 0
      %901 = vmatpush1.bf16.msra.mxu0 %v834
      %902 = vmatprep.subr.bf16.mxu0 0
      %903 = vmatpush1.bf16.msra.mxu0 %v835
      %904 = vmatprep.subr.bf16.mxu0 0
      %905 = vmatpush1.bf16.msra.mxu0 %v836
      %906 = vmatprep.subr.bf16.mxu0 0
      %907 = vmatpush1.bf16.msra.mxu0 %v837
      %908 = vmatprep.subr.bf16.mxu0 0
      %909 = vmatpush1.bf16.msra.mxu0 %v838
      %910 = vmatprep.subr.bf16.mxu0 0
      %911 = vmatpush1.bf16.msra.mxu0 %v839
      %912 = vmatprep.subr.bf16.mxu0 0
      %913 = vmatpush1.bf16.msra.mxu0 %v840
      %914 = vmatprep.subr.bf16.mxu0 0
      %915 = vmatpush1.bf16.msra.mxu0 %v841
      %916 = vmatprep.subr.bf16.mxu0 0
      %917 = vmatpush1.bf16.msra.mxu0 %v842
      %918 = vmatprep.subr.bf16.mxu0 0
      %919 = vmatpush1.bf16.msra.mxu0 %v843
      %920 = vmatprep.subr.bf16.mxu0 0
      %921 = vmatpush1.bf16.msra.mxu0 %v844
      %922 = vmatprep.subr.bf16.mxu0 0
      %923 = vmatpush1.bf16.msra.mxu0 %v845
      %924 = vmatprep.subr.bf16.mxu0 0
      %925 = vmatpush1.bf16.msra.mxu0 %v846
      %926 = vmatprep.subr.bf16.mxu0 0
      %927 = vmatpush1.bf16.msra.mxu0 %v847
      %928 = vmatprep.mubr.bf16.mxu0 %v657
      %929 = vmatmul.mubr.bf16.gmra.mrb[0].mxu0 %v656
      %v930 = vpop.f32.mrb[0].mxu0
      %v931 = vadd.f32 0.0, %v930
      %v932 = vpop.f32.mrb[0].mxu0
      %v933 = vpop.f32.mrb[0].mxu0
      %v934 = vadd.f32 0.0, %v933
      %v935 = vpop.f32.mrb[0].mxu0
      %936 = vmatprep.mubr.bf16.mxu0 %v661
      %937 = vmatmul.mubr.bf16.gmra.mrb[0].mxu0 %v660
      %v938 = vpop.f32.mrb[0].mxu0
      %v939 = vadd.f32 0.0, %v938
      %v940 = vpop.f32.mrb[0].mxu0
      %v941 = vpop.f32.mrb[0].mxu0
      %v942 = vadd.f32 0.0, %v941
      %v943 = vpop.f32.mrb[0].mxu0
      %944 = vmatprep.mubr.bf16.mxu0 %v665
      %945 = vmatmul.mubr.bf16.gmra.mrb[0].mxu0 %v664
      %v946 = vpop.f32.mrb[0].mxu0
      %v947 = vadd.f32 0.0, %v946
      %v948 = vpop.f32.mrb[0].mxu0
      %v949 = vpop.f32.mrb[0].mxu0
      %v950 = vadd.f32 0.0, %v949
      %v951 = vpop.f32.mrb[0].mxu0
      %952 = vmatprep.mubr.bf16.mxu0 %v669
      %953 = vmatmul.mubr.bf16.gmra.mrb[0].mxu0 %v668
      %v954 = vpop.f32.mrb[0].mxu0
      %v955 = vadd.f32 0.0, %v954
      %v956 = vpop.f32.mrb[0].mxu0
      %v957 = vpop.f32.mrb[0].mxu0
      %v958 = vadd.f32 0.0, %v957
      %v959 = vpop.f32.mrb[0].mxu0
      %960 = vmatprep.mubr.bf16.mxu0 %v673
      %961 = vmatmul.mubr.bf16.gmra.mrb[0].mxu0 %v672
      %v962 = vpop.f32.mrb[0].mxu0
      %v963 = vadd.f32 0.0, %v962
      %v964 = vpop.f32.mrb[0].mxu0
      %v965 = vpop.f32.mrb[0].mxu0
      %v966 = vadd.f32 0.0, %v965
      %v967 = vpop.f32.mrb[0].mxu0
      %968 = vmatprep.mubr.bf16.mxu0 %v677
      %969 = vmatmul.mubr.bf16.gmra.mrb[0].mxu0 %v676
      %v970 = vpop.f32.mrb[0].mxu0
      %v971 = vadd.f32 0.0, %v970
      %v972 = vpop.f32.mrb[0].mxu0
      %v973 = vpop.f32.mrb[0].mxu0
      %v974 = vadd.f32 0.0, %v973
      %v975 = vpop.f32.mrb[0].mxu0
      %976 = vdwg.mxu0
      %977 = vmatprep.subr.bf16.mxu0 0
      %978 = vmatpush1.bf16.msra.mxu0 %v848
      %979 = vmatprep.subr.bf16.mxu0 0
      %980 = vmatpush1.bf16.msra.mxu0 %v849
      %981 = vmatprep.subr.bf16.mxu0 0
      %982 = vmatpush1.bf16.msra.mxu0 %v850
      %983 = vmatprep.subr.bf16.mxu0 0
      %984 = vmatpush1.bf16.msra.mxu0 %v851
      %985 = vmatprep.subr.bf16.mxu0 0
      %986 = vmatpush1.bf16.msra.mxu0 %v852
      %987 = vmatprep.subr.bf16.mxu0 0
      %988 = vmatpush1.bf16.msra.mxu0 %v853
      %989 = vmatprep.subr.bf16.mxu0 0
      %990 = vmatpush1.bf16.msra.mxu0 %v854
      %991 = vmatprep.subr.bf16.mxu0 0
      %992 = vmatpush1.bf16.msra.mxu0 %v855
      %993 = vmatprep.subr.bf16.mxu0 0
      %994 = vmatpush1.bf16.msra.mxu0 %v856
      %995 = vmatprep.subr.bf16.mxu0 0
      %996 = vmatpush1.bf16.msra.mxu0 %v857
      %997 = vmatprep.subr.bf16.mxu0 0
      %998 = vmatpush1.bf16.msra.mxu0 %v858
      %999 = vmatprep.subr.bf16.mxu0 0
      %1000 = vmatpush1.bf16.msra.mxu0 %v859
      %1001 = vmatprep.subr.bf16.mxu0 0
      %1002 = vmatpush1.bf16.msra.mxu0 %v860
      %1003 = vmatprep.subr.bf16.mxu0 0
      %1004 = vmatpush1.bf16.msra.mxu0 %v861
      %1005 = vmatprep.subr.bf16.mxu0 0
      %1006 = vmatpush1.bf16.msra.mxu0 %v862
      %1007 = vmatprep.subr.bf16.mxu0 0
      %1008 = vmatpush1.bf16.msra.mxu0 %v863
      %1009 = vmatprep.mubr.bf16.mxu0 %v659
      %1010 = vmatmul.mubr.bf16.gmra.mrb[0].mxu0 %v658
      %v1011 = vpop.f32.mrb[0].mxu0
      %v1012 = vadd.f32 %v931, %v1011
      %v1013 = vpop.f32.mrb[0].mxu0
      %v1014 = vpop.f32.mrb[0].mxu0
      %v1015 = vadd.f32 %v934, %v1014
      %v1016 = vpop.f32.mrb[0].mxu0
      %1017 = vmatprep.mubr.bf16.mxu0 %v663
      %1018 = vmatmul.mubr.bf16.gmra.mrb[0].mxu0 %v662
      %v1019 = vpop.f32.mrb[0].mxu0
      %v1020 = vadd.f32 %v939, %v1019
      %v1021 = vpop.f32.mrb[0].mxu0
      %v1022 = vpop.f32.mrb[0].mxu0
      %v1023 = vadd.f32 %v942, %v1022
      %v1024 = vpop.f32.mrb[0].mxu0
      %1025 = vmatprep.mubr.bf16.mxu0 %v667
      %1026 = vmatmul.mubr.bf16.gmra.mrb[0].mxu0 %v666
      %v1027 = vpop.f32.mrb[0].mxu0
      %v1028 = vadd.f32 %v947, %v1027
      %v1029 = vpop.f32.mrb[0].mxu0
      %v1030 = vpop.f32.mrb[0].mxu0
      %v1031 = vadd.f32 %v950, %v1030
      %v1032 = vpop.f32.mrb[0].mxu0
      %1033 = vmatprep.mubr.bf16.mxu0 %v671
      %1034 = vmatmul.mubr.bf16.gmra.mrb[0].mxu0 %v670
      %v1035 = vpop.f32.mrb[0].mxu0
      %v1036 = vadd.f32 %v955, %v1035
      %v1037 = vpop.f32.mrb[0].mxu0
      %v1038 = vpop.f32.mrb[0].mxu0
      %v1039 = vadd.f32 %v958, %v1038
      %v1040 = vpop.f32.mrb[0].mxu0
      %1041 = vmatprep.mubr.bf16.mxu0 %v675
      %1042 = vmatmul.mubr.bf16.gmra.mrb[0].mxu0 %v674
      %v1043 = vpop.f32.mrb[0].mxu0
      %v1044 = vadd.f32 %v963, %v1043
      %v1045 = vpop.f32.mrb[0].mxu0
      %v1046 = vpop.f32.mrb[0].mxu0
      %v1047 = vadd.f32 %v966, %v1046
      %v1048 = vpop.f32.mrb[0].mxu0
      %1049 = vmatprep.mubr.bf16.mxu0 %v679
      %1050 = vmatmul.mubr.bf16.gmra.mrb[0].mxu0 %v678
      %v1051 = vpop.f32.mrb[0].mxu0
      %v1052 = vadd.f32 %v971, %v1051
      %v1053 = vpop.f32.mrb[0].mxu0
      %v1054 = vpop.f32.mrb[0].mxu0
      %v1055 = vadd.f32 %v974, %v1054
      %v1056 = vpop.f32.mrb[0].mxu0
      %1057 = vdwg.mxu0
      %v1058 = vmax.f32 %v1012, 0.0
      %v1059 = vmax.f32 %v1015, 0.0
      %v1060 = vmax.f32 %v1020, 0.0
      %v1061 = vmax.f32 %v1023, 0.0
      %v1062 = vmax.f32 %v1028, 0.0
      %v1063 = vmax.f32 %v1031, 0.0
      %v1064 = vmax.f32 %v1036, 0.0
      %v1065 = vmax.f32 %v1039, 0.0
      %v1066 = vmax.f32 %v1044, 0.0
      %v1067 = vmax.f32 %v1047, 0.0
      %v1068 = vmax.f32 %v1052, 0.0
      %v1069 = vmax.f32 %v1055, 0.0
      %v1070 = vadd.f32 %v1058, %v1059
      %v1071 = vrot.slane %v1070, 4
      %v1072 = vadd.f32 %v1070, %v1071
      %v1073 = vrot.slane %v1072, 2
      %v1074 = vadd.f32 %v1072, %v1073
      %v1075 = vrot.slane %v1074, 1
      %v1076 = vadd.f32 %v1074, %v1075
      %v1077 = vadd.f32 %v1060, %v1061
      %v1078 = vrot.slane %v1077, 4
      %v1079 = vadd.f32 %v1077, %v1078
      %v1080 = vrot.slane %v1079, 2
      %v1081 = vadd.f32 %v1079, %v1080
      %v1082 = vrot.slane %v1081, 1
      %v1083 = vadd.f32 %v1081, %v1082
      %v1084 = vadd.f32 %v1062, %v1063
      %v1085 = vrot.slane %v1084, 4
      %v1086 = vadd.f32 %v1084, %v1085
      %v1087 = vrot.slane %v1086, 2
      %v1088 = vadd.f32 %v1086, %v1087
      %v1089 = vrot.slane %v1088, 1
      %v1090 = vadd.f32 %v1088, %v1089
      %v1091 = vadd.f32 %v1064, %v1065
      %v1092 = vrot.slane %v1091, 4
      %v1093 = vadd.f32 %v1091, %v1092
      %v1094 = vrot.slane %v1093, 2
      %v1095 = vadd.f32 %v1093, %v1094
      %v1096 = vrot.slane %v1095, 1
      %v1097 = vadd.f32 %v1095, %v1096
      %v1098 = vadd.f32 %v1066, %v1067
      %v1099 = vrot.slane %v1098, 4
      %v1100 = vadd.f32 %v1098, %v1099
      %v1101 = vrot.slane %v1100, 2
      %v1102 = vadd.f32 %v1100, %v1101
      %v1103 = vrot.slane %v1102, 1
      %v1104 = vadd.f32 %v1102, %v1103
      %v1105 = vadd.f32 %v1068, %v1069
      %v1106 = vrot.slane %v1105, 4
      %v1107 = vadd.f32 %v1105, %v1106
      %v1108 = vrot.slane %v1107, 2
      %v1109 = vadd.f32 %v1107, %v1108
      %v1110 = vrot.slane %v1109, 1
      %v1111 = vadd.f32 %v1109, %v1110
      %v1112 = vpack.c.bf16 %v1076, %v1076
      %v1113 = vpack.c.bf16 %v1083, %v1083
      %v1114 = vpack.c.bf16 %v1090, %v1090
      %v1115 = vpack.c.bf16 %v1097, %v1097
      %v1116 = vpack.c.bf16 %v1104, %v1104
      %v1117 = vpack.c.bf16 %v1111, %v1111
      %v1118 = vld [vmem:[%s4] sm:$0xf]
      %v1119 = vld [vmem:[%s4 + $0x4] sm:$0xf]
      %v1120 = vld [vmem:[%s4 + $0x8] sm:$0xf]
      %v1121 = vld [vmem:[%s4 + $0xc] sm:$0xf]
      %v1122 = vld [vmem:[%s4 + $0x10] sm:$0xf]
      %v1123 = vld [vmem:[%s4 + $0x14] sm:$0xf]
      %v1124 = vld [vmem:[%s4 + $0x18] sm:$0xf]
      %v1125 = vld [vmem:[%s4 + $0x1c] sm:$0xf]
      %v1126 = vld [vmem:[%s4 + $0x20] sm:$0xf]
      %v1127 = vld [vmem:[%s4 + $0x24] sm:$0xf]
      %v1128 = vld [vmem:[%s4 + $0x28] sm:$0xf]
      %v1129 = vld [vmem:[%s4 + $0x2c] sm:$0xf]
      %v1130 = vld [vmem:[%s4 + $0x30] sm:$0xf]
      %v1131 = vld [vmem:[%s4 + $0x34] sm:$0xf]
      %v1132 = vld [vmem:[%s4 + $0x38] sm:$0xf]
      %v1133 = vld [vmem:[%s4 + $0x3c] sm:$0xf]
      %v1134 = vld [vmem:[%s488] sm:$0x7]
      %v1135 = vld [vmem:[%s5] sm:$0xf]
      %v1136 = vld [vmem:[%s5 + $0x4] sm:$0xf]
      %v1137 = vld [vmem:[%s5 + $0x8] sm:$0xf]
      %v1138 = vld [vmem:[%s5 + $0xc] sm:$0xf]
      %v1143 = vunpack.c.l.b16 %v1135
      %v1144 = vunpack.c.l.b16 %v1136
      %v1145 = vunpack.c.l.b16 %v1137
      %v1146 = vunpack.c.l.b16 %v1138
      %v1147 = vpack.c.b16 %v1144, %v1143
      %v1148 = vpack.c.b16 %v1146, %v1145
      %vm1151 = vcmask 261120
      %v1153 = vsel %vm1151, %v1134, 0
      %1155 = vmatprep.subr.bf16.mxu0 0
      %1156 = vmatpush1.bf16.msra.mxu0 %v1147
      %1157 = vmatprep.subr.bf16.mxu0 0
      %1158 = vmatpush1.bf16.msra.mxu0 %v1148
      %1159 = vmatprep.subr.bf16.mxu0 0
      %1160 = vmatpush1.bf16.msra.mxu0 0
      %1161 = vmatprep.subr.bf16.mxu0 0
      %1162 = vmatpush1.bf16.msra.mxu0 0
      %1163 = vmatprep.subr.bf16.mxu0 0
      %1164 = vmatpush1.bf16.msra.mxu0 0
      %1165 = vmatprep.subr.bf16.mxu0 0
      %1166 = vmatpush1.bf16.msra.mxu0 0
      %1167 = vmatprep.subr.bf16.mxu0 0
      %1168 = vmatpush1.bf16.msra.mxu0 0
      %1169 = vmatprep.subr.bf16.mxu0 0
      %1170 = vmatpush1.bf16.msra.mxu0 0
      %1171 = vmatprep.subr.bf16.mxu0 0
      %1172 = vmatpush1.bf16.msra.mxu0 0
      %1173 = vmatprep.subr.bf16.mxu0 0
      %1174 = vmatpush1.bf16.msra.mxu0 0
      %1175 = vmatprep.subr.bf16.mxu0 0
      %1176 = vmatpush1.bf16.msra.mxu0 0
      %1177 = vmatprep.subr.bf16.mxu0 0
      %1178 = vmatpush1.bf16.msra.mxu0 0
      %1179 = vmatprep.subr.bf16.mxu0 0
      %1180 = vmatpush1.bf16.msra.mxu0 0
      %1181 = vmatprep.subr.bf16.mxu0 0
      %1182 = vmatpush1.bf16.msra.mxu0 0
      %1183 = vmatprep.subr.bf16.mxu0 0
      %1184 = vmatpush1.bf16.msra.mxu0 0
      %1185 = vmatprep.subr.bf16.mxu0 0
      %1186 = vmatpush1.bf16.msra.mxu0 0
      %1187 = vmatprep.mubr.bf16.mxu0 0
      %1188 = vmatmul.mubr.bf16.gmra.mrb[0].mxu0 %v1153
      %v1189 = vpop.f32.mrb[0].mxu0
      %v1190 = vadd.f32 0.0, %v1189
      %v1191 = vpop.f32.mrb[0].mxu0
      %v1192 = vpop.f32.mrb[0].mxu0
      %v1193 = vpop.f32.mrb[0].mxu0
      %1194 = vdwg.mxu0
      %v1201 = vunpack.c.l.b16 %v1112
      %v1202 = vunpack.c.l.b16 %v1113
      %v1203 = vunpack.c.l.b16 %v1114
      %v1204 = vunpack.c.l.b16 %v1115
      %v1205 = vunpack.c.l.b16 %v1116
      %v1206 = vunpack.c.l.b16 %v1117
      %vm1207 = vcmask 1041409
      %v1208 = vsel %vm1207, %v1202, %v1201
      %vm1209 = vcmask 1042434
      %v1210 = vsel %vm1209, %v1203, %v1208
      %vm1211 = vcmask 1043459
      %v1212 = vsel %vm1211, %v1204, %v1210
      %vm1213 = vcmask 1044484
      %v1214 = vsel %vm1213, %v1205, %v1212
      %vm1215 = vcmask 1045509
      %v1216 = vsel %vm1215, %v1206, %v1214
      %v1217 = vpack.c.b16 %v1216, %v1216
      %v1235 = vunpack.c.l.b16 %v1118
      %v1236 = vunpack.c.l.b16 %v1119
      %v1237 = vunpack.c.l.b16 %v1120
      %v1238 = vunpack.c.l.b16 %v1121
      %v1239 = vunpack.c.l.b16 %v1122
      %v1240 = vunpack.c.l.b16 %v1123
      %v1241 = vunpack.c.l.b16 %v1124
      %v1242 = vunpack.c.l.b16 %v1125
      %v1243 = vunpack.c.l.b16 %v1126
      %v1244 = vunpack.c.l.b16 %v1127
      %v1245 = vunpack.c.l.b16 %v1128
      %v1246 = vunpack.c.l.b16 %v1129
      %v1247 = vunpack.c.l.b16 %v1130
      %v1248 = vunpack.c.l.b16 %v1131
      %v1249 = vunpack.c.l.b16 %v1132
      %v1250 = vunpack.c.l.b16 %v1133
      %v1251 = vpack.c.b16 %v1236, %v1235
      %v1252 = vpack.c.b16 %v1238, %v1237
      %v1253 = vpack.c.b16 %v1240, %v1239
      %v1254 = vpack.c.b16 %v1242, %v1241
      %v1255 = vpack.c.b16 %v1244, %v1243
      %v1256 = vpack.c.b16 %v1246, %v1245
      %v1257 = vpack.c.b16 %v1248, %v1247
      %v1258 = vpack.c.b16 %v1250, %v1249
      %1267 = vmatprep.subr.bf16.mxu0 0
      %1268 = vmatpush1.bf16.msra.mxu0 %v1251
      %1269 = vmatprep.subr.bf16.mxu0 0
      %1270 = vmatpush1.bf16.msra.mxu0 %v1252
      %1271 = vmatprep.subr.bf16.mxu0 0
      %1272 = vmatpush1.bf16.msra.mxu0 %v1253
      %1273 = vmatprep.subr.bf16.mxu0 0
      %1274 = vmatpush1.bf16.msra.mxu0 %v1254
      %1275 = vmatprep.subr.bf16.mxu0 0
      %1276 = vmatpush1.bf16.msra.mxu0 %v1255
      %1277 = vmatprep.subr.bf16.mxu0 0
      %1278 = vmatpush1.bf16.msra.mxu0 %v1256
      %1279 = vmatprep.subr.bf16.mxu0 0
      %1280 = vmatpush1.bf16.msra.mxu0 %v1257
      %1281 = vmatprep.subr.bf16.mxu0 0
      %1282 = vmatpush1.bf16.msra.mxu0 %v1258
      %1283 = vmatprep.subr.bf16.mxu0 0
      %1284 = vmatpush1.bf16.msra.mxu0 0
      %1285 = vmatprep.subr.bf16.mxu0 0
      %1286 = vmatpush1.bf16.msra.mxu0 0
      %1287 = vmatprep.subr.bf16.mxu0 0
      %1288 = vmatpush1.bf16.msra.mxu0 0
      %1289 = vmatprep.subr.bf16.mxu0 0
      %1290 = vmatpush1.bf16.msra.mxu0 0
      %1291 = vmatprep.subr.bf16.mxu0 0
      %1292 = vmatpush1.bf16.msra.mxu0 0
      %1293 = vmatprep.subr.bf16.mxu0 0
      %1294 = vmatpush1.bf16.msra.mxu0 0
      %1295 = vmatprep.subr.bf16.mxu0 0
      %1296 = vmatpush1.bf16.msra.mxu0 0
      %1297 = vmatprep.subr.bf16.mxu0 0
      %1298 = vmatpush1.bf16.msra.mxu0 0
      %1299 = vmatprep.mubr.bf16.mxu0 0
      %1300 = vmatmul.mubr.bf16.gmra.mrb[0].mxu0 %v1217
      %v1301 = vpop.f32.mrb[0].mxu0
      %v1302 = vadd.f32 %v1190, %v1301
      %v1303 = vpop.f32.mrb[0].mxu0
      %v1304 = vpop.f32.mrb[0].mxu0
      %v1305 = vpop.f32.mrb[0].mxu0
      %1306 = vdwg.mxu0
      %v1307 = vld [vmem:[%s6] sm:$0xff]
      %v1308 = vld [vmem:[%s7] sm:$0xff]
      %vm1309 = vcmask 48128
      %v1311 = vsel %vm1309, %v1307, 0
      %vm1313 = vcmask 1045504
      %v1315 = vsel %vm1313, %v1302, 0
      %1317 = vmatprep.subr.mxu0 0.0
      %1318 = vmatpush1.msra.mxu0 %v1315
      %1319 = vmatprep.subr.mxu0 0.0
      %1320 = vmatpush1.msra.mxu0 0.0
      %1321 = vmatprep.subr.mxu0 0.0
      %1322 = vmatpush1.msra.mxu0 0.0
      %1323 = vmatprep.subr.mxu0 0.0
      %1324 = vmatpush1.msra.mxu0 0.0
      %1325 = vmatprep.subr.mxu0 0.0
      %1326 = vmatpush1.msra.mxu0 0.0
      %1327 = vmatprep.subr.mxu0 0.0
      %1328 = vmatpush1.msra.mxu0 0.0
      %1329 = vmatprep.subr.mxu0 0.0
      %1330 = vmatpush1.msra.mxu0 0.0
      %1331 = vmatprep.subr.mxu0 0.0
      %1332 = vmatpush1.msra.mxu0 0.0
      %1333 = vmatprep.subr.mxu0 0.0
      %1334 = vmatpush1.msra.mxu0 0.0
      %1335 = vmatprep.subr.mxu0 0.0
      %1336 = vmatpush1.msra.mxu0 0.0
      %1337 = vmatprep.subr.mxu0 0.0
      %1338 = vmatpush1.msra.mxu0 0.0
      %1339 = vmatprep.subr.mxu0 0.0
      %1340 = vmatpush1.msra.mxu0 0.0
      %1341 = vmatprep.subr.mxu0 0.0
      %1342 = vmatpush1.msra.mxu0 0.0
      %1343 = vmatprep.subr.mxu0 0.0
      %1344 = vmatpush1.msra.mxu0 0.0
      %1345 = vmatprep.subr.mxu0 0.0
      %1346 = vmatpush1.msra.mxu0 0.0
      %1347 = vmatprep.subr.mxu0 0.0
      %1348 = vmatpush1.msra.mxu0 0.0
      %1349 = vmatprep.subr.mxu0 0.0
      %1350 = vmatpush1.msra.mxu0 0.0
      %1351 = vmatprep.subr.mxu0 0.0
      %1352 = vmatpush1.msra.mxu0 0.0
      %1353 = vmatprep.subr.mxu0 0.0
      %1354 = vmatpush1.msra.mxu0 0.0
      %1355 = vmatprep.subr.mxu0 0.0
      %1356 = vmatpush1.msra.mxu0 0.0
      %1357 = vmatprep.subr.mxu0 0.0
      %1358 = vmatpush1.msra.mxu0 0.0
      %1359 = vmatprep.subr.mxu0 0.0
      %1360 = vmatpush1.msra.mxu0 0.0
      %1361 = vmatprep.subr.mxu0 0.0
      %1362 = vmatpush1.msra.mxu0 0.0
      %1363 = vmatprep.subr.mxu0 0.0
      %1364 = vmatpush1.msra.mxu0 0.0
      %1365 = vmatprep.subr.mxu0 0.0
      %1366 = vmatpush1.msra.mxu0 0.0
      %1367 = vmatprep.subr.mxu0 0.0
      %1368 = vmatpush1.msra.mxu0 0.0
      %1369 = vmatprep.subr.mxu0 0.0
      %1370 = vmatpush1.msra.mxu0 0.0
      %1371 = vmatprep.subr.mxu0 0.0
      %1372 = vmatpush1.msra.mxu0 0.0
      %1373 = vmatprep.subr.mxu0 0.0
      %1374 = vmatpush1.msra.mxu0 0.0
      %1375 = vmatprep.subr.mxu0 0.0
      %1376 = vmatpush1.msra.mxu0 0.0
      %1377 = vmatprep.subr.mxu0 0.0
      %1378 = vmatpush1.msra.mxu0 0.0
      %1379 = vmatprep.subr.mxu0 0.0
      %1380 = vmatpush1.msra.mxu0 0.0
      %1381 = vmatprep.mubr.f32.mxu0 0.0
      %1382 = vmatmul.mubr.f32.gmra.mrb[0].mxu0 %v1311
      %v1383 = vpop.f32.mrb[0].mxu0
      %v1384 = vadd.f32 %v1308, %v1383
      %v1385 = vpop.f32.mrb[0].mxu0
      %1386 = vdwg.mxu0
      %v1387 = vpack.c.bf16 %v1384, %v1384
      %v1388 = vld [vmem:[%s8] sm:$0xff]
      %v1389 = vld [vmem:[%s8 + $0x8] sm:$0xf]
      %v1390 = vld [vmem:[%s8 + $0xc] sm:$0xff]
      %v1391 = vld [vmem:[%s8 + $0x14] sm:$0xf]
      %v1392 = vld [vmem:[%s8 + $0x18] sm:$0xff]
      %v1393 = vld [vmem:[%s8 + $0x20] sm:$0xf]
      %v1394 = vld [vmem:[%s8 + $0x24] sm:$0xff]
      %v1395 = vld [vmem:[%s8 + $0x2c] sm:$0xf]
      %v1396 = vld [vmem:[%s8 + $0x30] sm:$0xff]
      %v1397 = vld [vmem:[%s8 + $0x38] sm:$0xf]
      %v1398 = vld [vmem:[%s8 + $0x3c] sm:$0xff]
      %v1399 = vld [vmem:[%s8 + $0x44] sm:$0xf]
      %v1400 = vld [vmem:[%s8 + $0x48] sm:$0xff]
      %v1401 = vld [vmem:[%s8 + $0x50] sm:$0xf]
      %v1402 = vld [vmem:[%s8 + $0x54] sm:$0xff]
      %v1403 = vld [vmem:[%s8 + $0x5c] sm:$0xf]
      %v1404 = vld [vmem:[%s8 + $0x60] sm:$0xff]
      %v1405 = vld [vmem:[%s8 + $0x68] sm:$0xf]
      %v1406 = vld [vmem:[%s8 + $0x6c] sm:$0xff]
      %v1407 = vld [vmem:[%s8 + $0x74] sm:$0xf]
      %v1408 = vld [vmem:[%s8 + $0x78] sm:$0xff]
      %v1409 = vld [vmem:[%s8 + $0x80] sm:$0xf]
      %v1410 = vld [vmem:[%s8 + $0x84] sm:$0xff]
      %v1411 = vld [vmem:[%s8 + $0x8c] sm:$0xf]
      %v1412 = vld [vmem:[%s8 + $0x90] sm:$0xff]
      %v1413 = vld [vmem:[%s8 + $0x98] sm:$0xf]
      %v1414 = vld [vmem:[%s8 + $0x9c] sm:$0xff]
      %v1415 = vld [vmem:[%s8 + $0xa4] sm:$0xf]
      %v1416 = vld [vmem:[%s8 + $0xa8] sm:$0xff]
      %v1417 = vld [vmem:[%s8 + $0xb0] sm:$0xf]
      %v1418 = vld [vmem:[%s8 + $0xb4] sm:$0xff]
      %v1419 = vld [vmem:[%s8 + $0xbc] sm:$0xf]
      %v1420 = vld [vmem:[%s9] ss:$2 sm:$0x7]
      %v1422 = vlaneseq
      %v1423 = vshrl.u32 %v1422, 7
      %v1424 = vsub.s32 0, %v1423
      %v1425 = vrot.slane %v1420, %v1424
      %v1426 = vlaneseq
      %v1427 = vshrl.u32 %v1426, 7
      %v1428 = vsub.s32 1, %v1427
      %v1429 = vrot.slane %v1420, %v1428
      %v1430 = vlaneseq
      %v1431 = vshrl.u32 %v1430, 7
      %v1432 = vsub.s32 2, %v1431
      %v1433 = vrot.slane %v1420, %v1432
      %v1469 = vunpack.c.l.b16 %v1388
      %v1470 = vunpack.c.h.b16 %v1388
      %v1471 = vunpack.c.l.b16 %v1389
      %v1472 = vunpack.c.l.b16 %v1390
      %v1473 = vunpack.c.h.b16 %v1390
      %v1474 = vunpack.c.l.b16 %v1391
      %v1475 = vunpack.c.l.b16 %v1392
      %v1476 = vunpack.c.h.b16 %v1392
      %v1477 = vunpack.c.l.b16 %v1393
      %v1478 = vunpack.c.l.b16 %v1394
      %v1479 = vunpack.c.h.b16 %v1394
      %v1480 = vunpack.c.l.b16 %v1395
      %v1481 = vunpack.c.l.b16 %v1396
      %v1482 = vunpack.c.h.b16 %v1396
      %v1483 = vunpack.c.l.b16 %v1397
      %v1484 = vunpack.c.l.b16 %v1398
      %v1485 = vunpack.c.h.b16 %v1398
      %v1486 = vunpack.c.l.b16 %v1399
      %v1487 = vunpack.c.l.b16 %v1400
      %v1488 = vunpack.c.h.b16 %v1400
      %v1489 = vunpack.c.l.b16 %v1401
      %v1490 = vunpack.c.l.b16 %v1402
      %v1491 = vunpack.c.h.b16 %v1402
      %v1492 = vunpack.c.l.b16 %v1403
      %v1493 = vunpack.c.l.b16 %v1404
      %v1494 = vunpack.c.h.b16 %v1404
      %v1495 = vunpack.c.l.b16 %v1405
      %v1496 = vunpack.c.l.b16 %v1406
      %v1497 = vunpack.c.h.b16 %v1406
      %v1498 = vunpack.c.l.b16 %v1407
      %v1499 = vunpack.c.l.b16 %v1408
      %v1500 = vunpack.c.h.b16 %v1408
      %v1501 = vunpack.c.l.b16 %v1409
      %v1502 = vunpack.c.l.b16 %v1410
      %v1503 = vunpack.c.h.b16 %v1410
      %v1504 = vunpack.c.l.b16 %v1411
      %v1505 = vunpack.c.l.b16 %v1412
      %v1506 = vunpack.c.h.b16 %v1412
      %v1507 = vunpack.c.l.b16 %v1413
      %v1508 = vunpack.c.l.b16 %v1414
      %v1509 = vunpack.c.h.b16 %v1414
      %v1510 = vunpack.c.l.b16 %v1415
      %v1511 = vunpack.c.l.b16 %v1416
      %v1512 = vunpack.c.h.b16 %v1416
      %v1513 = vunpack.c.l.b16 %v1417
      %v1514 = vunpack.c.l.b16 %v1418
      %v1515 = vunpack.c.h.b16 %v1418
      %v1516 = vunpack.c.l.b16 %v1419
      %v1517 = vpack.c.b16 %v1472, %v1469
      %v1518 = vpack.c.b16 %v1473, %v1470
      %v1519 = vpack.c.b16 %v1474, %v1471
      %v1520 = vpack.c.b16 %v1478, %v1475
      %v1521 = vpack.c.b16 %v1479, %v1476
      %v1522 = vpack.c.b16 %v1480, %v1477
      %v1523 = vpack.c.b16 %v1484, %v1481
      %v1524 = vpack.c.b16 %v1485, %v1482
      %v1525 = vpack.c.b16 %v1486, %v1483
      %v1526 = vpack.c.b16 %v1490, %v1487
      %v1527 = vpack.c.b16 %v1491, %v1488
      %v1528 = vpack.c.b16 %v1492, %v1489
      %v1529 = vpack.c.b16 %v1496, %v1493
      %v1530 = vpack.c.b16 %v1497, %v1494
      %v1531 = vpack.c.b16 %v1498, %v1495
      %v1532 = vpack.c.b16 %v1502, %v1499
      %v1533 = vpack.c.b16 %v1503, %v1500
      %v1534 = vpack.c.b16 %v1504, %v1501
      %v1535 = vpack.c.b16 %v1508, %v1505
      %v1536 = vpack.c.b16 %v1509, %v1506
      %v1537 = vpack.c.b16 %v1510, %v1507
      %v1538 = vpack.c.b16 %v1514, %v1511
      %v1539 = vpack.c.b16 %v1515, %v1512
      %v1540 = vpack.c.b16 %v1516, %v1513
      %1565 = vmatprep.subr.bf16.mxu0 %v1518
      %1566 = vmatpush1.bf16.msra.mxu0 %v1517
      %1567 = vmatprep.subr.bf16.mxu0 %v1521
      %1568 = vmatpush1.bf16.msra.mxu0 %v1520
      %1569 = vmatprep.subr.bf16.mxu0 %v1524
      %1570 = vmatpush1.bf16.msra.mxu0 %v1523
      %1571 = vmatprep.subr.bf16.mxu0 %v1527
      %1572 = vmatpush1.bf16.msra.mxu0 %v1526
      %1573 = vmatprep.subr.bf16.mxu0 %v1530
      %1574 = vmatpush1.bf16.msra.mxu0 %v1529
      %1575 = vmatprep.subr.bf16.mxu0 %v1533
      %1576 = vmatpush1.bf16.msra.mxu0 %v1532
      %1577 = vmatprep.subr.bf16.mxu0 %v1536
      %1578 = vmatpush1.bf16.msra.mxu0 %v1535
      %1579 = vmatprep.subr.bf16.mxu0 %v1539
      %1580 = vmatpush1.bf16.msra.mxu0 %v1538
      %1581 = vmatprep.subr.bf16.mxu0 0
      %1582 = vmatpush1.bf16.msra.mxu0 0
      %1583 = vmatprep.subr.bf16.mxu0 0
      %1584 = vmatpush1.bf16.msra.mxu0 0
      %1585 = vmatprep.subr.bf16.mxu0 0
      %1586 = vmatpush1.bf16.msra.mxu0 0
      %1587 = vmatprep.subr.bf16.mxu0 0
      %1588 = vmatpush1.bf16.msra.mxu0 0
      %1589 = vmatprep.subr.bf16.mxu0 0
      %1590 = vmatpush1.bf16.msra.mxu0 0
      %1591 = vmatprep.subr.bf16.mxu0 0
      %1592 = vmatpush1.bf16.msra.mxu0 0
      %1593 = vmatprep.subr.bf16.mxu0 0
      %1594 = vmatpush1.bf16.msra.mxu0 0
      %1595 = vmatprep.subr.bf16.mxu0 0
      %1596 = vmatpush1.bf16.msra.mxu0 0
      %1597 = vmatprep.mubr.bf16.mxu0 0
      %1598 = vmatmul.mubr.bf16.gmra.mrb[0].mxu0 %v1387
      %v1599 = vpop.f32.mrb[0].mxu0
      %v1600 = vadd.f32 %v1425, %v1599
      %v1601 = vpop.f32.mrb[0].mxu0
      %v1602 = vadd.f32 %v1429, %v1601
      %v1603 = vpop.f32.mrb[0].mxu0
      %v1604 = vpop.f32.mrb[0].mxu0
      %1605 = vdwg.mxu0
      %1606 = vmatprep.subr.bf16.mxu0 0
      %1607 = vmatpush1.bf16.msra.mxu0 %v1519
      %1608 = vmatprep.subr.bf16.mxu0 0
      %1609 = vmatpush1.bf16.msra.mxu0 %v1522
      %1610 = vmatprep.subr.bf16.mxu0 0
      %1611 = vmatpush1.bf16.msra.mxu0 %v1525
      %1612 = vmatprep.subr.bf16.mxu0 0
      %1613 = vmatpush1.bf16.msra.mxu0 %v1528
      %1614 = vmatprep.subr.bf16.mxu0 0
      %1615 = vmatpush1.bf16.msra.mxu0 %v1531
      %1616 = vmatprep.subr.bf16.mxu0 0
      %1617 = vmatpush1.bf16.msra.mxu0 %v1534
      %1618 = vmatprep.subr.bf16.mxu0 0
      %1619 = vmatpush1.bf16.msra.mxu0 %v1537
      %1620 = vmatprep.subr.bf16.mxu0 0
      %1621 = vmatpush1.bf16.msra.mxu0 %v1540
      %1622 = vmatprep.subr.bf16.mxu0 0
      %1623 = vmatpush1.bf16.msra.mxu0 0
      %1624 = vmatprep.subr.bf16.mxu0 0
      %1625 = vmatpush1.bf16.msra.mxu0 0
      %1626 = vmatprep.subr.bf16.mxu0 0
      %1627 = vmatpush1.bf16.msra.mxu0 0
      %1628 = vmatprep.subr.bf16.mxu0 0
      %1629 = vmatpush1.bf16.msra.mxu0 0
      %1630 = vmatprep.subr.bf16.mxu0 0
      %1631 = vmatpush1.bf16.msra.mxu0 0
      %1632 = vmatprep.subr.bf16.mxu0 0
      %1633 = vmatpush1.bf16.msra.mxu0 0
      %1634 = vmatprep.subr.bf16.mxu0 0
      %1635 = vmatpush1.bf16.msra.mxu0 0
      %1636 = vmatprep.subr.bf16.mxu0 0
      %1637 = vmatpush1.bf16.msra.mxu0 0
      %1638 = vmatprep.mubr.bf16.mxu0 0
      %1639 = vmatmul.mubr.bf16.gmra.mrb[0].mxu0 %v1387
      %v1640 = vpop.f32.mrb[0].mxu0
      %v1641 = vadd.f32 %v1433, %v1640
      %v1642 = vpop.f32.mrb[0].mxu0
      %v1643 = vpop.f32.mrb[0].mxu0
      %v1644 = vpop.f32.mrb[0].mxu0
      %1645 = vdwg.mxu0
      %v1646 = vld [vmem:[%s491] sm:$0x1]
      %v1648 = vlaneseq
      %v1649 = vshrl.u32 %v1648, 7
      %v1650 = vsub.s32 0, %v1649
      %v1651 = vrot.slane %v1646, %v1650
      %v1654 = vsel %vm1151, %v1600, 0
      %v1657 = vsel %vm1151, %v1602, 0
      %1659 = vmatprep.subr.mxu0 0.0
      %1660 = vmatpush1.xpose.msra.mxu0 %v1657
      %1661 = vmatprep.subr.mxu0 0.0
      %1662 = vmatpush1.xpose.msra.mxu0 0.0
      %1663 = vmatprep.subr.mxu0 0.0
      %1664 = vmatpush1.xpose.msra.mxu0 0.0
      %1665 = vmatprep.subr.mxu0 0.0
      %1666 = vmatpush1.xpose.msra.mxu0 0.0
      %1667 = vmatprep.subr.mxu0 0.0
      %1668 = vmatpush1.xpose.msra.mxu0 0.0
      %1669 = vmatprep.subr.mxu0 0.0
      %1670 = vmatpush1.xpose.msra.mxu0 0.0
      %1671 = vmatprep.subr.mxu0 0.0
      %1672 = vmatpush1.xpose.msra.mxu0 0.0
      %1673 = vmatprep.subr.mxu0 0.0
      %1674 = vmatpush1.xpose.msra.mxu0 0.0
      %1675 = vmatprep.subr.mxu0 0.0
      %1676 = vmatpush1.xpose.msra.mxu0 0.0
      %1677 = vmatprep.subr.mxu0 0.0
      %1678 = vmatpush1.xpose.msra.mxu0 0.0
      %1679 = vmatprep.subr.mxu0 0.0
      %1680 = vmatpush1.xpose.msra.mxu0 0.0
      %1681 = vmatprep.subr.mxu0 0.0
      %1682 = vmatpush1.xpose.msra.mxu0 0.0
      %1683 = vmatprep.subr.mxu0 0.0
      %1684 = vmatpush1.xpose.msra.mxu0 0.0
      %1685 = vmatprep.subr.mxu0 0.0
      %1686 = vmatpush1.xpose.msra.mxu0 0.0
      %1687 = vmatprep.subr.mxu0 0.0
      %1688 = vmatpush1.xpose.msra.mxu0 0.0
      %1689 = vmatprep.subr.mxu0 0.0
      %1690 = vmatpush1.xpose.msra.mxu0 0.0
      %1691 = vmatprep.subr.mxu0 0.0
      %1692 = vmatpush1.xpose.msra.mxu0 0.0
      %1693 = vmatprep.subr.mxu0 0.0
      %1694 = vmatpush1.xpose.msra.mxu0 0.0
      %1695 = vmatprep.subr.mxu0 0.0
      %1696 = vmatpush1.xpose.msra.mxu0 0.0
      %1697 = vmatprep.subr.mxu0 0.0
      %1698 = vmatpush1.xpose.msra.mxu0 0.0
      %1699 = vmatprep.subr.mxu0 0.0
      %1700 = vmatpush1.xpose.msra.mxu0 0.0
      %1701 = vmatprep.subr.mxu0 0.0
      %1702 = vmatpush1.xpose.msra.mxu0 0.0
      %1703 = vmatprep.subr.mxu0 0.0
      %1704 = vmatpush1.xpose.msra.mxu0 0.0
      %1705 = vmatprep.subr.mxu0 0.0
      %1706 = vmatpush1.xpose.msra.mxu0 0.0
      %1707 = vmatprep.subr.mxu0 0.0
      %1708 = vmatpush1.xpose.msra.mxu0 0.0
      %1709 = vmatprep.subr.mxu0 0.0
      %1710 = vmatpush1.xpose.msra.mxu0 0.0
      %1711 = vmatprep.subr.mxu0 0.0
      %1712 = vmatpush1.xpose.msra.mxu0 0.0
      %1713 = vmatprep.subr.mxu0 0.0
      %1714 = vmatpush1.xpose.msra.mxu0 0.0
      %1715 = vmatprep.subr.mxu0 0.0
      %1716 = vmatpush1.xpose.msra.mxu0 0.0
      %1717 = vmatprep.subr.mxu0 0.0
      %1718 = vmatpush1.xpose.msra.mxu0 0.0
      %1719 = vmatprep.subr.mxu0 0.0
      %1720 = vmatpush1.xpose.msra.mxu0 0.0
      %1721 = vmatprep.subr.mxu0 0.0
      %1722 = vmatpush1.xpose.msra.mxu0 0.0
      %1723 = vmatprep.mubr.f32.mxu0 0.0
      %1724 = vmatmul.mubr.f32.gmra.mrb[0].mxu0 %v1654
      %v1725 = vpop.f32.mrb[0].mxu0
      %v1726 = vadd.f32 %v1651, %v1725
      %v1727 = vpop.f32.mrb[0].mxu0
      %1728 = vdwg.mxu0
      %vm1729 = vcmask 64512
      %v1730 = vsel %vm1729, %v1726, -inf
      %1731 = vmax.xlane.f32.xlu0 %v1730
      %v1732 = vpop.xlane.xlu0 %1731
      %v1733 = vsub.f32 %v1726, %v1732
      %v1734 = vmul.f32 %v1733, 1.442695
      %v1735 = vpow.pop %v1734
      %v1736 = vsel %vm1729, %v1735, 0.0
      %1737 = vadd.xlane.f32.xlu0 %v1736
      %v1738 = vpop.xlane.xlu0 %1737
      %v1739 = vrcp.pop %v1738
      %v1740 = vmul.f32 %v1735, %v1739
      %v1742 = vsel %vm1729, %v1740, 0
      %1744 = vmatprep.subr.mxu0 0.0
      %1745 = vmatpush1.msra.mxu0 %v1641
      %1746 = vmatprep.subr.mxu0 0.0
      %1747 = vmatpush1.msra.mxu0 0.0
      %1748 = vmatprep.subr.mxu0 0.0
      %1749 = vmatpush1.msra.mxu0 0.0
      %1750 = vmatprep.subr.mxu0 0.0
      %1751 = vmatpush1.msra.mxu0 0.0
      %1752 = vmatprep.subr.mxu0 0.0
      %1753 = vmatpush1.msra.mxu0 0.0
      %1754 = vmatprep.subr.mxu0 0.0
      %1755 = vmatpush1.msra.mxu0 0.0
      %1756 = vmatprep.subr.mxu0 0.0
      %1757 = vmatpush1.msra.mxu0 0.0
      %1758 = vmatprep.subr.mxu0 0.0
      %1759 = vmatpush1.msra.mxu0 0.0
      %1760 = vmatprep.subr.mxu0 0.0
      %1761 = vmatpush1.msra.mxu0 0.0
      %1762 = vmatprep.subr.mxu0 0.0
      %1763 = vmatpush1.msra.mxu0 0.0
      %1764 = vmatprep.subr.mxu0 0.0
      %1765 = vmatpush1.msra.mxu0 0.0
      %1766 = vmatprep.subr.mxu0 0.0
      %1767 = vmatpush1.msra.mxu0 0.0
      %1768 = vmatprep.subr.mxu0 0.0
      %1769 = vmatpush1.msra.mxu0 0.0
      %1770 = vmatprep.subr.mxu0 0.0
      %1771 = vmatpush1.msra.mxu0 0.0
      %1772 = vmatprep.subr.mxu0 0.0
      %1773 = vmatpush1.msra.mxu0 0.0
      %1774 = vmatprep.subr.mxu0 0.0
      %1775 = vmatpush1.msra.mxu0 0.0
      %1776 = vmatprep.subr.mxu0 0.0
      %1777 = vmatpush1.msra.mxu0 0.0
      %1778 = vmatprep.subr.mxu0 0.0
      %1779 = vmatpush1.msra.mxu0 0.0
      %1780 = vmatprep.subr.mxu0 0.0
      %1781 = vmatpush1.msra.mxu0 0.0
      %1782 = vmatprep.subr.mxu0 0.0
      %1783 = vmatpush1.msra.mxu0 0.0
      %1784 = vmatprep.subr.mxu0 0.0
      %1785 = vmatpush1.msra.mxu0 0.0
      %1786 = vmatprep.subr.mxu0 0.0
      %1787 = vmatpush1.msra.mxu0 0.0
      %1788 = vmatprep.subr.mxu0 0.0
      %1789 = vmatpush1.msra.mxu0 0.0
      %1790 = vmatprep.subr.mxu0 0.0
      %1791 = vmatpush1.msra.mxu0 0.0
      %1792 = vmatprep.subr.mxu0 0.0
      %1793 = vmatpush1.msra.mxu0 0.0
      %1794 = vmatprep.subr.mxu0 0.0
      %1795 = vmatpush1.msra.mxu0 0.0
      %1796 = vmatprep.subr.mxu0 0.0
      %1797 = vmatpush1.msra.mxu0 0.0
      %1798 = vmatprep.subr.mxu0 0.0
      %1799 = vmatpush1.msra.mxu0 0.0
      %1800 = vmatprep.subr.mxu0 0.0
      %1801 = vmatpush1.msra.mxu0 0.0
      %1802 = vmatprep.subr.mxu0 0.0
      %1803 = vmatpush1.msra.mxu0 0.0
      %1804 = vmatprep.subr.mxu0 0.0
      %1805 = vmatpush1.msra.mxu0 0.0
      %1806 = vmatprep.subr.mxu0 0.0
      %1807 = vmatpush1.msra.mxu0 0.0
      %1808 = vmatprep.mubr.f32.mxu0 0.0
      %1809 = vmatmul.mubr.f32.gmra.mrb[0].mxu0 %v1742
      %v1810 = vpop.f32.mrb[0].mxu0
      %v1811 = vadd.f32 0.0, %v1810
      %v1812 = vpop.f32.mrb[0].mxu0
      %1813 = vdwg.mxu0
      %1814 = vrot.lane.b32.xlu0 %v1600, 96
      %v1815 = vpop.permute.xlu0 %1814
      %1816 = vrot.lane.b32.xlu0 %v1602, 96
      %v1817 = vpop.permute.xlu0 %1816
      %v1818 = vsel %vm1151, %v1815, 0
      %v1820 = vsel %vm1151, %v1817, 0
      %1822 = vmatprep.subr.mxu0 0.0
      %1823 = vmatpush1.xpose.msra.mxu0 %v1820
      %1824 = vmatprep.subr.mxu0 0.0
      %1825 = vmatpush1.xpose.msra.mxu0 0.0
      %1826 = vmatprep.subr.mxu0 0.0
      %1827 = vmatpush1.xpose.msra.mxu0 0.0
      %1828 = vmatprep.subr.mxu0 0.0
      %1829 = vmatpush1.xpose.msra.mxu0 0.0
      %1830 = vmatprep.subr.mxu0 0.0
      %1831 = vmatpush1.xpose.msra.mxu0 0.0
      %1832 = vmatprep.subr.mxu0 0.0
      %1833 = vmatpush1.xpose.msra.mxu0 0.0
      %1834 = vmatprep.subr.mxu0 0.0
      %1835 = vmatpush1.xpose.msra.mxu0 0.0
      %1836 = vmatprep.subr.mxu0 0.0
      %1837 = vmatpush1.xpose.msra.mxu0 0.0
      %1838 = vmatprep.subr.mxu0 0.0
      %1839 = vmatpush1.xpose.msra.mxu0 0.0
      %1840 = vmatprep.subr.mxu0 0.0
      %1841 = vmatpush1.xpose.msra.mxu0 0.0
      %1842 = vmatprep.subr.mxu0 0.0
      %1843 = vmatpush1.xpose.msra.mxu0 0.0
      %1844 = vmatprep.subr.mxu0 0.0
      %1845 = vmatpush1.xpose.msra.mxu0 0.0
      %1846 = vmatprep.subr.mxu0 0.0
      %1847 = vmatpush1.xpose.msra.mxu0 0.0
      %1848 = vmatprep.subr.mxu0 0.0
      %1849 = vmatpush1.xpose.msra.mxu0 0.0
      %1850 = vmatprep.subr.mxu0 0.0
      %1851 = vmatpush1.xpose.msra.mxu0 0.0
      %1852 = vmatprep.subr.mxu0 0.0
      %1853 = vmatpush1.xpose.msra.mxu0 0.0
      %1854 = vmatprep.subr.mxu0 0.0
      %1855 = vmatpush1.xpose.msra.mxu0 0.0
      %1856 = vmatprep.subr.mxu0 0.0
      %1857 = vmatpush1.xpose.msra.mxu0 0.0
      %1858 = vmatprep.subr.mxu0 0.0
      %1859 = vmatpush1.xpose.msra.mxu0 0.0
      %1860 = vmatprep.subr.mxu0 0.0
      %1861 = vmatpush1.xpose.msra.mxu0 0.0
      %1862 = vmatprep.subr.mxu0 0.0
      %1863 = vmatpush1.xpose.msra.mxu0 0.0
      %1864 = vmatprep.subr.mxu0 0.0
      %1865 = vmatpush1.xpose.msra.mxu0 0.0
      %1866 = vmatprep.subr.mxu0 0.0
      %1867 = vmatpush1.xpose.msra.mxu0 0.0
      %1868 = vmatprep.subr.mxu0 0.0
      %1869 = vmatpush1.xpose.msra.mxu0 0.0
      %1870 = vmatprep.subr.mxu0 0.0
      %1871 = vmatpush1.xpose.msra.mxu0 0.0
      %1872 = vmatprep.subr.mxu0 0.0
      %1873 = vmatpush1.xpose.msra.mxu0 0.0
      %1874 = vmatprep.subr.mxu0 0.0
      %1875 = vmatpush1.xpose.msra.mxu0 0.0
      %1876 = vmatprep.subr.mxu0 0.0
      %1877 = vmatpush1.xpose.msra.mxu0 0.0
      %1878 = vmatprep.subr.mxu0 0.0
      %1879 = vmatpush1.xpose.msra.mxu0 0.0
      %1880 = vmatprep.subr.mxu0 0.0
      %1881 = vmatpush1.xpose.msra.mxu0 0.0
      %1882 = vmatprep.subr.mxu0 0.0
      %1883 = vmatpush1.xpose.msra.mxu0 0.0
      %1884 = vmatprep.subr.mxu0 0.0
      %1885 = vmatpush1.xpose.msra.mxu0 0.0
      %1886 = vmatprep.mubr.f32.mxu0 0.0
      %1887 = vmatmul.mubr.f32.gmra.mrb[0].mxu0 %v1818
      %v1888 = vpop.f32.mrb[0].mxu0
      %v1889 = vadd.f32 %v1651, %v1888
      %v1890 = vpop.f32.mrb[0].mxu0
      %1891 = vdwg.mxu0
      %v1892 = vsel %vm1729, %v1889, -inf
      %1893 = vmax.xlane.f32.xlu0 %v1892
      %v1894 = vpop.xlane.xlu0 %1893
      %v1895 = vsub.f32 %v1889, %v1894
      %v1896 = vmul.f32 %v1895, 1.442695
      %v1897 = vpow.pop %v1896
      %v1898 = vsel %vm1729, %v1897, 0.0
      %1899 = vadd.xlane.f32.xlu0 %v1898
      %v1900 = vpop.xlane.xlu0 %1899
      %v1901 = vrcp.pop %v1900
      %v1902 = vmul.f32 %v1897, %v1901
      %1904 = vrot.lane.b32.xlu0 %v1641, 96
      %v1905 = vpop.permute.xlu0 %1904
      %v1908 = vsel %vm1729, %v1902, 0
      %1910 = vmatprep.subr.mxu0 0.0
      %1911 = vmatpush1.msra.mxu0 %v1905
      %1912 = vmatprep.subr.mxu0 0.0
      %1913 = vmatpush1.msra.mxu0 0.0
      %1914 = vmatprep.subr.mxu0 0.0
      %1915 = vmatpush1.msra.mxu0 0.0
      %1916 = vmatprep.subr.mxu0 0.0
      %1917 = vmatpush1.msra.mxu0 0.0
      %1918 = vmatprep.subr.mxu0 0.0
      %1919 = vmatpush1.msra.mxu0 0.0
      %1920 = vmatprep.subr.mxu0 0.0
      %1921 = vmatpush1.msra.mxu0 0.0
      %1922 = vmatprep.subr.mxu0 0.0
      %1923 = vmatpush1.msra.mxu0 0.0
      %1924 = vmatprep.subr.mxu0 0.0
      %1925 = vmatpush1.msra.mxu0 0.0
      %1926 = vmatprep.subr.mxu0 0.0
      %1927 = vmatpush1.msra.mxu0 0.0
      %1928 = vmatprep.subr.mxu0 0.0
      %1929 = vmatpush1.msra.mxu0 0.0
      %1930 = vmatprep.subr.mxu0 0.0
      %1931 = vmatpush1.msra.mxu0 0.0
      %1932 = vmatprep.subr.mxu0 0.0
      %1933 = vmatpush1.msra.mxu0 0.0
      %1934 = vmatprep.subr.mxu0 0.0
      %1935 = vmatpush1.msra.mxu0 0.0
      %1936 = vmatprep.subr.mxu0 0.0
      %1937 = vmatpush1.msra.mxu0 0.0
      %1938 = vmatprep.subr.mxu0 0.0
      %1939 = vmatpush1.msra.mxu0 0.0
      %1940 = vmatprep.subr.mxu0 0.0
      %1941 = vmatpush1.msra.mxu0 0.0
      %1942 = vmatprep.subr.mxu0 0.0
      %1943 = vmatpush1.msra.mxu0 0.0
      %1944 = vmatprep.subr.mxu0 0.0
      %1945 = vmatpush1.msra.mxu0 0.0
      %1946 = vmatprep.subr.mxu0 0.0
      %1947 = vmatpush1.msra.mxu0 0.0
      %1948 = vmatprep.subr.mxu0 0.0
      %1949 = vmatpush1.msra.mxu0 0.0
      %1950 = vmatprep.subr.mxu0 0.0
      %1951 = vmatpush1.msra.mxu0 0.0
      %1952 = vmatprep.subr.mxu0 0.0
      %1953 = vmatpush1.msra.mxu0 0.0
      %1954 = vmatprep.subr.mxu0 0.0
      %1955 = vmatpush1.msra.mxu0 0.0
      %1956 = vmatprep.subr.mxu0 0.0
      %1957 = vmatpush1.msra.mxu0 0.0
      %1958 = vmatprep.subr.mxu0 0.0
      %1959 = vmatpush1.msra.mxu0 0.0
      %1960 = vmatprep.subr.mxu0 0.0
      %1961 = vmatpush1.msra.mxu0 0.0
      %1962 = vmatprep.subr.mxu0 0.0
      %1963 = vmatpush1.msra.mxu0 0.0
      %1964 = vmatprep.subr.mxu0 0.0
      %1965 = vmatpush1.msra.mxu0 0.0
      %1966 = vmatprep.subr.mxu0 0.0
      %1967 = vmatpush1.msra.mxu0 0.0
      %1968 = vmatprep.subr.mxu0 0.0
      %1969 = vmatpush1.msra.mxu0 0.0
      %1970 = vmatprep.subr.mxu0 0.0
      %1971 = vmatpush1.msra.mxu0 0.0
      %1972 = vmatprep.subr.mxu0 0.0
      %1973 = vmatpush1.msra.mxu0 0.0
      %1974 = vmatprep.mubr.f32.mxu0 0.0
      %1975 = vmatmul.mubr.f32.gmra.mrb[0].mxu0 %v1908
      %v1976 = vpop.f32.mrb[0].mxu0
      %v1977 = vadd.f32 0.0, %v1976
      %v1978 = vpop.f32.mrb[0].mxu0
      %1979 = vdwg.mxu0
      %1980 = vrot.lane.b32.xlu0 %v1600, 64
      %v1981 = vpop.permute.xlu0 %1980
      %1982 = vrot.lane.b32.xlu0 %v1602, 64
      %v1983 = vpop.permute.xlu0 %1982
      %v1984 = vsel %vm1151, %v1981, 0
      %v1986 = vsel %vm1151, %v1983, 0
      %1988 = vmatprep.subr.mxu0 0.0
      %1989 = vmatpush1.xpose.msra.mxu0 %v1986
      %1990 = vmatprep.subr.mxu0 0.0
      %1991 = vmatpush1.xpose.msra.mxu0 0.0
      %1992 = vmatprep.subr.mxu0 0.0
      %1993 = vmatpush1.xpose.msra.mxu0 0.0
      %1994 = vmatprep.subr.mxu0 0.0
      %1995 = vmatpush1.xpose.msra.mxu0 0.0
      %1996 = vmatprep.subr.mxu0 0.0
      %1997 = vmatpush1.xpose.msra.mxu0 0.0
      %1998 = vmatprep.subr.mxu0 0.0
      %1999 = vmatpush1.xpose.msra.mxu0 0.0
      %2000 = vmatprep.subr.mxu0 0.0
      %2001 = vmatpush1.xpose.msra.mxu0 0.0
      %2002 = vmatprep.subr.mxu0 0.0
      %2003 = vmatpush1.xpose.msra.mxu0 0.0
      %2004 = vmatprep.subr.mxu0 0.0
      %2005 = vmatpush1.xpose.msra.mxu0 0.0
      %2006 = vmatprep.subr.mxu0 0.0
      %2007 = vmatpush1.xpose.msra.mxu0 0.0
      %2008 = vmatprep.subr.mxu0 0.0
      %2009 = vmatpush1.xpose.msra.mxu0 0.0
      %2010 = vmatprep.subr.mxu0 0.0
      %2011 = vmatpush1.xpose.msra.mxu0 0.0
      %2012 = vmatprep.subr.mxu0 0.0
      %2013 = vmatpush1.xpose.msra.mxu0 0.0
      %2014 = vmatprep.subr.mxu0 0.0
      %2015 = vmatpush1.xpose.msra.mxu0 0.0
      %2016 = vmatprep.subr.mxu0 0.0
      %2017 = vmatpush1.xpose.msra.mxu0 0.0
      %2018 = vmatprep.subr.mxu0 0.0
      %2019 = vmatpush1.xpose.msra.mxu0 0.0
      %2020 = vmatprep.subr.mxu0 0.0
      %2021 = vmatpush1.xpose.msra.mxu0 0.0
      %2022 = vmatprep.subr.mxu0 0.0
      %2023 = vmatpush1.xpose.msra.mxu0 0.0
      %2024 = vmatprep.subr.mxu0 0.0
      %2025 = vmatpush1.xpose.msra.mxu0 0.0
      %2026 = vmatprep.subr.mxu0 0.0
      %2027 = vmatpush1.xpose.msra.mxu0 0.0
      %2028 = vmatprep.subr.mxu0 0.0
      %2029 = vmatpush1.xpose.msra.mxu0 0.0
      %2030 = vmatprep.subr.mxu0 0.0
      %2031 = vmatpush1.xpose.msra.mxu0 0.0
      %2032 = vmatprep.subr.mxu0 0.0
      %2033 = vmatpush1.xpose.msra.mxu0 0.0
      %2034 = vmatprep.subr.mxu0 0.0
      %2035 = vmatpush1.xpose.msra.mxu0 0.0
      %2036 = vmatprep.subr.mxu0 0.0
      %2037 = vmatpush1.xpose.msra.mxu0 0.0
      %2038 = vmatprep.subr.mxu0 0.0
      %2039 = vmatpush1.xpose.msra.mxu0 0.0
      %2040 = vmatprep.subr.mxu0 0.0
      %2041 = vmatpush1.xpose.msra.mxu0 0.0
      %2042 = vmatprep.subr.mxu0 0.0
      %2043 = vmatpush1.xpose.msra.mxu0 0.0
      %2044 = vmatprep.subr.mxu0 0.0
      %2045 = vmatpush1.xpose.msra.mxu0 0.0
      %2046 = vmatprep.subr.mxu0 0.0
      %2047 = vmatpush1.xpose.msra.mxu0 0.0
      %2048 = vmatprep.subr.mxu0 0.0
      %2049 = vmatpush1.xpose.msra.mxu0 0.0
      %2050 = vmatprep.subr.mxu0 0.0
      %2051 = vmatpush1.xpose.msra.mxu0 0.0
      %2052 = vmatprep.mubr.f32.mxu0 0.0
      %2053 = vmatmul.mubr.f32.gmra.mrb[0].mxu0 %v1984
      %v2054 = vpop.f32.mrb[0].mxu0
      %v2055 = vadd.f32 %v1651, %v2054
      %v2056 = vpop.f32.mrb[0].mxu0
      %2057 = vdwg.mxu0
      %v2058 = vsel %vm1729, %v2055, -inf
      %2059 = vmax.xlane.f32.xlu0 %v2058
      %v2060 = vpop.xlane.xlu0 %2059
      %v2061 = vsub.f32 %v2055, %v2060
      %v2062 = vmul.f32 %v2061, 1.442695
      %v2063 = vpow.pop %v2062
      %v2064 = vsel %vm1729, %v2063, 0.0
      %2065 = vadd.xlane.f32.xlu0 %v2064
      %v2066 = vpop.xlane.xlu0 %2065
      %v2067 = vrcp.pop %v2066
      %v2068 = vmul.f32 %v2063, %v2067
      %2069 = vrot.lane.b32.xlu0 %v1641, 64
      %v2070 = vpop.permute.xlu0 %2069
      %v2073 = vsel %vm1729, %v2068, 0
      %2075 = vmatprep.subr.mxu0 0.0
      %2076 = vmatpush1.msra.mxu0 %v2070
      %2077 = vmatprep.subr.mxu0 0.0
      %2078 = vmatpush1.msra.mxu0 0.0
      %2079 = vmatprep.subr.mxu0 0.0
      %2080 = vmatpush1.msra.mxu0 0.0
      %2081 = vmatprep.subr.mxu0 0.0
      %2082 = vmatpush1.msra.mxu0 0.0
      %2083 = vmatprep.subr.mxu0 0.0
      %2084 = vmatpush1.msra.mxu0 0.0
      %2085 = vmatprep.subr.mxu0 0.0
      %2086 = vmatpush1.msra.mxu0 0.0
      %2087 = vmatprep.subr.mxu0 0.0
      %2088 = vmatpush1.msra.mxu0 0.0
      %2089 = vmatprep.subr.mxu0 0.0
      %2090 = vmatpush1.msra.mxu0 0.0
      %2091 = vmatprep.subr.mxu0 0.0
      %2092 = vmatpush1.msra.mxu0 0.0
      %2093 = vmatprep.subr.mxu0 0.0
      %2094 = vmatpush1.msra.mxu0 0.0
      %2095 = vmatprep.subr.mxu0 0.0
      %2096 = vmatpush1.msra.mxu0 0.0
      %2097 = vmatprep.subr.mxu0 0.0
      %2098 = vmatpush1.msra.mxu0 0.0
      %2099 = vmatprep.subr.mxu0 0.0
      %2100 = vmatpush1.msra.mxu0 0.0
      %2101 = vmatprep.subr.mxu0 0.0
      %2102 = vmatpush1.msra.mxu0 0.0
      %2103 = vmatprep.subr.mxu0 0.0
      %2104 = vmatpush1.msra.mxu0 0.0
      %2105 = vmatprep.subr.mxu0 0.0
      %2106 = vmatpush1.msra.mxu0 0.0
      %2107 = vmatprep.subr.mxu0 0.0
      %2108 = vmatpush1.msra.mxu0 0.0
      %2109 = vmatprep.subr.mxu0 0.0
      %2110 = vmatpush1.msra.mxu0 0.0
      %2111 = vmatprep.subr.mxu0 0.0
      %2112 = vmatpush1.msra.mxu0 0.0
      %2113 = vmatprep.subr.mxu0 0.0
      %2114 = vmatpush1.msra.mxu0 0.0
      %2115 = vmatprep.subr.mxu0 0.0
      %2116 = vmatpush1.msra.mxu0 0.0
      %2117 = vmatprep.subr.mxu0 0.0
      %2118 = vmatpush1.msra.mxu0 0.0
      %2119 = vmatprep.subr.mxu0 0.0
      %2120 = vmatpush1.msra.mxu0 0.0
      %2121 = vmatprep.subr.mxu0 0.0
      %2122 = vmatpush1.msra.mxu0 0.0
      %2123 = vmatprep.subr.mxu0 0.0
      %2124 = vmatpush1.msra.mxu0 0.0
      %2125 = vmatprep.subr.mxu0 0.0
      %2126 = vmatpush1.msra.mxu0 0.0
      %2127 = vmatprep.subr.mxu0 0.0
      %2128 = vmatpush1.msra.mxu0 0.0
      %2129 = vmatprep.subr.mxu0 0.0
      %2130 = vmatpush1.msra.mxu0 0.0
      %2131 = vmatprep.subr.mxu0 0.0
      %2132 = vmatpush1.msra.mxu0 0.0
      %2133 = vmatprep.subr.mxu0 0.0
      %2134 = vmatpush1.msra.mxu0 0.0
      %2135 = vmatprep.subr.mxu0 0.0
      %2136 = vmatpush1.msra.mxu0 0.0
      %2137 = vmatprep.subr.mxu0 0.0
      %2138 = vmatpush1.msra.mxu0 0.0
      %2139 = vmatprep.mubr.f32.mxu0 0.0
      %2140 = vmatmul.mubr.f32.gmra.mrb[0].mxu0 %v2073
      %v2141 = vpop.f32.mrb[0].mxu0
      %v2142 = vadd.f32 0.0, %v2141
      %v2143 = vpop.f32.mrb[0].mxu0
      %2144 = vdwg.mxu0
      %2145 = vrot.lane.b32.xlu0 %v1600, 32
      %v2146 = vpop.permute.xlu0 %2145
      %2147 = vrot.lane.b32.xlu0 %v1602, 32
      %v2148 = vpop.permute.xlu0 %2147
      %v2149 = vsel %vm1151, %v2146, 0
      %v2151 = vsel %vm1151, %v2148, 0
      %2153 = vmatprep.subr.mxu0 0.0
      %2154 = vmatpush1.xpose.msra.mxu0 %v2151
      %2155 = vmatprep.subr.mxu0 0.0
      %2156 = vmatpush1.xpose.msra.mxu0 0.0
      %2157 = vmatprep.subr.mxu0 0.0
      %2158 = vmatpush1.xpose.msra.mxu0 0.0
      %2159 = vmatprep.subr.mxu0 0.0
      %2160 = vmatpush1.xpose.msra.mxu0 0.0
      %2161 = vmatprep.subr.mxu0 0.0
      %2162 = vmatpush1.xpose.msra.mxu0 0.0
      %2163 = vmatprep.subr.mxu0 0.0
      %2164 = vmatpush1.xpose.msra.mxu0 0.0
      %2165 = vmatprep.subr.mxu0 0.0
      %2166 = vmatpush1.xpose.msra.mxu0 0.0
      %2167 = vmatprep.subr.mxu0 0.0
      %2168 = vmatpush1.xpose.msra.mxu0 0.0
      %2169 = vmatprep.subr.mxu0 0.0
      %2170 = vmatpush1.xpose.msra.mxu0 0.0
      %2171 = vmatprep.subr.mxu0 0.0
      %2172 = vmatpush1.xpose.msra.mxu0 0.0
      %2173 = vmatprep.subr.mxu0 0.0
      %2174 = vmatpush1.xpose.msra.mxu0 0.0
      %2175 = vmatprep.subr.mxu0 0.0
      %2176 = vmatpush1.xpose.msra.mxu0 0.0
      %2177 = vmatprep.subr.mxu0 0.0
      %2178 = vmatpush1.xpose.msra.mxu0 0.0
      %2179 = vmatprep.subr.mxu0 0.0
      %2180 = vmatpush1.xpose.msra.mxu0 0.0
      %2181 = vmatprep.subr.mxu0 0.0
      %2182 = vmatpush1.xpose.msra.mxu0 0.0
      %2183 = vmatprep.subr.mxu0 0.0
      %2184 = vmatpush1.xpose.msra.mxu0 0.0
      %2185 = vmatprep.subr.mxu0 0.0
      %2186 = vmatpush1.xpose.msra.mxu0 0.0
      %2187 = vmatprep.subr.mxu0 0.0
      %2188 = vmatpush1.xpose.msra.mxu0 0.0
      %2189 = vmatprep.subr.mxu0 0.0
      %2190 = vmatpush1.xpose.msra.mxu0 0.0
      %2191 = vmatprep.subr.mxu0 0.0
      %2192 = vmatpush1.xpose.msra.mxu0 0.0
      %2193 = vmatprep.subr.mxu0 0.0
      %2194 = vmatpush1.xpose.msra.mxu0 0.0
      %2195 = vmatprep.subr.mxu0 0.0
      %2196 = vmatpush1.xpose.msra.mxu0 0.0
      %2197 = vmatprep.subr.mxu0 0.0
      %2198 = vmatpush1.xpose.msra.mxu0 0.0
      %2199 = vmatprep.subr.mxu0 0.0
      %2200 = vmatpush1.xpose.msra.mxu0 0.0
      %2201 = vmatprep.subr.mxu0 0.0
      %2202 = vmatpush1.xpose.msra.mxu0 0.0
      %2203 = vmatprep.subr.mxu0 0.0
      %2204 = vmatpush1.xpose.msra.mxu0 0.0
      %2205 = vmatprep.subr.mxu0 0.0
      %2206 = vmatpush1.xpose.msra.mxu0 0.0
      %2207 = vmatprep.subr.mxu0 0.0
      %2208 = vmatpush1.xpose.msra.mxu0 0.0
      %2209 = vmatprep.subr.mxu0 0.0
      %2210 = vmatpush1.xpose.msra.mxu0 0.0
      %2211 = vmatprep.subr.mxu0 0.0
      %2212 = vmatpush1.xpose.msra.mxu0 0.0
      %2213 = vmatprep.subr.mxu0 0.0
      %2214 = vmatpush1.xpose.msra.mxu0 0.0
      %2215 = vmatprep.subr.mxu0 0.0
      %2216 = vmatpush1.xpose.msra.mxu0 0.0
      %2217 = vmatprep.mubr.f32.mxu0 0.0
      %2218 = vmatmul.mubr.f32.gmra.mrb[0].mxu0 %v2149
      %v2219 = vpop.f32.mrb[0].mxu0
      %v2220 = vadd.f32 %v1651, %v2219
      %v2221 = vpop.f32.mrb[0].mxu0
      %2222 = vdwg.mxu0
      %v2223 = vsel %vm1729, %v2220, -inf
      %2224 = vmax.xlane.f32.xlu0 %v2223
      %v2225 = vpop.xlane.xlu0 %2224
      %v2226 = vsub.f32 %v2220, %v2225
      %v2227 = vmul.f32 %v2226, 1.442695
      %v2228 = vpow.pop %v2227
      %v2229 = vsel %vm1729, %v2228, 0.0
      %2230 = vadd.xlane.f32.xlu0 %v2229
      %v2231 = vpop.xlane.xlu0 %2230
      %v2232 = vrcp.pop %v2231
      %v2233 = vmul.f32 %v2228, %v2232
      %2234 = vrot.lane.b32.xlu0 %v1641, 32
      %v2235 = vpop.permute.xlu0 %2234
      %v2238 = vsel %vm1729, %v2233, 0
      %2240 = vmatprep.subr.mxu0 0.0
      %2241 = vmatpush1.msra.mxu0 %v2235
      %2242 = vmatprep.subr.mxu0 0.0
      %2243 = vmatpush1.msra.mxu0 0.0
      %2244 = vmatprep.subr.mxu0 0.0
      %2245 = vmatpush1.msra.mxu0 0.0
      %2246 = vmatprep.subr.mxu0 0.0
      %2247 = vmatpush1.msra.mxu0 0.0
      %2248 = vmatprep.subr.mxu0 0.0
      %2249 = vmatpush1.msra.mxu0 0.0
      %2250 = vmatprep.subr.mxu0 0.0
      %2251 = vmatpush1.msra.mxu0 0.0
      %2252 = vmatprep.subr.mxu0 0.0
      %2253 = vmatpush1.msra.mxu0 0.0
      %2254 = vmatprep.subr.mxu0 0.0
      %2255 = vmatpush1.msra.mxu0 0.0
      %2256 = vmatprep.subr.mxu0 0.0
      %2257 = vmatpush1.msra.mxu0 0.0
      %2258 = vmatprep.subr.mxu0 0.0
      %2259 = vmatpush1.msra.mxu0 0.0
      %2260 = vmatprep.subr.mxu0 0.0
      %2261 = vmatpush1.msra.mxu0 0.0
      %2262 = vmatprep.subr.mxu0 0.0
      %2263 = vmatpush1.msra.mxu0 0.0
      %2264 = vmatprep.subr.mxu0 0.0
      %2265 = vmatpush1.msra.mxu0 0.0
      %2266 = vmatprep.subr.mxu0 0.0
      %2267 = vmatpush1.msra.mxu0 0.0
      %2268 = vmatprep.subr.mxu0 0.0
      %2269 = vmatpush1.msra.mxu0 0.0
      %2270 = vmatprep.subr.mxu0 0.0
      %2271 = vmatpush1.msra.mxu0 0.0
      %2272 = vmatprep.subr.mxu0 0.0
      %2273 = vmatpush1.msra.mxu0 0.0
      %2274 = vmatprep.subr.mxu0 0.0
      %2275 = vmatpush1.msra.mxu0 0.0
      %2276 = vmatprep.subr.mxu0 0.0
      %2277 = vmatpush1.msra.mxu0 0.0
      %2278 = vmatprep.subr.mxu0 0.0
      %2279 = vmatpush1.msra.mxu0 0.0
      %2280 = vmatprep.subr.mxu0 0.0
      %2281 = vmatpush1.msra.mxu0 0.0
      %2282 = vmatprep.subr.mxu0 0.0
      %2283 = vmatpush1.msra.mxu0 0.0
      %2284 = vmatprep.subr.mxu0 0.0
      %2285 = vmatpush1.msra.mxu0 0.0
      %2286 = vmatprep.subr.mxu0 0.0
      %2287 = vmatpush1.msra.mxu0 0.0
      %2288 = vmatprep.subr.mxu0 0.0
      %2289 = vmatpush1.msra.mxu0 0.0
      %2290 = vmatprep.subr.mxu0 0.0
      %2291 = vmatpush1.msra.mxu0 0.0
      %2292 = vmatprep.subr.mxu0 0.0
      %2293 = vmatpush1.msra.mxu0 0.0
      %2294 = vmatprep.subr.mxu0 0.0
      %2295 = vmatpush1.msra.mxu0 0.0
      %2296 = vmatprep.subr.mxu0 0.0
      %2297 = vmatpush1.msra.mxu0 0.0
      %2298 = vmatprep.subr.mxu0 0.0
      %2299 = vmatpush1.msra.mxu0 0.0
      %2300 = vmatprep.subr.mxu0 0.0
      %2301 = vmatpush1.msra.mxu0 0.0
      %2302 = vmatprep.subr.mxu0 0.0
      %2303 = vmatpush1.msra.mxu0 0.0
      %2304 = vmatprep.mubr.f32.mxu0 0.0
      %2305 = vmatmul.mubr.f32.gmra.mrb[0].mxu0 %v2238
      %v2306 = vpop.f32.mrb[0].mxu0
      %v2307 = vadd.f32 0.0, %v2306
      %v2308 = vpop.f32.mrb[0].mxu0
      %2309 = vdwg.mxu0
      %2311 = vrot.lane.b32.xlu0 %v1977, 32
      %v2312 = vpop.permute.xlu0 %2311
      %2315 = vrot.lane.b32.xlu0 %v2142, 64
      %v2316 = vpop.permute.xlu0 %2315
      %2319 = vrot.lane.b32.xlu0 %v2307, 96
      %v2320 = vpop.permute.xlu0 %2319
      %v2322 = vsel %vm1151, %v1811, %v2312
      %vm2323 = vcmask 523264
      %v2324 = vsel %vm2323, %v2322, %v2316
      %vm2325 = vcmask 785408
      %v2326 = vsel %vm2325, %v2324, %v2320
      %v2327 = vpack.c.bf16 %v2326, %v2326
      %v2328 = vld [vmem:[%s10] sm:$0xf]
      %v2329 = vld [vmem:[%s10 + $0x4] sm:$0xf]
      %v2330 = vld [vmem:[%s10 + $0x8] sm:$0xf]
      %v2331 = vld [vmem:[%s10 + $0xc] sm:$0xf]
      %v2332 = vld [vmem:[%s10 + $0x10] sm:$0xf]
      %v2333 = vld [vmem:[%s10 + $0x14] sm:$0xf]
      %v2334 = vld [vmem:[%s10 + $0x18] sm:$0xf]
      %v2335 = vld [vmem:[%s10 + $0x1c] sm:$0xf]
      %v2336 = vld [vmem:[%s10 + $0x20] sm:$0xf]
      %v2337 = vld [vmem:[%s10 + $0x24] sm:$0xf]
      %v2338 = vld [vmem:[%s10 + $0x28] sm:$0xf]
      %v2339 = vld [vmem:[%s10 + $0x2c] sm:$0xf]
      %v2340 = vld [vmem:[%s10 + $0x30] sm:$0xf]
      %v2341 = vld [vmem:[%s10 + $0x34] sm:$0xf]
      %v2342 = vld [vmem:[%s10 + $0x38] sm:$0xf]
      %v2343 = vld [vmem:[%s10 + $0x3c] sm:$0xf]
      %v2344 = vld [vmem:[%s13] sm:$0x1]
      %v2345 = vlaneseq
      %v2346 = vshrl.u32 %v2345, 7
      %v2347 = vsub.s32 0, %v2346
      %v2348 = vrot.slane %v2344, %v2347
      %v2365 = vunpack.c.l.b16 %v2328
      %v2366 = vunpack.c.l.b16 %v2329
      %v2367 = vunpack.c.l.b16 %v2330
      %v2368 = vunpack.c.l.b16 %v2331
      %v2369 = vunpack.c.l.b16 %v2332
      %v2370 = vunpack.c.l.b16 %v2333
      %v2371 = vunpack.c.l.b16 %v2334
      %v2372 = vunpack.c.l.b16 %v2335
      %v2373 = vunpack.c.l.b16 %v2336
      %v2374 = vunpack.c.l.b16 %v2337
      %v2375 = vunpack.c.l.b16 %v2338
      %v2376 = vunpack.c.l.b16 %v2339
      %v2377 = vunpack.c.l.b16 %v2340
      %v2378 = vunpack.c.l.b16 %v2341
      %v2379 = vunpack.c.l.b16 %v2342
      %v2380 = vunpack.c.l.b16 %v2343
      %v2381 = vpack.c.b16 %v2366, %v2365
      %v2382 = vpack.c.b16 %v2368, %v2367
      %v2383 = vpack.c.b16 %v2370, %v2369
      %v2384 = vpack.c.b16 %v2372, %v2371
      %v2385 = vpack.c.b16 %v2374, %v2373
      %v2386 = vpack.c.b16 %v2376, %v2375
      %v2387 = vpack.c.b16 %v2378, %v2377
      %v2388 = vpack.c.b16 %v2380, %v2379
      %2397 = vmatprep.subr.bf16.mxu0 0
      %2398 = vmatpush1.bf16.msra.mxu0 %v2381
      %2399 = vmatprep.subr.bf16.mxu0 0
      %2400 = vmatpush1.bf16.msra.mxu0 %v2382
      %2401 = vmatprep.subr.bf16.mxu0 0
      %2402 = vmatpush1.bf16.msra.mxu0 %v2383
      %2403 = vmatprep.subr.bf16.mxu0 0
      %2404 = vmatpush1.bf16.msra.mxu0 %v2384
      %2405 = vmatprep.subr.bf16.mxu0 0
      %2406 = vmatpush1.bf16.msra.mxu0 %v2385
      %2407 = vmatprep.subr.bf16.mxu0 0
      %2408 = vmatpush1.bf16.msra.mxu0 %v2386
      %2409 = vmatprep.subr.bf16.mxu0 0
      %2410 = vmatpush1.bf16.msra.mxu0 %v2387
      %2411 = vmatprep.subr.bf16.mxu0 0
      %2412 = vmatpush1.bf16.msra.mxu0 %v2388
      %2413 = vmatprep.subr.bf16.mxu0 0
      %2414 = vmatpush1.bf16.msra.mxu0 0
      %2415 = vmatprep.subr.bf16.mxu0 0
      %2416 = vmatpush1.bf16.msra.mxu0 0
      %2417 = vmatprep.subr.bf16.mxu0 0
      %2418 = vmatpush1.bf16.msra.mxu0 0
      %2419 = vmatprep.subr.bf16.mxu0 0
      %2420 = vmatpush1.bf16.msra.mxu0 0
      %2421 = vmatprep.subr.bf16.mxu0 0
      %2422 = vmatpush1.bf16.msra.mxu0 0
      %2423 = vmatprep.subr.bf16.mxu0 0
      %2424 = vmatpush1.bf16.msra.mxu0 0
      %2425 = vmatprep.subr.bf16.mxu0 0
      %2426 = vmatpush1.bf16.msra.mxu0 0
      %2427 = vmatprep.subr.bf16.mxu0 0
      %2428 = vmatpush1.bf16.msra.mxu0 0
      %2429 = vmatprep.mubr.bf16.mxu0 0
      %2430 = vmatmul.mubr.bf16.gmra.mrb[0].mxu0 %v2327
      %v2431 = vpop.f32.mrb[0].mxu0
      %v2432 = vadd.f32 %v2348, %v2431
      %v2433 = vpop.f32.mrb[0].mxu0
      %v2434 = vpop.f32.mrb[0].mxu0
      %v2435 = vpop.f32.mrb[0].mxu0
      %2436 = vdwg.mxu0
      %v2437 = vadd.f32 %v1384, %v2432
      %v2438 = vld [vmem:[%s13 + $0x1] sm:$0x1]
      %v2439 = vld [vmem:[%s13 + $0x2] sm:$0x1]
      %2440 = vadd.xlane.f32.xlu0 %v2437
      %v2441 = vpop.xlane.xlu0 %2440
      %v2442 = vrcp.pop 128.0
      %v2443 = vmul.f32 %v2441, %v2442
      %v2444 = vsub.f32 %v2437, %v2443
      %v2445 = vmul.f32 %v2444, %v2444
      %2446 = vadd.xlane.f32.xlu0 %v2445
      %v2447 = vpop.xlane.xlu0 %2446
      %v2448 = vmul.f32 %v2447, %v2442
      %v2449 = vadd.f32 %v2448, 1e-05
      %v2450 = vrsqrt.pop %v2449
      %v2451 = vmul.f32 %v2444, %v2450
      %v2452 = vlaneseq
      %v2453 = vshrl.u32 %v2452, 7
      %v2454 = vsub.s32 0, %v2453
      %v2455 = vrot.slane %v2438, %v2454
      %v2456 = vmul.f32 %v2451, %v2455
      %v2457 = vlaneseq
      %v2458 = vshrl.u32 %v2457, 7
      %v2459 = vsub.s32 0, %v2458
      %v2460 = vrot.slane %v2439, %v2459
      %v2461 = vadd.f32 %v2456, %v2460
      %v2462 = vpack.c.bf16 %v2461, %v2461
      %v2463 = vld [vmem:[%s11] sm:$0xff]
      %v2464 = vld [vmem:[%s11 + $0x8] sm:$0xff]
      %v2465 = vld [vmem:[%s11 + $0x10] sm:$0xff]
      %v2466 = vld [vmem:[%s11 + $0x18] sm:$0xff]
      %v2467 = vld [vmem:[%s11 + $0x20] sm:$0xff]
      %v2468 = vld [vmem:[%s11 + $0x28] sm:$0xff]
      %v2469 = vld [vmem:[%s11 + $0x30] sm:$0xff]
      %v2470 = vld [vmem:[%s11 + $0x38] sm:$0xff]
      %v2471 = vld [vmem:[%s11 + $0x40] sm:$0xff]
      %v2472 = vld [vmem:[%s11 + $0x48] sm:$0xff]
      %v2473 = vld [vmem:[%s11 + $0x50] sm:$0xff]
      %v2474 = vld [vmem:[%s11 + $0x58] sm:$0xff]
      %v2475 = vld [vmem:[%s11 + $0x60] sm:$0xff]
      %v2476 = vld [vmem:[%s11 + $0x68] sm:$0xff]
      %v2477 = vld [vmem:[%s11 + $0x70] sm:$0xff]
      %v2478 = vld [vmem:[%s11 + $0x78] sm:$0xff]
      %s2479 = scalar_lea.vmem %s9, 1
      %v2480 = vld [vmem:[%s2479] ss:$2 sm:$0x3]
      %v2482 = vlaneseq
      %v2483 = vshrl.u32 %v2482, 7
      %v2484 = vsub.s32 0, %v2483
      %v2485 = vrot.slane %v2480, %v2484
      %v2486 = vlaneseq
      %v2487 = vshrl.u32 %v2486, 7
      %v2488 = vsub.s32 1, %v2487
      %v2489 = vrot.slane %v2480, %v2488
      %v2508 = vunpack.c.l.b16 %v2463
      %v2509 = vunpack.c.h.b16 %v2463
      %v2510 = vunpack.c.l.b16 %v2464
      %v2511 = vunpack.c.h.b16 %v2464
      %v2512 = vunpack.c.l.b16 %v2465
      %v2513 = vunpack.c.h.b16 %v2465
      %v2514 = vunpack.c.l.b16 %v2466
      %v2515 = vunpack.c.h.b16 %v2466
      %v2516 = vunpack.c.l.b16 %v2467
      %v2517 = vunpack.c.h.b16 %v2467
      %v2518 = vunpack.c.l.b16 %v2468
      %v2519 = vunpack.c.h.b16 %v2468
      %v2520 = vunpack.c.l.b16 %v2469
      %v2521 = vunpack.c.h.b16 %v2469
      %v2522 = vunpack.c.l.b16 %v2470
      %v2523 = vunpack.c.h.b16 %v2470
      %v2524 = vunpack.c.l.b16 %v2471
      %v2525 = vunpack.c.h.b16 %v2471
      %v2526 = vunpack.c.l.b16 %v2472
      %v2527 = vunpack.c.h.b16 %v2472
      %v2528 = vunpack.c.l.b16 %v2473
      %v2529 = vunpack.c.h.b16 %v2473
      %v2530 = vunpack.c.l.b16 %v2474
      %v2531 = vunpack.c.h.b16 %v2474
      %v2532 = vunpack.c.l.b16 %v2475
      %v2533 = vunpack.c.h.b16 %v2475
      %v2534 = vunpack.c.l.b16 %v2476
      %v2535 = vunpack.c.h.b16 %v2476
      %v2536 = vunpack.c.l.b16 %v2477
      %v2537 = vunpack.c.h.b16 %v2477
      %v2538 = vunpack.c.l.b16 %v2478
      %v2539 = vunpack.c.h.b16 %v2478
      %v2540 = vpack.c.b16 %v2510, %v2508
      %v2541 = vpack.c.b16 %v2511, %v2509
      %v2542 = vpack.c.b16 %v2514, %v2512
      %v2543 = vpack.c.b16 %v2515, %v2513
      %v2544 = vpack.c.b16 %v2518, %v2516
      %v2545 = vpack.c.b16 %v2519, %v2517
      %v2546 = vpack.c.b16 %v2522, %v2520
      %v2547 = vpack.c.b16 %v2523, %v2521
      %v2548 = vpack.c.b16 %v2526, %v2524
      %v2549 = vpack.c.b16 %v2527, %v2525
      %v2550 = vpack.c.b16 %v2530, %v2528
      %v2551 = vpack.c.b16 %v2531, %v2529
      %v2552 = vpack.c.b16 %v2534, %v2532
      %v2553 = vpack.c.b16 %v2535, %v2533
      %v2554 = vpack.c.b16 %v2538, %v2536
      %v2555 = vpack.c.b16 %v2539, %v2537
      %2572 = vmatprep.subr.bf16.mxu0 %v2541
      %2573 = vmatpush1.bf16.msra.mxu0 %v2540
      %2574 = vmatprep.subr.bf16.mxu0 %v2543
      %2575 = vmatpush1.bf16.msra.mxu0 %v2542
      %2576 = vmatprep.subr.bf16.mxu0 %v2545
      %2577 = vmatpush1.bf16.msra.mxu0 %v2544
      %2578 = vmatprep.subr.bf16.mxu0 %v2547
      %2579 = vmatpush1.bf16.msra.mxu0 %v2546
      %2580 = vmatprep.subr.bf16.mxu0 %v2549
      %2581 = vmatpush1.bf16.msra.mxu0 %v2548
      %2582 = vmatprep.subr.bf16.mxu0 %v2551
      %2583 = vmatpush1.bf16.msra.mxu0 %v2550
      %2584 = vmatprep.subr.bf16.mxu0 %v2553
      %2585 = vmatpush1.bf16.msra.mxu0 %v2552
      %2586 = vmatprep.subr.bf16.mxu0 %v2555
      %2587 = vmatpush1.bf16.msra.mxu0 %v2554
      %2588 = vmatprep.subr.bf16.mxu0 0
      %2589 = vmatpush1.bf16.msra.mxu0 0
      %2590 = vmatprep.subr.bf16.mxu0 0
      %2591 = vmatpush1.bf16.msra.mxu0 0
      %2592 = vmatprep.subr.bf16.mxu0 0
      %2593 = vmatpush1.bf16.msra.mxu0 0
      %2594 = vmatprep.subr.bf16.mxu0 0
      %2595 = vmatpush1.bf16.msra.mxu0 0
      %2596 = vmatprep.subr.bf16.mxu0 0
      %2597 = vmatpush1.bf16.msra.mxu0 0
      %2598 = vmatprep.subr.bf16.mxu0 0
      %2599 = vmatpush1.bf16.msra.mxu0 0
      %2600 = vmatprep.subr.bf16.mxu0 0
      %2601 = vmatpush1.bf16.msra.mxu0 0
      %2602 = vmatprep.subr.bf16.mxu0 0
      %2603 = vmatpush1.bf16.msra.mxu0 0
      %2604 = vmatprep.mubr.bf16.mxu0 0
      %2605 = vmatmul.mubr.bf16.gmra.mrb[0].mxu0 %v2462
      %v2606 = vpop.f32.mrb[0].mxu0
      %v2607 = vadd.f32 %v2485, %v2606
      %v2608 = vpop.f32.mrb[0].mxu0
      %v2609 = vadd.f32 %v2489, %v2608
      %v2610 = vpop.f32.mrb[0].mxu0
      %v2611 = vpop.f32.mrb[0].mxu0
      %2612 = vdwg.mxu0
      %v2613 = vmax.f32 %v2607, 0.0
      %v2614 = vmax.f32 %v2609, 0.0
      %v2615 = vpack.c.bf16 %v2613, %v2613
      %v2616 = vpack.c.bf16 %v2614, %v2614
      %v2617 = vld [vmem:[%s12] sm:$0xf]
      %v2618 = vld [vmem:[%s12 + $0x4] sm:$0xf]
      %v2619 = vld [vmem:[%s12 + $0x8] sm:$0xf]
      %v2620 = vld [vmem:[%s12 + $0xc] sm:$0xf]
      %v2621 = vld [vmem:[%s12 + $0x10] sm:$0xf]
      %v2622 = vld [vmem:[%s12 + $0x14] sm:$0xf]
      %v2623 = vld [vmem:[%s12 + $0x18] sm:$0xf]
      %v2624 = vld [vmem:[%s12 + $0x1c] sm:$0xf]
      %v2625 = vld [vmem:[%s12 + $0x20] sm:$0xf]
      %v2626 = vld [vmem:[%s12 + $0x24] sm:$0xf]
      %v2627 = vld [vmem:[%s12 + $0x28] sm:$0xf]
      %v2628 = vld [vmem:[%s12 + $0x2c] sm:$0xf]
      %v2629 = vld [vmem:[%s12 + $0x30] sm:$0xf]
      %v2630 = vld [vmem:[%s12 + $0x34] sm:$0xf]
      %v2631 = vld [vmem:[%s12 + $0x38] sm:$0xf]
      %v2632 = vld [vmem:[%s12 + $0x3c] sm:$0xf]
      %v2633 = vld [vmem:[%s12 + $0x40] sm:$0xf]
      %v2634 = vld [vmem:[%s12 + $0x44] sm:$0xf]
      %v2635 = vld [vmem:[%s12 + $0x48] sm:$0xf]
      %v2636 = vld [vmem:[%s12 + $0x4c] sm:$0xf]
      %v2637 = vld [vmem:[%s12 + $0x50] sm:$0xf]
      %v2638 = vld [vmem:[%s12 + $0x54] sm:$0xf]
      %v2639 = vld [vmem:[%s12 + $0x58] sm:$0xf]
      %v2640 = vld [vmem:[%s12 + $0x5c] sm:$0xf]
      %v2641 = vld [vmem:[%s12 + $0x60] sm:$0xf]
      %v2642 = vld [vmem:[%s12 + $0x64] sm:$0xf]
      %v2643 = vld [vmem:[%s12 + $0x68] sm:$0xf]
      %v2644 = vld [vmem:[%s12 + $0x6c] sm:$0xf]
      %v2645 = vld [vmem:[%s12 + $0x70] sm:$0xf]
      %v2646 = vld [vmem:[%s12 + $0x74] sm:$0xf]
      %v2647 = vld [vmem:[%s12 + $0x78] sm:$0xf]
      %v2648 = vld [vmem:[%s12 + $0x7c] sm:$0xf]
      %v2649 = vld [vmem:[%s13 + $0x5] sm:$0x1]
      %v2650 = vlaneseq
      %v2651 = vshrl.u32 %v2650, 7
      %v2652 = vsub.s32 0, %v2651
      %v2653 = vrot.slane %v2649, %v2652
      %v2686 = vunpack.c.l.b16 %v2617
      %v2687 = vunpack.c.l.b16 %v2618
      %v2688 = vunpack.c.l.b16 %v2619
      %v2689 = vunpack.c.l.b16 %v2620
      %v2690 = vunpack.c.l.b16 %v2621
      %v2691 = vunpack.c.l.b16 %v2622
      %v2692 = vunpack.c.l.b16 %v2623
      %v2693 = vunpack.c.l.b16 %v2624
      %v2694 = vunpack.c.l.b16 %v2625
      %v2695 = vunpack.c.l.b16 %v2626
      %v2696 = vunpack.c.l.b16 %v2627
      %v2697 = vunpack.c.l.b16 %v2628
      %v2698 = vunpack.c.l.b16 %v2629
      %v2699 = vunpack.c.l.b16 %v2630
      %v2700 = vunpack.c.l.b16 %v2631
      %v2701 = vunpack.c.l.b16 %v2632
      %v2702 = vunpack.c.l.b16 %v2633
      %v2703 = vunpack.c.l.b16 %v2634
      %v2704 = vunpack.c.l.b16 %v2635
      %v2705 = vunpack.c.l.b16 %v2636
      %v2706 = vunpack.c.l.b16 %v2637
      %v2707 = vunpack.c.l.b16 %v2638
      %v2708 = vunpack.c.l.b16 %v2639
      %v2709 = vunpack.c.l.b16 %v2640
      %v2710 = vunpack.c.l.b16 %v2641
      %v2711 = vunpack.c.l.b16 %v2642
      %v2712 = vunpack.c.l.b16 %v2643
      %v2713 = vunpack.c.l.b16 %v2644
      %v2714 = vunpack.c.l.b16 %v2645
      %v2715 = vunpack.c.l.b16 %v2646
      %v2716 = vunpack.c.l.b16 %v2647
      %v2717 = vunpack.c.l.b16 %v2648
      %v2718 = vpack.c.b16 %v2687, %v2686
      %v2719 = vpack.c.b16 %v2689, %v2688
      %v2720 = vpack.c.b16 %v2691, %v2690
      %v2721 = vpack.c.b16 %v2693, %v2692
      %v2722 = vpack.c.b16 %v2695, %v2694
      %v2723 = vpack.c.b16 %v2697, %v2696
      %v2724 = vpack.c.b16 %v2699, %v2698
      %v2725 = vpack.c.b16 %v2701, %v2700
      %v2726 = vpack.c.b16 %v2703, %v2702
      %v2727 = vpack.c.b16 %v2705, %v2704
      %v2728 = vpack.c.b16 %v2707, %v2706
      %v2729 = vpack.c.b16 %v2709, %v2708
      %v2730 = vpack.c.b16 %v2711, %v2710
      %v2731 = vpack.c.b16 %v2713, %v2712
      %v2732 = vpack.c.b16 %v2715, %v2714
      %v2733 = vpack.c.b16 %v2717, %v2716
      %2750 = vmatprep.subr.bf16.mxu0 0
      %2751 = vmatpush1.bf16.msra.mxu0 %v2718
      %2752 = vmatprep.subr.bf16.mxu0 0
      %2753 = vmatpush1.bf16.msra.mxu0 %v2719
      %2754 = vmatprep.subr.bf16.mxu0 0
      %2755 = vmatpush1.bf16.msra.mxu0 %v2720
      %2756 = vmatprep.subr.bf16.mxu0 0
      %2757 = vmatpush1.bf16.msra.mxu0 %v2721
      %2758 = vmatprep.subr.bf16.mxu0 0
      %2759 = vmatpush1.bf16.msra.mxu0 %v2722
      %2760 = vmatprep.subr.bf16.mxu0 0
      %2761 = vmatpush1.bf16.msra.mxu0 %v2723
      %2762 = vmatprep.subr.bf16.mxu0 0
      %2763 = vmatpush1.bf16.msra.mxu0 %v2724
      %2764 = vmatprep.subr.bf16.mxu0 0
      %2765 = vmatpush1.bf16.msra.mxu0 %v2725
      %2766 = vmatprep.subr.bf16.mxu0 0
      %2767 = vmatpush1.bf16.msra.mxu0 %v2726
      %2768 = vmatprep.subr.bf16.mxu0 0
      %2769 = vmatpush1.bf16.msra.mxu0 %v2727
      %2770 = vmatprep.subr.bf16.mxu0 0
      %2771 = vmatpush1.bf16.msra.mxu0 %v2728
      %2772 = vmatprep.subr.bf16.mxu0 0
      %2773 = vmatpush1.bf16.msra.mxu0 %v2729
      %2774 = vmatprep.subr.bf16.mxu0 0
      %2775 = vmatpush1.bf16.msra.mxu0 %v2730
      %2776 = vmatprep.subr.bf16.mxu0 0
      %2777 = vmatpush1.bf16.msra.mxu0 %v2731
      %2778 = vmatprep.subr.bf16.mxu0 0
      %2779 = vmatpush1.bf16.msra.mxu0 %v2732
      %2780 = vmatprep.subr.bf16.mxu0 0
      %2781 = vmatpush1.bf16.msra.mxu0 %v2733
      %2782 = vmatprep.mubr.bf16.mxu0 %v2616
      %2783 = vmatmul.mubr.bf16.gmra.mrb[0].mxu0 %v2615
      %v2784 = vpop.f32.mrb[0].mxu0
      %v2785 = vadd.f32 %v2653, %v2784
      %v2786 = vpop.f32.mrb[0].mxu0
      %v2787 = vpop.f32.mrb[0].mxu0
      %v2788 = vpop.f32.mrb[0].mxu0
      %2789 = vdwg.mxu0
      %v2790 = vadd.f32 %v2461, %v2785
      %v2791 = vld [vmem:[%s13 + $0x3] sm:$0x1]
      %v2792 = vld [vmem:[%s13 + $0x4] sm:$0x1]
      %2793 = vadd.xlane.f32.xlu0 %v2790
      %v2794 = vpop.xlane.xlu0 %2793
      %v2795 = vmul.f32 %v2794, %v2442
      %v2796 = vsub.f32 %v2790, %v2795
      %v2797 = vmul.f32 %v2796, %v2796
      %2798 = vadd.xlane.f32.xlu0 %v2797
      %v2799 = vpop.xlane.xlu0 %2798
      %v2800 = vmul.f32 %v2799, %v2442
      %v2801 = vadd.f32 %v2800, 1e-05
      %v2802 = vrsqrt.pop %v2801
      %v2803 = vmul.f32 %v2796, %v2802
      %v2804 = vlaneseq
      %v2805 = vshrl.u32 %v2804, 7
      %v2806 = vsub.s32 0, %v2805
      %v2807 = vrot.slane %v2791, %v2806
      %v2808 = vmul.f32 %v2803, %v2807
      %v2809 = vlaneseq
      %v2810 = vshrl.u32 %v2809, 7
      %v2811 = vsub.s32 0, %v2810
      %v2812 = vrot.slane %v2792, %v2811
      %v2813 = vadd.f32 %v2808, %v2812
      %v2814 = vpack.c.bf16 %v2813, %v2813
      %v2815 = vld [vmem:[%s10 + $0x40] sm:$0xf]
      %v2816 = vld [vmem:[%s10 + $0x44] sm:$0xf]
      %v2817 = vld [vmem:[%s10 + $0x48] sm:$0xf]
      %v2818 = vld [vmem:[%s10 + $0x4c] sm:$0xf]
      %v2819 = vld [vmem:[%s10 + $0x50] sm:$0xf]
      %v2820 = vld [vmem:[%s10 + $0x54] sm:$0xf]
      %v2821 = vld [vmem:[%s10 + $0x58] sm:$0xf]
      %v2822 = vld [vmem:[%s10 + $0x5c] sm:$0xf]
      %v2823 = vld [vmem:[%s10 + $0x60] sm:$0xf]
      %v2824 = vld [vmem:[%s10 + $0x64] sm:$0xf]
      %v2825 = vld [vmem:[%s10 + $0x68] sm:$0xf]
      %v2826 = vld [vmem:[%s10 + $0x6c] sm:$0xf]
      %v2827 = vld [vmem:[%s10 + $0x70] sm:$0xf]
      %v2828 = vld [vmem:[%s10 + $0x74] sm:$0xf]
      %v2829 = vld [vmem:[%s10 + $0x78] sm:$0xf]
      %v2830 = vld [vmem:[%s10 + $0x7c] sm:$0xf]
      %v2831 = vld [vmem:[%s13 + $0x6] sm:$0x1]
      %v2848 = vunpack.c.l.b16 %v2815
      %v2849 = vunpack.c.l.b16 %v2816
      %v2850 = vunpack.c.l.b16 %v2817
      %v2851 = vunpack.c.l.b16 %v2818
      %v2852 = vunpack.c.l.b16 %v2819
      %v2853 = vunpack.c.l.b16 %v2820
      %v2854 = vunpack.c.l.b16 %v2821
      %v2855 = vunpack.c.l.b16 %v2822
      %v2856 = vunpack.c.l.b16 %v2823
      %v2857 = vunpack.c.l.b16 %v2824
      %v2858 = vunpack.c.l.b16 %v2825
      %v2859 = vunpack.c.l.b16 %v2826
      %v2860 = vunpack.c.l.b16 %v2827
      %v2861 = vunpack.c.l.b16 %v2828
      %v2862 = vunpack.c.l.b16 %v2829
      %v2863 = vunpack.c.l.b16 %v2830
      %v2864 = vpack.c.b16 %v2849, %v2848
      %v2865 = vpack.c.b16 %v2851, %v2850
      %v2866 = vpack.c.b16 %v2853, %v2852
      %v2867 = vpack.c.b16 %v2855, %v2854
      %v2868 = vpack.c.b16 %v2857, %v2856
      %v2869 = vpack.c.b16 %v2859, %v2858
      %v2870 = vpack.c.b16 %v2861, %v2860
      %v2871 = vpack.c.b16 %v2863, %v2862
      %2880 = vmatprep.subr.bf16.mxu0 0
      %2881 = vmatpush1.bf16.msra.mxu0 %v2864
      %2882 = vmatprep.subr.bf16.mxu0 0
      %2883 = vmatpush1.bf16.msra.mxu0 %v2865
      %2884 = vmatprep.subr.bf16.mxu0 0
      %2885 = vmatpush1.bf16.msra.mxu0 %v2866
      %2886 = vmatprep.subr.bf16.mxu0 0
      %2887 = vmatpush1.bf16.msra.mxu0 %v2867
      %2888 = vmatprep.subr.bf16.mxu0 0
      %2889 = vmatpush1.bf16.msra.mxu0 %v2868
      %2890 = vmatprep.subr.bf16.mxu0 0
      %2891 = vmatpush1.bf16.msra.mxu0 %v2869
      %2892 = vmatprep.subr.bf16.mxu0 0
      %2893 = vmatpush1.bf16.msra.mxu0 %v2870
      %2894 = vmatprep.subr.bf16.mxu0 0
      %2895 = vmatpush1.bf16.msra.mxu0 %v2871
      %2896 = vmatprep.subr.bf16.mxu0 0
      %2897 = vmatpush1.bf16.msra.mxu0 0
      %2898 = vmatprep.subr.bf16.mxu0 0
      %2899 = vmatpush1.bf16.msra.mxu0 0
      %2900 = vmatprep.subr.bf16.mxu0 0
      %2901 = vmatpush1.bf16.msra.mxu0 0
      %2902 = vmatprep.subr.bf16.mxu0 0
      %2903 = vmatpush1.bf16.msra.mxu0 0
      %2904 = vmatprep.subr.bf16.mxu0 0
      %2905 = vmatpush1.bf16.msra.mxu0 0
      %2906 = vmatprep.subr.bf16.mxu0 0
      %2907 = vmatpush1.bf16.msra.mxu0 0
      %2908 = vmatprep.subr.bf16.mxu0 0
      %2909 = vmatpush1.bf16.msra.mxu0 0
      %2910 = vmatprep.subr.bf16.mxu0 0
      %2911 = vmatpush1.bf16.msra.mxu0 0
      %2912 = vmatprep.mubr.bf16.mxu0 0
      %2913 = vmatmul.mubr.bf16.gmra.mrb[0].mxu0 %v2814
      %v2914 = vpop.f32.mrb[0].mxu0
      %v2915 = vadd.f32 %v2831, %v2914
      %v2916 = vpop.f32.mrb[0].mxu0
      %v2917 = vpop.f32.mrb[0].mxu0
      %v2918 = vpop.f32.mrb[0].mxu0
      %2919 = vdwg.mxu0
      %v2920 = vmax.f32 %v2915, 0.0
      %v2921 = vpack.c.bf16 %v2920, %v2920
      %v2922 = vld [vmem:[%s10 + $0x80] sm:$0xf]
      %v2923 = vld [vmem:[%s10 + $0x84] sm:$0xf]
      %v2924 = vld [vmem:[%s10 + $0x88] sm:$0xf]
      %v2925 = vld [vmem:[%s10 + $0x8c] sm:$0xf]
      %v2926 = vld [vmem:[%s10 + $0x90] sm:$0xf]
      %v2927 = vld [vmem:[%s10 + $0x94] sm:$0xf]
      %v2928 = vld [vmem:[%s10 + $0x98] sm:$0xf]
      %v2929 = vld [vmem:[%s10 + $0x9c] sm:$0xf]
      %v2930 = vld [vmem:[%s10 + $0xa0] sm:$0xf]
      %v2931 = vld [vmem:[%s10 + $0xa4] sm:$0xf]
      %v2932 = vld [vmem:[%s10 + $0xa8] sm:$0xf]
      %v2933 = vld [vmem:[%s10 + $0xac] sm:$0xf]
      %v2934 = vld [vmem:[%s10 + $0xb0] sm:$0xf]
      %v2935 = vld [vmem:[%s10 + $0xb4] sm:$0xf]
      %v2936 = vld [vmem:[%s10 + $0xb8] sm:$0xf]
      %v2937 = vld [vmem:[%s10 + $0xbc] sm:$0xf]
      %v2938 = vld [vmem:[%s13 + $0x7] sm:$0x1]
      %v2955 = vunpack.c.l.b16 %v2922
      %v2956 = vunpack.c.l.b16 %v2923
      %v2957 = vunpack.c.l.b16 %v2924
      %v2958 = vunpack.c.l.b16 %v2925
      %v2959 = vunpack.c.l.b16 %v2926
      %v2960 = vunpack.c.l.b16 %v2927
      %v2961 = vunpack.c.l.b16 %v2928
      %v2962 = vunpack.c.l.b16 %v2929
      %v2963 = vunpack.c.l.b16 %v2930
      %v2964 = vunpack.c.l.b16 %v2931
      %v2965 = vunpack.c.l.b16 %v2932
      %v2966 = vunpack.c.l.b16 %v2933
      %v2967 = vunpack.c.l.b16 %v2934
      %v2968 = vunpack.c.l.b16 %v2935
      %v2969 = vunpack.c.l.b16 %v2936
      %v2970 = vunpack.c.l.b16 %v2937
      %v2971 = vpack.c.b16 %v2956, %v2955
      %v2972 = vpack.c.b16 %v2958, %v2957
      %v2973 = vpack.c.b16 %v2960, %v2959
      %v2974 = vpack.c.b16 %v2962, %v2961
      %v2975 = vpack.c.b16 %v2964, %v2963
      %v2976 = vpack.c.b16 %v2966, %v2965
      %v2977 = vpack.c.b16 %v2968, %v2967
      %v2978 = vpack.c.b16 %v2970, %v2969
      %2987 = vmatprep.subr.bf16.mxu0 0
      %2988 = vmatpush1.bf16.msra.mxu0 %v2971
      %2989 = vmatprep.subr.bf16.mxu0 0
      %2990 = vmatpush1.bf16.msra.mxu0 %v2972
      %2991 = vmatprep.subr.bf16.mxu0 0
      %2992 = vmatpush1.bf16.msra.mxu0 %v2973
      %2993 = vmatprep.subr.bf16.mxu0 0
      %2994 = vmatpush1.bf16.msra.mxu0 %v2974
      %2995 = vmatprep.subr.bf16.mxu0 0
      %2996 = vmatpush1.bf16.msra.mxu0 %v2975
      %2997 = vmatprep.subr.bf16.mxu0 0
      %2998 = vmatpush1.bf16.msra.mxu0 %v2976
      %2999 = vmatprep.subr.bf16.mxu0 0
      %3000 = vmatpush1.bf16.msra.mxu0 %v2977
      %3001 = vmatprep.subr.bf16.mxu0 0
      %3002 = vmatpush1.bf16.msra.mxu0 %v2978
      %3003 = vmatprep.subr.bf16.mxu0 0
      %3004 = vmatpush1.bf16.msra.mxu0 0
      %3005 = vmatprep.subr.bf16.mxu0 0
      %3006 = vmatpush1.bf16.msra.mxu0 0
      %3007 = vmatprep.subr.bf16.mxu0 0
      %3008 = vmatpush1.bf16.msra.mxu0 0
      %3009 = vmatprep.subr.bf16.mxu0 0
      %3010 = vmatpush1.bf16.msra.mxu0 0
      %3011 = vmatprep.subr.bf16.mxu0 0
      %3012 = vmatpush1.bf16.msra.mxu0 0
      %3013 = vmatprep.subr.bf16.mxu0 0
      %3014 = vmatpush1.bf16.msra.mxu0 0
      %3015 = vmatprep.subr.bf16.mxu0 0
      %3016 = vmatpush1.bf16.msra.mxu0 0
      %3017 = vmatprep.subr.bf16.mxu0 0
      %3018 = vmatpush1.bf16.msra.mxu0 0
      %3019 = vmatprep.mubr.bf16.mxu0 0
      %3020 = vmatmul.mubr.bf16.gmra.mrb[0].mxu0 %v2921
      %v3021 = vpop.f32.mrb[0].mxu0
      %v3022 = vadd.f32 %v2938, %v3021
      %v3023 = vpop.f32.mrb[0].mxu0
      %v3024 = vpop.f32.mrb[0].mxu0
      %v3025 = vpop.f32.mrb[0].mxu0
      %3026 = vdwg.mxu0
      %v3027 = vsub.f32 0.0, %v3022
      %v3028 = vmul.f32 %v3027, 1.442695
      %v3029 = vpow.pop %v3028
      %v3030 = vadd.f32 %v3029, 1.0
      %v3031 = vrcp.pop %v3030
      %v3032 = vmul.f32 1.0, %v3031
      %3033 = vst [vmem:[%s494] sm:$0x1] %v3032
      %p3034 = scmp.lt.s32.totalorder %s25, 1
      %s3035 = scalar_select %p3034, %s25, 1
      %s3036 = scalar_lea.vmem %s14, %s3035
      // Predicated region
      $region77: #{outfit_compatibility_forward.1} parent=75 // pred_check
        %p3037 = pneg %p352
      $region78: #{outfit_compatibility_forward.1} parent=75 // pred_check_branch
        %3039 = sbr.rel (%p3037) target = $region80
      $region79: #{outfit_compatibility_forward.1} parent=75 // pred_region
        _
      $region80: #{outfit_compatibility_forward.1} parent=75 // pred_fallthru
        _
    $region76: #{outfit_compatibility_forward.1} parent=5 // pred_fallthru
      _
    %p3040 = scmp.le.s32.totalorder 2, %s20
    // Predicated region
    $region81: #{outfit_compatibility_forward.1} parent=5 // pred_check
      %p3041 = pneg %p3040
    $region82: #{outfit_compatibility_forward.1} parent=5 // pred_check_branch
      %3043 = sbr.rel (%p3041) target = $region84
    $region83: #{outfit_compatibility_forward.1} parent=5 // pred_region
      %s3044 = ssub.s32 %s20, 2
      // Predicated region
      $region85: #{outfit_compatibility_forward.1} parent=83 // pred_check
        %p3045 = pneg %p358
      $region86: #{outfit_compatibility_forward.1} parent=83 // pred_check_branch
        %3047 = sbr.rel (%p3045) target = $region88
      $region87: #{outfit_compatibility_forward.1} parent=83 // pred_region
        %p3048 = scmp.lt.s32.totalorder %s26, 1
        %s3049 = scalar_select %p3048, %s26, 1
        %s3050 = scalar_lea.vmem %s14, %s3049
      $region88: #{outfit_compatibility_forward.1} parent=83 // pred_fallthru
        _
    $region84: #{outfit_compatibility_forward.1} parent=5 // pred_fallthru
      _
  $region6: #{outfit_compatibility_forward.1} parent=0 // loop_footer
    %s24 = sadd.s32 1, %s20
  $region7: #{outfit_compatibility_forward.1} parent=0 // loop_footer_branch
    %19 = sbr.rel target = $region3
  $region8: #{outfit_compatibility_forward.1} parent=0 // loop_exit
    _

</llo_original>
